<compile_context>
chip_gen: v5e
topology: v5e:2x2
jax: 0.10.0
libtpu: 0.0.40
codegen_flags: <defaults>
</compile_context>

<pallas_src>
import jax
import jax.numpy as jnp
from jax import lax
from jax.experimental import pallas as pl
from jax.experimental.pallas import tpu as pltpu

NUM_LAYERS = 4
B_TILE = 8  # sublane tile


def _ende_kernel(x_ref, *refs):
    """refs = [w_ih_T(bf16), w_hh_T(bf16), b(f32)]*NUM_LAYERS, w_lin_T, b_lin, out_ref."""
    layer_refs = refs[: 3 * NUM_LAYERS]
    w_lin_ref, b_lin_ref, out_ref = refs[3 * NUM_LAYERS:]

    S, Bt, F_in = x_ref.shape          # (S, 8, F_in) batch tile, time-major
    H = layer_refs[1].shape[0]         # w_hh_T is (H, 4H)

    # Time-major 2D (S*Bt, F_in); row t*Bt + b == x[b, t, :].  Leading-dim merge of
    # full (8, lane) tiles -> layout no-op.  Cast once for the bf16 MXU path.
    inp = x_ref[...].reshape(S * Bt, F_in).astype(jnp.bfloat16)
    acc = jnp.zeros((Bt, H), jnp.float32)   # sum of top-layer h_t (for the mean)

    for l in range(NUM_LAYERS):
        # Hoisted, loop-invariant weight loads (once per layer).
        w_ih = layer_refs[3 * l][...]        # (in_dim, 4H) bf16
        w_hh = layer_refs[3 * l + 1][...]    # (H, 4H)     bf16
        b = layer_refs[3 * l + 2][...]       # (1, 4H)     f32 (= b_ih + b_hh)

        # Whole-sequence input projection: one big MXU matmul + bias, off the
        # per-timestep critical path.  bf16 operands, f32 accumulate.
        proj = jnp.dot(inp, w_ih, preferred_element_type=jnp.float32) + b  # (S*Bt, 4H) f32

        # Zero initial hidden/cell state (matches torch.zeros in forward); kept as
        # values so state updates never touch VMEM.
        h = jnp.zeros((Bt, H), jnp.float32)
        c = jnp.zeros((Bt, H), jnp.float32)
        last = (l == NUM_LAYERS - 1)
        hs = []

        # Fully unrolled recurrence: one (Bt,H)bf16 @ (H,4H)bf16 matmul + elementwise
        # per step; every slice is a whole (8,128) vreg thanks to Bt==8.
        for t in range(S):
            gates = proj[t * Bt:(t + 1) * Bt, :] + jnp.dot(
                h.astype(jnp.bfloat16), w_hh, preferred_element_type=jnp.float32)  # (Bt,4H)
            # Full-width activations on the single 4H=128-lane vreg, then slice.
            sig = jax.nn.sigmoid(gates)
            tnh = jnp.tanh(gates)
            i_g = sig[:, 0:H]
            f_g = sig[:, H:2 * H]
            o_g = sig[:, 3 * H:4 * H]
            g_g = tnh[:, 2 * H:3 * H]
            c = f_g * c + i_g * g_g
            h = o_g * jnp.tanh(c)
            if last:
                acc = acc + h            # accumulate top-layer h_t
            else:
                hs.append(h)             # stays in vregs; feeds next layer

        if not last:
            # Next layer's whole-sequence input, still time-major row t*Bt + b.
            inp = jnp.concatenate(hs, axis=0).astype(jnp.bfloat16)   # (S*Bt, H)

    # mean over time, then Linear (mean of affine == affine of mean) — f32.
    h_mean = acc * (1.0 / S)
    out_ref[...] = (jnp.dot(h_mean, w_lin_ref[...], preferred_element_type=jnp.float32)
                    + b_lin_ref[...]).astype(out_ref.dtype)


def ende_forward(x, layer_params, w_lin_t, b_lin):
    """x: (B, S, F_in) float32 (batch_first, like the PyTorch module)."""
    B, S, F_in = x.shape
    H = layer_params[0][1].shape[0]
    out_dim = w_lin_t.shape[1]

    # Pad batch to the 8-row sublane tile; padded rows are sliced off at the end.
    B_pad = ((B + B_TILE - 1) // B_TILE) * B_TILE
    if B_pad != B:
        x = jnp.pad(x, ((0, B_pad - B), (0, 0), (0, 0)))
    x_tm = jnp.transpose(x, (1, 0, 2))           # (S, B_pad, F_in), time-major

    # Weights pre-cast to bf16 for the MXU; biases / Linear stay f32.
    flat = []
    for (w_ih_t, w_hh_t, b) in layer_params:
        flat.extend([w_ih_t.astype(jnp.bfloat16), w_hh_t.astype(jnp.bfloat16), b])
    flat.extend([w_lin_t, b_lin])

    n_tiles = B_pad // B_TILE
    weight_spec = pl.BlockSpec(memory_space=pltpu.MemorySpace.VMEM)   # whole array, un-blocked

    out = pl.pallas_call(
        _ende_kernel,
        out_shape=jax.ShapeDtypeStruct((B_pad, out_dim), jnp.float32),
        grid=(n_tiles,),
        in_specs=[pl.BlockSpec((S, B_TILE, F_in), lambda i: (0, i, 0))]
                 + [weight_spec] * len(flat),
        out_specs=pl.BlockSpec((B_TILE, out_dim), lambda i: (i, 0)),
        compiler_params=pltpu.CompilerParams(
            dimension_semantics=("parallel",)),   # megacore across batch tiles on v7x
    )(x_tm, *flat)
    return out[:B]


def ende_reference(x, layer_params, w_lin_t, b_lin):
    """Pure-JAX f32 reference reproducing nn.LSTM(batch_first=True)+Linear+mean(dim=1)."""
    B, S, _ = x.shape
    h_seq = x
    for (w_ih_t, w_hh_t, b) in layer_params:
        H = w_hh_t.shape[0]

        def cell(carry, x_t):
            h, c = carry
            gates = x_t @ w_ih_t + h @ w_hh_t + b[0]
            i = jax.nn.sigmoid(gates[:, :H])
            f = jax.nn.sigmoid(gates[:, H:2 * H])
            g = jnp.tanh(gates[:, 2 * H:3 * H])
            o = jax.nn.sigmoid(gates[:, 3 * H:4 * H])
            c = f * c + i * g
            h = o * jnp.tanh(c)
            return (h, c), h

        init = (jnp.zeros((B, H), jnp.float32), jnp.zeros((B, H), jnp.float32))
        _, hs = lax.scan(cell, init, jnp.swapaxes(h_seq, 0, 1))
        h_seq = jnp.swapaxes(hs, 0, 1)
    pred = h_seq @ w_lin_t + b_lin[0]
    return pred.mean(axis=1)


def init_params(key, input_fnum, output_fnum, hidden_size, num_layers):
    """Deterministic U(-1/sqrt(H), 1/sqrt(H)) init (PyTorch LSTM/Linear default)."""
    k = 1.0 / jnp.sqrt(jnp.float32(hidden_size))
    layer_params = []
    for l in range(num_layers):
        in_dim = input_fnum if l == 0 else hidden_size
        key, k1, k2, k3, k4 = jax.random.split(key, 5)
        w_ih_t = jax.random.uniform(k1, (in_dim, 4 * hidden_size), jnp.float32, -k, k)
        w_hh_t = jax.random.uniform(k2, (hidden_size, 4 * hidden_size), jnp.float32, -k, k)
        b_ih = jax.random.uniform(k3, (1, 4 * hidden_size), jnp.float32, -k, k)
        b_hh = jax.random.uniform(k4, (1, 4 * hidden_size), jnp.float32, -k, k)
        layer_params.append((w_ih_t, w_hh_t, b_ih + b_hh))
    key, k5, k6 = jax.random.split(key, 3)
    w_lin_t = jax.random.uniform(k5, (hidden_size, output_fnum), jnp.float32, -k, k)
    b_lin = jax.random.uniform(k6, (1, output_fnum), jnp.float32, -k, k)
    return layer_params, w_lin_t, b_lin


if __name__ == "__main__":
    B, S = 2, 8
    INPUT_FNUM, OUTPUT_FNUM, HIDDEN = 8, 4, 32

    key = jax.random.PRNGKey(0)
    key, pkey, xkey = jax.random.split(key, 3)
    layer_params, w_lin_t, b_lin = init_params(pkey, INPUT_FNUM, OUTPUT_FNUM, HIDDEN, NUM_LAYERS)
    x = jax.random.normal(xkey, (B, S, INPUT_FNUM), jnp.float32)

    out = ende_forward(x, layer_params, w_lin_t, b_lin)
    out = jax.block_until_ready(out)

    ref = ende_reference(x, layer_params, w_lin_t, b_lin)
    assert out.shape == (B, OUTPUT_FNUM), out.shape
    # Tolerance loosened vs the pure-f32 reference because matmul operands are bf16
    # (f32 accumulation); a structural bug would miss by orders of magnitude more.
    assert jnp.allclose(out, ref, rtol=3e-2, atol=3e-2), (out, ref)

    print("KERNEL_OK")
</pallas_src>

<mosaic_0001>
module attributes {stable_mosaic.version = 11 : i64} {
  func.func @_ende_kernel(%arg0: i32, %arg1: memref<8x8x8xf32, #tpu.memory_space<vmem>>, %arg2: memref<8x128xbf16, #tpu.memory_space<vmem>>, %arg3: memref<32x128xbf16, #tpu.memory_space<vmem>>, %arg4: memref<1x128xf32, #tpu.memory_space<vmem>>, %arg5: memref<32x128xbf16, #tpu.memory_space<vmem>>, %arg6: memref<32x128xbf16, #tpu.memory_space<vmem>>, %arg7: memref<1x128xf32, #tpu.memory_space<vmem>>, %arg8: memref<32x128xbf16, #tpu.memory_space<vmem>>, %arg9: memref<32x128xbf16, #tpu.memory_space<vmem>>, %arg10: memref<1x128xf32, #tpu.memory_space<vmem>>, %arg11: memref<32x128xbf16, #tpu.memory_space<vmem>>, %arg12: memref<32x128xbf16, #tpu.memory_space<vmem>>, %arg13: memref<1x128xf32, #tpu.memory_space<vmem>>, %arg14: memref<32x4xf32, #tpu.memory_space<vmem>>, %arg15: memref<1x4xf32, #tpu.memory_space<vmem>>, %arg16: memref<8x4xf32, #tpu.memory_space<vmem>>) attributes {dimension_semantics = [#tpu.dimension_semantics<parallel>], iteration_bounds = array<i64: 1>, scalar_prefetch = 0 : i64, scratch_operands = 0 : i64, tpu.core_type = #tpu.core_type<tc>, window_params = [{transform_indices = @transform_0, window_bounds = array<i64: 8, 8, 8>}, {pipeline_mode = #tpu.pipeline_mode<synchronous>, transform_indices = @transform_1, window_bounds = array<i64: 8, 128>}, {pipeline_mode = #tpu.pipeline_mode<synchronous>, transform_indices = @transform_2, window_bounds = array<i64: 32, 128>}, {pipeline_mode = #tpu.pipeline_mode<synchronous>, transform_indices = @transform_3, window_bounds = array<i64: 1, 128>}, {pipeline_mode = #tpu.pipeline_mode<synchronous>, transform_indices = @transform_4, window_bounds = array<i64: 32, 128>}, {pipeline_mode = #tpu.pipeline_mode<synchronous>, transform_indices = @transform_5, window_bounds = array<i64: 32, 128>}, {pipeline_mode = #tpu.pipeline_mode<synchronous>, transform_indices = @transform_6, window_bounds = array<i64: 1, 128>}, {pipeline_mode = #tpu.pipeline_mode<synchronous>, transform_indices = @transform_7, window_bounds = array<i64: 32, 128>}, {pipeline_mode = #tpu.pipeline_mode<synchronous>, transform_indices = @transform_8, window_bounds = array<i64: 32, 128>}, {pipeline_mode = #tpu.pipeline_mode<synchronous>, transform_indices = @transform_9, window_bounds = array<i64: 1, 128>}, {pipeline_mode = #tpu.pipeline_mode<synchronous>, transform_indices = @transform_10, window_bounds = array<i64: 32, 128>}, {pipeline_mode = #tpu.pipeline_mode<synchronous>, transform_indices = @transform_11, window_bounds = array<i64: 32, 128>}, {pipeline_mode = #tpu.pipeline_mode<synchronous>, transform_indices = @transform_12, window_bounds = array<i64: 1, 128>}, {pipeline_mode = #tpu.pipeline_mode<synchronous>, transform_indices = @transform_13, window_bounds = array<i64: 32, 4>}, {pipeline_mode = #tpu.pipeline_mode<synchronous>, transform_indices = @transform_14, window_bounds = array<i64: 1, 4>}, {transform_indices = @transform_15, window_bounds = array<i64: 8, 4>}]} {
    %c0 = arith.constant 0 : index
    %c0_0 = arith.constant 0 : index
    %c0_1 = arith.constant 0 : index
    %0 = vector.load %arg1[%c0, %c0_0, %c0_1] : memref<8x8x8xf32, #tpu.memory_space<vmem>>, vector<8x8x8xf32>
    %1 = vector.shape_cast %0 : vector<8x8x8xf32> to vector<64x8xf32>
    %2 = arith.truncf %1 : vector<64x8xf32> to vector<64x8xbf16>
    %cst = arith.constant 0.000000e+00 : f32
    %3 = vector.broadcast %cst : f32 to vector<8x32xf32>
    %c0_2 = arith.constant 0 : index
    %c0_3 = arith.constant 0 : index
    %4 = vector.load %arg2[%c0_2, %c0_3] : memref<8x128xbf16, #tpu.memory_space<vmem>>, vector<8x128xbf16>
    %c0_4 = arith.constant 0 : index
    %c0_5 = arith.constant 0 : index
    %5 = vector.load %arg3[%c0_4, %c0_5] : memref<32x128xbf16, #tpu.memory_space<vmem>>, vector<32x128xbf16>
    %c0_6 = arith.constant 0 : index
    %c0_7 = arith.constant 0 : index
    %6 = vector.load %arg4[%c0_6, %c0_7] : memref<1x128xf32, #tpu.memory_space<vmem>>, vector<1x128xf32>
    %cst_8 = arith.constant dense<0.000000e+00> : vector<64x128xf32>
    %7 = tpu.matmul %2, %4, %cst_8 {dimension_numbers = #tpu.dot_dimension_numbers<[1], [0], [0], [1], [0, 0, 1, 1], [], []>} : vector<64x8xbf16>, vector<8x128xbf16>, vector<64x128xf32> -> vector<64x128xf32>
    %8 = vector.broadcast %6 : vector<1x128xf32> to vector<64x128xf32>
    %9 = arith.addf %7, %8 : vector<64x128xf32>
    %cst_9 = arith.constant 0.000000e+00 : f32
    %10 = vector.broadcast %cst_9 : f32 to vector<8x32xf32>
    %cst_10 = arith.constant 0.000000e+00 : f32
    %11 = vector.broadcast %cst_10 : f32 to vector<8x32xf32>
    %12 = vector.extract_strided_slice %9 {offsets = [0, 0], sizes = [8, 128], strides = [1, 1]} : vector<64x128xf32> to vector<8x128xf32>
    %13 = arith.truncf %10 : vector<8x32xf32> to vector<8x32xbf16>
    %cst_11 = arith.constant dense<0.000000e+00> : vector<8x128xf32>
    %14 = tpu.matmul %13, %5, %cst_11 {dimension_numbers = #tpu.dot_dimension_numbers<[1], [0], [0], [1], [0, 0, 1, 1], [], []>} : vector<8x32xbf16>, vector<32x128xbf16>, vector<8x128xf32> -> vector<8x128xf32>
    %15 = arith.addf %12, %14 : vector<8x128xf32>
    %16 = arith.negf %15 : vector<8x128xf32>
    %17 = math.exp %16 : vector<8x128xf32>
    %cst_12 = arith.constant 1.000000e+00 : f32
    %18 = vector.broadcast %cst_12 : f32 to vector<8x128xf32>
    %19 = arith.addf %18, %17 : vector<8x128xf32>
    %20 = arith.divf %18, %19 : vector<8x128xf32>
    %21 = math.tanh %15 : vector<8x128xf32>
    %22 = vector.extract_strided_slice %20 {offsets = [0, 0], sizes = [8, 32], strides = [1, 1]} : vector<8x128xf32> to vector<8x32xf32>
    %23 = vector.extract_strided_slice %20 {offsets = [0, 32], sizes = [8, 32], strides = [1, 1]} : vector<8x128xf32> to vector<8x32xf32>
    %24 = vector.extract_strided_slice %20 {offsets = [0, 96], sizes = [8, 32], strides = [1, 1]} : vector<8x128xf32> to vector<8x32xf32>
    %25 = vector.extract_strided_slice %21 {offsets = [0, 64], sizes = [8, 32], strides = [1, 1]} : vector<8x128xf32> to vector<8x32xf32>
    %26 = arith.mulf %23, %11 : vector<8x32xf32>
    %27 = arith.mulf %22, %25 : vector<8x32xf32>
    %28 = arith.addf %26, %27 : vector<8x32xf32>
    %29 = math.tanh %28 : vector<8x32xf32>
    %30 = arith.mulf %24, %29 : vector<8x32xf32>
    %31 = vector.extract_strided_slice %9 {offsets = [8, 0], sizes = [8, 128], strides = [1, 1]} : vector<64x128xf32> to vector<8x128xf32>
    %32 = arith.truncf %30 : vector<8x32xf32> to vector<8x32xbf16>
    %cst_13 = arith.constant dense<0.000000e+00> : vector<8x128xf32>
    %33 = tpu.matmul %32, %5, %cst_13 {dimension_numbers = #tpu.dot_dimension_numbers<[1], [0], [0], [1], [0, 0, 1, 1], [], []>} : vector<8x32xbf16>, vector<32x128xbf16>, vector<8x128xf32> -> vector<8x128xf32>
    %34 = arith.addf %31, %33 : vector<8x128xf32>
    %35 = arith.negf %34 : vector<8x128xf32>
    %36 = math.exp %35 : vector<8x128xf32>
    %cst_14 = arith.constant 1.000000e+00 : f32
    %37 = vector.broadcast %cst_14 : f32 to vector<8x128xf32>
    %38 = arith.addf %37, %36 : vector<8x128xf32>
    %39 = arith.divf %37, %38 : vector<8x128xf32>
    %40 = math.tanh %34 : vector<8x128xf32>
    %41 = vector.extract_strided_slice %39 {offsets = [0, 0], sizes = [8, 32], strides = [1, 1]} : vector<8x128xf32> to vector<8x32xf32>
    %42 = vector.extract_strided_slice %39 {offsets = [0, 32], sizes = [8, 32], strides = [1, 1]} : vector<8x128xf32> to vector<8x32xf32>
    %43 = vector.extract_strided_slice %39 {offsets = [0, 96], sizes = [8, 32], strides = [1, 1]} : vector<8x128xf32> to vector<8x32xf32>
    %44 = vector.extract_strided_slice %40 {offsets = [0, 64], sizes = [8, 32], strides = [1, 1]} : vector<8x128xf32> to vector<8x32xf32>
    %45 = arith.mulf %42, %28 : vector<8x32xf32>
    %46 = arith.mulf %41, %44 : vector<8x32xf32>
    %47 = arith.addf %45, %46 : vector<8x32xf32>
    %48 = math.tanh %47 : vector<8x32xf32>
    %49 = arith.mulf %43, %48 : vector<8x32xf32>
    %50 = vector.extract_strided_slice %9 {offsets = [16, 0], sizes = [8, 128], strides = [1, 1]} : vector<64x128xf32> to vector<8x128xf32>
    %51 = arith.truncf %49 : vector<8x32xf32> to vector<8x32xbf16>
    %cst_15 = arith.constant dense<0.000000e+00> : vector<8x128xf32>
    %52 = tpu.matmul %51, %5, %cst_15 {dimension_numbers = #tpu.dot_dimension_numbers<[1], [0], [0], [1], [0, 0, 1, 1], [], []>} : vector<8x32xbf16>, vector<32x128xbf16>, vector<8x128xf32> -> vector<8x128xf32>
    %53 = arith.addf %50, %52 : vector<8x128xf32>
    %54 = arith.negf %53 : vector<8x128xf32>
    %55 = math.exp %54 : vector<8x128xf32>
    %cst_16 = arith.constant 1.000000e+00 : f32
    %56 = vector.broadcast %cst_16 : f32 to vector<8x128xf32>
    %57 = arith.addf %56, %55 : vector<8x128xf32>
    %58 = arith.divf %56, %57 : vector<8x128xf32>
    %59 = math.tanh %53 : vector<8x128xf32>
    %60 = vector.extract_strided_slice %58 {offsets = [0, 0], sizes = [8, 32], strides = [1, 1]} : vector<8x128xf32> to vector<8x32xf32>
    %61 = vector.extract_strided_slice %58 {offsets = [0, 32], sizes = [8, 32], strides = [1, 1]} : vector<8x128xf32> to vector<8x32xf32>
    %62 = vector.extract_strided_slice %58 {offsets = [0, 96], sizes = [8, 32], strides = [1, 1]} : vector<8x128xf32> to vector<8x32xf32>
    %63 = vector.extract_strided_slice %59 {offsets = [0, 64], sizes = [8, 32], strides = [1, 1]} : vector<8x128xf32> to vector<8x32xf32>
    %64 = arith.mulf %61, %47 : vector<8x32xf32>
    %65 = arith.mulf %60, %63 : vector<8x32xf32>
    %66 = arith.addf %64, %65 : vector<8x32xf32>
    %67 = math.tanh %66 : vector<8x32xf32>
    %68 = arith.mulf %62, %67 : vector<8x32xf32>
    %69 = vector.extract_strided_slice %9 {offsets = [24, 0], sizes = [8, 128], strides = [1, 1]} : vector<64x128xf32> to vector<8x128xf32>
    %70 = arith.truncf %68 : vector<8x32xf32> to vector<8x32xbf16>
    %cst_17 = arith.constant dense<0.000000e+00> : vector<8x128xf32>
    %71 = tpu.matmul %70, %5, %cst_17 {dimension_numbers = #tpu.dot_dimension_numbers<[1], [0], [0], [1], [0, 0, 1, 1], [], []>} : vector<8x32xbf16>, vector<32x128xbf16>, vector<8x128xf32> -> vector<8x128xf32>
    %72 = arith.addf %69, %71 : vector<8x128xf32>
    %73 = arith.negf %72 : vector<8x128xf32>
    %74 = math.exp %73 : vector<8x128xf32>
    %cst_18 = arith.constant 1.000000e+00 : f32
    %75 = vector.broadcast %cst_18 : f32 to vector<8x128xf32>
    %76 = arith.addf %75, %74 : vector<8x128xf32>
    %77 = arith.divf %75, %76 : vector<8x128xf32>
    %78 = math.tanh %72 : vector<8x128xf32>
    %79 = vector.extract_strided_slice %77 {offsets = [0, 0], sizes = [8, 32], strides = [1, 1]} : vector<8x128xf32> to vector<8x32xf32>
    %80 = vector.extract_strided_slice %77 {offsets = [0, 32], sizes = [8, 32], strides = [1, 1]} : vector<8x128xf32> to vector<8x32xf32>
    %81 = vector.extract_strided_slice %77 {offsets = [0, 96], sizes = [8, 32], strides = [1, 1]} : vector<8x128xf32> to vector<8x32xf32>
    %82 = vector.extract_strided_slice %78 {offsets = [0, 64], sizes = [8, 32], strides = [1, 1]} : vector<8x128xf32> to vector<8x32xf32>
    %83 = arith.mulf %80, %66 : vector<8x32xf32>
    %84 = arith.mulf %79, %82 : vector<8x32xf32>
    %85 = arith.addf %83, %84 : vector<8x32xf32>
    %86 = math.tanh %85 : vector<8x32xf32>
    %87 = arith.mulf %81, %86 : vector<8x32xf32>
    %88 = vector.extract_strided_slice %9 {offsets = [32, 0], sizes = [8, 128], strides = [1, 1]} : vector<64x128xf32> to vector<8x128xf32>
    %89 = arith.truncf %87 : vector<8x32xf32> to vector<8x32xbf16>
    %cst_19 = arith.constant dense<0.000000e+00> : vector<8x128xf32>
    %90 = tpu.matmul %89, %5, %cst_19 {dimension_numbers = #tpu.dot_dimension_numbers<[1], [0], [0], [1], [0, 0, 1, 1], [], []>} : vector<8x32xbf16>, vector<32x128xbf16>, vector<8x128xf32> -> vector<8x128xf32>
    %91 = arith.addf %88, %90 : vector<8x128xf32>
    %92 = arith.negf %91 : vector<8x128xf32>
    %93 = math.exp %92 : vector<8x128xf32>
    %cst_20 = arith.constant 1.000000e+00 : f32
    %94 = vector.broadcast %cst_20 : f32 to vector<8x128xf32>
    %95 = arith.addf %94, %93 : vector<8x128xf32>
    %96 = arith.divf %94, %95 : vector<8x128xf32>
    %97 = math.tanh %91 : vector<8x128xf32>
    %98 = vector.extract_strided_slice %96 {offsets = [0, 0], sizes = [8, 32], strides = [1, 1]} : vector<8x128xf32> to vector<8x32xf32>
    %99 = vector.extract_strided_slice %96 {offsets = [0, 32], sizes = [8, 32], strides = [1, 1]} : vector<8x128xf32> to vector<8x32xf32>
    %100 = vector.extract_strided_slice %96 {offsets = [0, 96], sizes = [8, 32], strides = [1, 1]} : vector<8x128xf32> to vector<8x32xf32>
    %101 = vector.extract_strided_slice %97 {offsets = [0, 64], sizes = [8, 32], strides = [1, 1]} : vector<8x128xf32> to vector<8x32xf32>
    %102 = arith.mulf %99, %85 : vector<8x32xf32>
    %103 = arith.mulf %98, %101 : vector<8x32xf32>
    %104 = arith.addf %102, %103 : vector<8x32xf32>
    %105 = math.tanh %104 : vector<8x32xf32>
    %106 = arith.mulf %100, %105 : vector<8x32xf32>
    %107 = vector.extract_strided_slice %9 {offsets = [40, 0], sizes = [8, 128], strides = [1, 1]} : vector<64x128xf32> to vector<8x128xf32>
    %108 = arith.truncf %106 : vector<8x32xf32> to vector<8x32xbf16>
    %cst_21 = arith.constant dense<0.000000e+00> : vector<8x128xf32>
    %109 = tpu.matmul %108, %5, %cst_21 {dimension_numbers = #tpu.dot_dimension_numbers<[1], [0], [0], [1], [0, 0, 1, 1], [], []>} : vector<8x32xbf16>, vector<32x128xbf16>, vector<8x128xf32> -> vector<8x128xf32>
    %110 = arith.addf %107, %109 : vector<8x128xf32>
    %111 = arith.negf %110 : vector<8x128xf32>
    %112 = math.exp %111 : vector<8x128xf32>
    %cst_22 = arith.constant 1.000000e+00 : f32
    %113 = vector.broadcast %cst_22 : f32 to vector<8x128xf32>
    %114 = arith.addf %113, %112 : vector<8x128xf32>
    %115 = arith.divf %113, %114 : vector<8x128xf32>
    %116 = math.tanh %110 : vector<8x128xf32>
    %117 = vector.extract_strided_slice %115 {offsets = [0, 0], sizes = [8, 32], strides = [1, 1]} : vector<8x128xf32> to vector<8x32xf32>
    %118 = vector.extract_strided_slice %115 {offsets = [0, 32], sizes = [8, 32], strides = [1, 1]} : vector<8x128xf32> to vector<8x32xf32>
    %119 = vector.extract_strided_slice %115 {offsets = [0, 96], sizes = [8, 32], strides = [1, 1]} : vector<8x128xf32> to vector<8x32xf32>
    %120 = vector.extract_strided_slice %116 {offsets = [0, 64], sizes = [8, 32], strides = [1, 1]} : vector<8x128xf32> to vector<8x32xf32>
    %121 = arith.mulf %118, %104 : vector<8x32xf32>
    %122 = arith.mulf %117, %120 : vector<8x32xf32>
    %123 = arith.addf %121, %122 : vector<8x32xf32>
    %124 = math.tanh %123 : vector<8x32xf32>
    %125 = arith.mulf %119, %124 : vector<8x32xf32>
    %126 = vector.extract_strided_slice %9 {offsets = [48, 0], sizes = [8, 128], strides = [1, 1]} : vector<64x128xf32> to vector<8x128xf32>
    %127 = arith.truncf %125 : vector<8x32xf32> to vector<8x32xbf16>
    %cst_23 = arith.constant dense<0.000000e+00> : vector<8x128xf32>
    %128 = tpu.matmul %127, %5, %cst_23 {dimension_numbers = #tpu.dot_dimension_numbers<[1], [0], [0], [1], [0, 0, 1, 1], [], []>} : vector<8x32xbf16>, vector<32x128xbf16>, vector<8x128xf32> -> vector<8x128xf32>
    %129 = arith.addf %126, %128 : vector<8x128xf32>
    %130 = arith.negf %129 : vector<8x128xf32>
    %131 = math.exp %130 : vector<8x128xf32>
    %cst_24 = arith.constant 1.000000e+00 : f32
    %132 = vector.broadcast %cst_24 : f32 to vector<8x128xf32>
    %133 = arith.addf %132, %131 : vector<8x128xf32>
    %134 = arith.divf %132, %133 : vector<8x128xf32>
    %135 = math.tanh %129 : vector<8x128xf32>
    %136 = vector.extract_strided_slice %134 {offsets = [0, 0], sizes = [8, 32], strides = [1, 1]} : vector<8x128xf32> to vector<8x32xf32>
    %137 = vector.extract_strided_slice %134 {offsets = [0, 32], sizes = [8, 32], strides = [1, 1]} : vector<8x128xf32> to vector<8x32xf32>
    %138 = vector.extract_strided_slice %134 {offsets = [0, 96], sizes = [8, 32], strides = [1, 1]} : vector<8x128xf32> to vector<8x32xf32>
    %139 = vector.extract_strided_slice %135 {offsets = [0, 64], sizes = [8, 32], strides = [1, 1]} : vector<8x128xf32> to vector<8x32xf32>
    %140 = arith.mulf %137, %123 : vector<8x32xf32>
    %141 = arith.mulf %136, %139 : vector<8x32xf32>
    %142 = arith.addf %140, %141 : vector<8x32xf32>
    %143 = math.tanh %142 : vector<8x32xf32>
    %144 = arith.mulf %138, %143 : vector<8x32xf32>
    %145 = vector.extract_strided_slice %9 {offsets = [56, 0], sizes = [8, 128], strides = [1, 1]} : vector<64x128xf32> to vector<8x128xf32>
    %146 = arith.truncf %144 : vector<8x32xf32> to vector<8x32xbf16>
    %cst_25 = arith.constant dense<0.000000e+00> : vector<8x128xf32>
    %147 = tpu.matmul %146, %5, %cst_25 {dimension_numbers = #tpu.dot_dimension_numbers<[1], [0], [0], [1], [0, 0, 1, 1], [], []>} : vector<8x32xbf16>, vector<32x128xbf16>, vector<8x128xf32> -> vector<8x128xf32>
    %148 = arith.addf %145, %147 : vector<8x128xf32>
    %149 = arith.negf %148 : vector<8x128xf32>
    %150 = math.exp %149 : vector<8x128xf32>
    %cst_26 = arith.constant 1.000000e+00 : f32
    %151 = vector.broadcast %cst_26 : f32 to vector<8x128xf32>
    %152 = arith.addf %151, %150 : vector<8x128xf32>
    %153 = arith.divf %151, %152 : vector<8x128xf32>
    %154 = math.tanh %148 : vector<8x128xf32>
    %155 = vector.extract_strided_slice %153 {offsets = [0, 0], sizes = [8, 32], strides = [1, 1]} : vector<8x128xf32> to vector<8x32xf32>
    %156 = vector.extract_strided_slice %153 {offsets = [0, 32], sizes = [8, 32], strides = [1, 1]} : vector<8x128xf32> to vector<8x32xf32>
    %157 = vector.extract_strided_slice %153 {offsets = [0, 96], sizes = [8, 32], strides = [1, 1]} : vector<8x128xf32> to vector<8x32xf32>
    %158 = vector.extract_strided_slice %154 {offsets = [0, 64], sizes = [8, 32], strides = [1, 1]} : vector<8x128xf32> to vector<8x32xf32>
    %159 = arith.mulf %156, %142 : vector<8x32xf32>
    %160 = arith.mulf %155, %158 : vector<8x32xf32>
    %161 = arith.addf %159, %160 : vector<8x32xf32>
    %162 = math.tanh %161 : vector<8x32xf32>
    %163 = arith.mulf %157, %162 : vector<8x32xf32>
    %164 = tpu.concatenate %30, %49, %68, %87, %106, %125, %144, %163 in 0 : vector<8x32xf32>, vector<8x32xf32>, vector<8x32xf32>, vector<8x32xf32>, vector<8x32xf32>, vector<8x32xf32>, vector<8x32xf32>, vector<8x32xf32> -> vector<64x32xf32>
    %165 = arith.truncf %164 : vector<64x32xf32> to vector<64x32xbf16>
    %c0_27 = arith.constant 0 : index
    %c0_28 = arith.constant 0 : index
    %166 = vector.load %arg5[%c0_27, %c0_28] : memref<32x128xbf16, #tpu.memory_space<vmem>>, vector<32x128xbf16>
    %c0_29 = arith.constant 0 : index
    %c0_30 = arith.constant 0 : index
    %167 = vector.load %arg6[%c0_29, %c0_30] : memref<32x128xbf16, #tpu.memory_space<vmem>>, vector<32x128xbf16>
    %c0_31 = arith.constant 0 : index
    %c0_32 = arith.constant 0 : index
    %168 = vector.load %arg7[%c0_31, %c0_32] : memref<1x128xf32, #tpu.memory_space<vmem>>, vector<1x128xf32>
    %cst_33 = arith.constant dense<0.000000e+00> : vector<64x128xf32>
    %169 = tpu.matmul %165, %166, %cst_33 {dimension_numbers = #tpu.dot_dimension_numbers<[1], [0], [0], [1], [0, 0, 1, 1], [], []>} : vector<64x32xbf16>, vector<32x128xbf16>, vector<64x128xf32> -> vector<64x128xf32>
    %170 = vector.broadcast %168 : vector<1x128xf32> to vector<64x128xf32>
    %171 = arith.addf %169, %170 : vector<64x128xf32>
    %cst_34 = arith.constant 0.000000e+00 : f32
    %172 = vector.broadcast %cst_34 : f32 to vector<8x32xf32>
    %cst_35 = arith.constant 0.000000e+00 : f32
    %173 = vector.broadcast %cst_35 : f32 to vector<8x32xf32>
    %174 = vector.extract_strided_slice %171 {offsets = [0, 0], sizes = [8, 128], strides = [1, 1]} : vector<64x128xf32> to vector<8x128xf32>
    %175 = arith.truncf %172 : vector<8x32xf32> to vector<8x32xbf16>
    %cst_36 = arith.constant dense<0.000000e+00> : vector<8x128xf32>
    %176 = tpu.matmul %175, %167, %cst_36 {dimension_numbers = #tpu.dot_dimension_numbers<[1], [0], [0], [1], [0, 0, 1, 1], [], []>} : vector<8x32xbf16>, vector<32x128xbf16>, vector<8x128xf32> -> vector<8x128xf32>
    %177 = arith.addf %174, %176 : vector<8x128xf32>
    %178 = arith.negf %177 : vector<8x128xf32>
    %179 = math.exp %178 : vector<8x128xf32>
    %cst_37 = arith.constant 1.000000e+00 : f32
    %180 = vector.broadcast %cst_37 : f32 to vector<8x128xf32>
    %181 = arith.addf %180, %179 : vector<8x128xf32>
    %182 = arith.divf %180, %181 : vector<8x128xf32>
    %183 = math.tanh %177 : vector<8x128xf32>
    %184 = vector.extract_strided_slice %182 {offsets = [0, 0], sizes = [8, 32], strides = [1, 1]} : vector<8x128xf32> to vector<8x32xf32>
    %185 = vector.extract_strided_slice %182 {offsets = [0, 32], sizes = [8, 32], strides = [1, 1]} : vector<8x128xf32> to vector<8x32xf32>
    %186 = vector.extract_strided_slice %182 {offsets = [0, 96], sizes = [8, 32], strides = [1, 1]} : vector<8x128xf32> to vector<8x32xf32>
    %187 = vector.extract_strided_slice %183 {offsets = [0, 64], sizes = [8, 32], strides = [1, 1]} : vector<8x128xf32> to vector<8x32xf32>
    %188 = arith.mulf %185, %173 : vector<8x32xf32>
    %189 = arith.mulf %184, %187 : vector<8x32xf32>
    %190 = arith.addf %188, %189 : vector<8x32xf32>
    %191 = math.tanh %190 : vector<8x32xf32>
    %192 = arith.mulf %186, %191 : vector<8x32xf32>
    %193 = vector.extract_strided_slice %171 {offsets = [8, 0], sizes = [8, 128], strides = [1, 1]} : vector<64x128xf32> to vector<8x128xf32>
    %194 = arith.truncf %192 : vector<8x32xf32> to vector<8x32xbf16>
    %cst_38 = arith.constant dense<0.000000e+00> : vector<8x128xf32>
    %195 = tpu.matmul %194, %167, %cst_38 {dimension_numbers = #tpu.dot_dimension_numbers<[1], [0], [0], [1], [0, 0, 1, 1], [], []>} : vector<8x32xbf16>, vector<32x128xbf16>, vector<8x128xf32> -> vector<8x128xf32>
    %196 = arith.addf %193, %195 : vector<8x128xf32>
    %197 = arith.negf %196 : vector<8x128xf32>
    %198 = math.exp %197 : vector<8x128xf32>
    %cst_39 = arith.constant 1.000000e+00 : f32
    %199 = vector.broadcast %cst_39 : f32 to vector<8x128xf32>
    %200 = arith.addf %199, %198 : vector<8x128xf32>
    %201 = arith.divf %199, %200 : vector<8x128xf32>
    %202 = math.tanh %196 : vector<8x128xf32>
    %203 = vector.extract_strided_slice %201 {offsets = [0, 0], sizes = [8, 32], strides = [1, 1]} : vector<8x128xf32> to vector<8x32xf32>
    %204 = vector.extract_strided_slice %201 {offsets = [0, 32], sizes = [8, 32], strides = [1, 1]} : vector<8x128xf32> to vector<8x32xf32>
    %205 = vector.extract_strided_slice %201 {offsets = [0, 96], sizes = [8, 32], strides = [1, 1]} : vector<8x128xf32> to vector<8x32xf32>
    %206 = vector.extract_strided_slice %202 {offsets = [0, 64], sizes = [8, 32], strides = [1, 1]} : vector<8x128xf32> to vector<8x32xf32>
    %207 = arith.mulf %204, %190 : vector<8x32xf32>
    %208 = arith.mulf %203, %206 : vector<8x32xf32>
    %209 = arith.addf %207, %208 : vector<8x32xf32>
    %210 = math.tanh %209 : vector<8x32xf32>
    %211 = arith.mulf %205, %210 : vector<8x32xf32>
    %212 = vector.extract_strided_slice %171 {offsets = [16, 0], sizes = [8, 128], strides = [1, 1]} : vector<64x128xf32> to vector<8x128xf32>
    %213 = arith.truncf %211 : vector<8x32xf32> to vector<8x32xbf16>
    %cst_40 = arith.constant dense<0.000000e+00> : vector<8x128xf32>
    %214 = tpu.matmul %213, %167, %cst_40 {dimension_numbers = #tpu.dot_dimension_numbers<[1], [0], [0], [1], [0, 0, 1, 1], [], []>} : vector<8x32xbf16>, vector<32x128xbf16>, vector<8x128xf32> -> vector<8x128xf32>
    %215 = arith.addf %212, %214 : vector<8x128xf32>
    %216 = arith.negf %215 : vector<8x128xf32>
    %217 = math.exp %216 : vector<8x128xf32>
    %cst_41 = arith.constant 1.000000e+00 : f32
    %218 = vector.broadcast %cst_41 : f32 to vector<8x128xf32>
    %219 = arith.addf %218, %217 : vector<8x128xf32>
    %220 = arith.divf %218, %219 : vector<8x128xf32>
    %221 = math.tanh %215 : vector<8x128xf32>
    %222 = vector.extract_strided_slice %220 {offsets = [0, 0], sizes = [8, 32], strides = [1, 1]} : vector<8x128xf32> to vector<8x32xf32>
    %223 = vector.extract_strided_slice %220 {offsets = [0, 32], sizes = [8, 32], strides = [1, 1]} : vector<8x128xf32> to vector<8x32xf32>
    %224 = vector.extract_strided_slice %220 {offsets = [0, 96], sizes = [8, 32], strides = [1, 1]} : vector<8x128xf32> to vector<8x32xf32>
    %225 = vector.extract_strided_slice %221 {offsets = [0, 64], sizes = [8, 32], strides = [1, 1]} : vector<8x128xf32> to vector<8x32xf32>
    %226 = arith.mulf %223, %209 : vector<8x32xf32>
    %227 = arith.mulf %222, %225 : vector<8x32xf32>
    %228 = arith.addf %226, %227 : vector<8x32xf32>
    %229 = math.tanh %228 : vector<8x32xf32>
    %230 = arith.mulf %224, %229 : vector<8x32xf32>
    %231 = vector.extract_strided_slice %171 {offsets = [24, 0], sizes = [8, 128], strides = [1, 1]} : vector<64x128xf32> to vector<8x128xf32>
    %232 = arith.truncf %230 : vector<8x32xf32> to vector<8x32xbf16>
    %cst_42 = arith.constant dense<0.000000e+00> : vector<8x128xf32>
    %233 = tpu.matmul %232, %167, %cst_42 {dimension_numbers = #tpu.dot_dimension_numbers<[1], [0], [0], [1], [0, 0, 1, 1], [], []>} : vector<8x32xbf16>, vector<32x128xbf16>, vector<8x128xf32> -> vector<8x128xf32>
    %234 = arith.addf %231, %233 : vector<8x128xf32>
    %235 = arith.negf %234 : vector<8x128xf32>
    %236 = math.exp %235 : vector<8x128xf32>
    %cst_43 = arith.constant 1.000000e+00 : f32
    %237 = vector.broadcast %cst_43 : f32 to vector<8x128xf32>
    %238 = arith.addf %237, %236 : vector<8x128xf32>
    %239 = arith.divf %237, %238 : vector<8x128xf32>
    %240 = math.tanh %234 : vector<8x128xf32>
    %241 = vector.extract_strided_slice %239 {offsets = [0, 0], sizes = [8, 32], strides = [1, 1]} : vector<8x128xf32> to vector<8x32xf32>
    %242 = vector.extract_strided_slice %239 {offsets = [0, 32], sizes = [8, 32], strides = [1, 1]} : vector<8x128xf32> to vector<8x32xf32>
    %243 = vector.extract_strided_slice %239 {offsets = [0, 96], sizes = [8, 32], strides = [1, 1]} : vector<8x128xf32> to vector<8x32xf32>
    %244 = vector.extract_strided_slice %240 {offsets = [0, 64], sizes = [8, 32], strides = [1, 1]} : vector<8x128xf32> to vector<8x32xf32>
    %245 = arith.mulf %242, %228 : vector<8x32xf32>
    %246 = arith.mulf %241, %244 : vector<8x32xf32>
    %247 = arith.addf %245, %246 : vector<8x32xf32>
    %248 = math.tanh %247 : vector<8x32xf32>
    %249 = arith.mulf %243, %248 : vector<8x32xf32>
    %250 = vector.extract_strided_slice %171 {offsets = [32, 0], sizes = [8, 128], strides = [1, 1]} : vector<64x128xf32> to vector<8x128xf32>
    %251 = arith.truncf %249 : vector<8x32xf32> to vector<8x32xbf16>
    %cst_44 = arith.constant dense<0.000000e+00> : vector<8x128xf32>
    %252 = tpu.matmul %251, %167, %cst_44 {dimension_numbers = #tpu.dot_dimension_numbers<[1], [0], [0], [1], [0, 0, 1, 1], [], []>} : vector<8x32xbf16>, vector<32x128xbf16>, vector<8x128xf32> -> vector<8x128xf32>
    %253 = arith.addf %250, %252 : vector<8x128xf32>
    %254 = arith.negf %253 : vector<8x128xf32>
    %255 = math.exp %254 : vector<8x128xf32>
    %cst_45 = arith.constant 1.000000e+00 : f32
    %256 = vector.broadcast %cst_45 : f32 to vector<8x128xf32>
    %257 = arith.addf %256, %255 : vector<8x128xf32>
    %258 = arith.divf %256, %257 : vector<8x128xf32>
    %259 = math.tanh %253 : vector<8x128xf32>
    %260 = vector.extract_strided_slice %258 {offsets = [0, 0], sizes = [8, 32], strides = [1, 1]} : vector<8x128xf32> to vector<8x32xf32>
    %261 = vector.extract_strided_slice %258 {offsets = [0, 32], sizes = [8, 32], strides = [1, 1]} : vector<8x128xf32> to vector<8x32xf32>
    %262 = vector.extract_strided_slice %258 {offsets = [0, 96], sizes = [8, 32], strides = [1, 1]} : vector<8x128xf32> to vector<8x32xf32>
    %263 = vector.extract_strided_slice %259 {offsets = [0, 64], sizes = [8, 32], strides = [1, 1]} : vector<8x128xf32> to vector<8x32xf32>
    %264 = arith.mulf %261, %247 : vector<8x32xf32>
    %265 = arith.mulf %260, %263 : vector<8x32xf32>
    %266 = arith.addf %264, %265 : vector<8x32xf32>
    %267 = math.tanh %266 : vector<8x32xf32>
    %268 = arith.mulf %262, %267 : vector<8x32xf32>
    %269 = vector.extract_strided_slice %171 {offsets = [40, 0], sizes = [8, 128], strides = [1, 1]} : vector<64x128xf32> to vector<8x128xf32>
    %270 = arith.truncf %268 : vector<8x32xf32> to vector<8x32xbf16>
    %cst_46 = arith.constant dense<0.000000e+00> : vector<8x128xf32>
    %271 = tpu.matmul %270, %167, %cst_46 {dimension_numbers = #tpu.dot_dimension_numbers<[1], [0], [0], [1], [0, 0, 1, 1], [], []>} : vector<8x32xbf16>, vector<32x128xbf16>, vector<8x128xf32> -> vector<8x128xf32>
    %272 = arith.addf %269, %271 : vector<8x128xf32>
    %273 = arith.negf %272 : vector<8x128xf32>
    %274 = math.exp %273 : vector<8x128xf32>
    %cst_47 = arith.constant 1.000000e+00 : f32
    %275 = vector.broadcast %cst_47 : f32 to vector<8x128xf32>
    %276 = arith.addf %275, %274 : vector<8x128xf32>
    %277 = arith.divf %275, %276 : vector<8x128xf32>
    %278 = math.tanh %272 : vector<8x128xf32>
    %279 = vector.extract_strided_slice %277 {offsets = [0, 0], sizes = [8, 32], strides = [1, 1]} : vector<8x128xf32> to vector<8x32xf32>
    %280 = vector.extract_strided_slice %277 {offsets = [0, 32], sizes = [8, 32], strides = [1, 1]} : vector<8x128xf32> to vector<8x32xf32>
    %281 = vector.extract_strided_slice %277 {offsets = [0, 96], sizes = [8, 32], strides = [1, 1]} : vector<8x128xf32> to vector<8x32xf32>
    %282 = vector.extract_strided_slice %278 {offsets = [0, 64], sizes = [8, 32], strides = [1, 1]} : vector<8x128xf32> to vector<8x32xf32>
    %283 = arith.mulf %280, %266 : vector<8x32xf32>
    %284 = arith.mulf %279, %282 : vector<8x32xf32>
    %285 = arith.addf %283, %284 : vector<8x32xf32>
    %286 = math.tanh %285 : vector<8x32xf32>
    %287 = arith.mulf %281, %286 : vector<8x32xf32>
    %288 = vector.extract_strided_slice %171 {offsets = [48, 0], sizes = [8, 128], strides = [1, 1]} : vector<64x128xf32> to vector<8x128xf32>
    %289 = arith.truncf %287 : vector<8x32xf32> to vector<8x32xbf16>
    %cst_48 = arith.constant dense<0.000000e+00> : vector<8x128xf32>
    %290 = tpu.matmul %289, %167, %cst_48 {dimension_numbers = #tpu.dot_dimension_numbers<[1], [0], [0], [1], [0, 0, 1, 1], [], []>} : vector<8x32xbf16>, vector<32x128xbf16>, vector<8x128xf32> -> vector<8x128xf32>
    %291 = arith.addf %288, %290 : vector<8x128xf32>
    %292 = arith.negf %291 : vector<8x128xf32>
    %293 = math.exp %292 : vector<8x128xf32>
    %cst_49 = arith.constant 1.000000e+00 : f32
    %294 = vector.broadcast %cst_49 : f32 to vector<8x128xf32>
    %295 = arith.addf %294, %293 : vector<8x128xf32>
    %296 = arith.divf %294, %295 : vector<8x128xf32>
    %297 = math.tanh %291 : vector<8x128xf32>
    %298 = vector.extract_strided_slice %296 {offsets = [0, 0], sizes = [8, 32], strides = [1, 1]} : vector<8x128xf32> to vector<8x32xf32>
    %299 = vector.extract_strided_slice %296 {offsets = [0, 32], sizes = [8, 32], strides = [1, 1]} : vector<8x128xf32> to vector<8x32xf32>
    %300 = vector.extract_strided_slice %296 {offsets = [0, 96], sizes = [8, 32], strides = [1, 1]} : vector<8x128xf32> to vector<8x32xf32>
    %301 = vector.extract_strided_slice %297 {offsets = [0, 64], sizes = [8, 32], strides = [1, 1]} : vector<8x128xf32> to vector<8x32xf32>
    %302 = arith.mulf %299, %285 : vector<8x32xf32>
    %303 = arith.mulf %298, %301 : vector<8x32xf32>
    %304 = arith.addf %302, %303 : vector<8x32xf32>
    %305 = math.tanh %304 : vector<8x32xf32>
    %306 = arith.mulf %300, %305 : vector<8x32xf32>
    %307 = vector.extract_strided_slice %171 {offsets = [56, 0], sizes = [8, 128], strides = [1, 1]} : vector<64x128xf32> to vector<8x128xf32>
    %308 = arith.truncf %306 : vector<8x32xf32> to vector<8x32xbf16>
    %cst_50 = arith.constant dense<0.000000e+00> : vector<8x128xf32>
    %309 = tpu.matmul %308, %167, %cst_50 {dimension_numbers = #tpu.dot_dimension_numbers<[1], [0], [0], [1], [0, 0, 1, 1], [], []>} : vector<8x32xbf16>, vector<32x128xbf16>, vector<8x128xf32> -> vector<8x128xf32>
    %310 = arith.addf %307, %309 : vector<8x128xf32>
    %311 = arith.negf %310 : vector<8x128xf32>
    %312 = math.exp %311 : vector<8x128xf32>
    %cst_51 = arith.constant 1.000000e+00 : f32
    %313 = vector.broadcast %cst_51 : f32 to vector<8x128xf32>
    %314 = arith.addf %313, %312 : vector<8x128xf32>
    %315 = arith.divf %313, %314 : vector<8x128xf32>
    %316 = math.tanh %310 : vector<8x128xf32>
    %317 = vector.extract_strided_slice %315 {offsets = [0, 0], sizes = [8, 32], strides = [1, 1]} : vector<8x128xf32> to vector<8x32xf32>
    %318 = vector.extract_strided_slice %315 {offsets = [0, 32], sizes = [8, 32], strides = [1, 1]} : vector<8x128xf32> to vector<8x32xf32>
    %319 = vector.extract_strided_slice %315 {offsets = [0, 96], sizes = [8, 32], strides = [1, 1]} : vector<8x128xf32> to vector<8x32xf32>
    %320 = vector.extract_strided_slice %316 {offsets = [0, 64], sizes = [8, 32], strides = [1, 1]} : vector<8x128xf32> to vector<8x32xf32>
    %321 = arith.mulf %318, %304 : vector<8x32xf32>
    %322 = arith.mulf %317, %320 : vector<8x32xf32>
    %323 = arith.addf %321, %322 : vector<8x32xf32>
    %324 = math.tanh %323 : vector<8x32xf32>
    %325 = arith.mulf %319, %324 : vector<8x32xf32>
    %326 = tpu.concatenate %192, %211, %230, %249, %268, %287, %306, %325 in 0 : vector<8x32xf32>, vector<8x32xf32>, vector<8x32xf32>, vector<8x32xf32>, vector<8x32xf32>, vector<8x32xf32>, vector<8x32xf32>, vector<8x32xf32> -> vector<64x32xf32>
    %327 = arith.truncf %326 : vector<64x32xf32> to vector<64x32xbf16>
    %c0_52 = arith.constant 0 : index
    %c0_53 = arith.constant 0 : index
    %328 = vector.load %arg8[%c0_52, %c0_53] : memref<32x128xbf16, #tpu.memory_space<vmem>>, vector<32x128xbf16>
    %c0_54 = arith.constant 0 : index
    %c0_55 = arith.constant 0 : index
    %329 = vector.load %arg9[%c0_54, %c0_55] : memref<32x128xbf16, #tpu.memory_space<vmem>>, vector<32x128xbf16>
    %c0_56 = arith.constant 0 : index
    %c0_57 = arith.constant 0 : index
    %330 = vector.load %arg10[%c0_56, %c0_57] : memref<1x128xf32, #tpu.memory_space<vmem>>, vector<1x128xf32>
    %cst_58 = arith.constant dense<0.000000e+00> : vector<64x128xf32>
    %331 = tpu.matmul %327, %328, %cst_58 {dimension_numbers = #tpu.dot_dimension_numbers<[1], [0], [0], [1], [0, 0, 1, 1], [], []>} : vector<64x32xbf16>, vector<32x128xbf16>, vector<64x128xf32> -> vector<64x128xf32>
    %332 = vector.broadcast %330 : vector<1x128xf32> to vector<64x128xf32>
    %333 = arith.addf %331, %332 : vector<64x128xf32>
    %cst_59 = arith.constant 0.000000e+00 : f32
    %334 = vector.broadcast %cst_59 : f32 to vector<8x32xf32>
    %cst_60 = arith.constant 0.000000e+00 : f32
    %335 = vector.broadcast %cst_60 : f32 to vector<8x32xf32>
    %336 = vector.extract_strided_slice %333 {offsets = [0, 0], sizes = [8, 128], strides = [1, 1]} : vector<64x128xf32> to vector<8x128xf32>
    %337 = arith.truncf %334 : vector<8x32xf32> to vector<8x32xbf16>
    %cst_61 = arith.constant dense<0.000000e+00> : vector<8x128xf32>
    %338 = tpu.matmul %337, %329, %cst_61 {dimension_numbers = #tpu.dot_dimension_numbers<[1], [0], [0], [1], [0, 0, 1, 1], [], []>} : vector<8x32xbf16>, vector<32x128xbf16>, vector<8x128xf32> -> vector<8x128xf32>
    %339 = arith.addf %336, %338 : vector<8x128xf32>
    %340 = arith.negf %339 : vector<8x128xf32>
    %341 = math.exp %340 : vector<8x128xf32>
    %cst_62 = arith.constant 1.000000e+00 : f32
    %342 = vector.broadcast %cst_62 : f32 to vector<8x128xf32>
    %343 = arith.addf %342, %341 : vector<8x128xf32>
    %344 = arith.divf %342, %343 : vector<8x128xf32>
    %345 = math.tanh %339 : vector<8x128xf32>
    %346 = vector.extract_strided_slice %344 {offsets = [0, 0], sizes = [8, 32], strides = [1, 1]} : vector<8x128xf32> to vector<8x32xf32>
    %347 = vector.extract_strided_slice %344 {offsets = [0, 32], sizes = [8, 32], strides = [1, 1]} : vector<8x128xf32> to vector<8x32xf32>
    %348 = vector.extract_strided_slice %344 {offsets = [0, 96], sizes = [8, 32], strides = [1, 1]} : vector<8x128xf32> to vector<8x32xf32>
    %349 = vector.extract_strided_slice %345 {offsets = [0, 64], sizes = [8, 32], strides = [1, 1]} : vector<8x128xf32> to vector<8x32xf32>
    %350 = arith.mulf %347, %335 : vector<8x32xf32>
    %351 = arith.mulf %346, %349 : vector<8x32xf32>
    %352 = arith.addf %350, %351 : vector<8x32xf32>
    %353 = math.tanh %352 : vector<8x32xf32>
    %354 = arith.mulf %348, %353 : vector<8x32xf32>
    %355 = vector.extract_strided_slice %333 {offsets = [8, 0], sizes = [8, 128], strides = [1, 1]} : vector<64x128xf32> to vector<8x128xf32>
    %356 = arith.truncf %354 : vector<8x32xf32> to vector<8x32xbf16>
    %cst_63 = arith.constant dense<0.000000e+00> : vector<8x128xf32>
    %357 = tpu.matmul %356, %329, %cst_63 {dimension_numbers = #tpu.dot_dimension_numbers<[1], [0], [0], [1], [0, 0, 1, 1], [], []>} : vector<8x32xbf16>, vector<32x128xbf16>, vector<8x128xf32> -> vector<8x128xf32>
    %358 = arith.addf %355, %357 : vector<8x128xf32>
    %359 = arith.negf %358 : vector<8x128xf32>
    %360 = math.exp %359 : vector<8x128xf32>
    %cst_64 = arith.constant 1.000000e+00 : f32
    %361 = vector.broadcast %cst_64 : f32 to vector<8x128xf32>
    %362 = arith.addf %361, %360 : vector<8x128xf32>
    %363 = arith.divf %361, %362 : vector<8x128xf32>
    %364 = math.tanh %358 : vector<8x128xf32>
    %365 = vector.extract_strided_slice %363 {offsets = [0, 0], sizes = [8, 32], strides = [1, 1]} : vector<8x128xf32> to vector<8x32xf32>
    %366 = vector.extract_strided_slice %363 {offsets = [0, 32], sizes = [8, 32], strides = [1, 1]} : vector<8x128xf32> to vector<8x32xf32>
    %367 = vector.extract_strided_slice %363 {offsets = [0, 96], sizes = [8, 32], strides = [1, 1]} : vector<8x128xf32> to vector<8x32xf32>
    %368 = vector.extract_strided_slice %364 {offsets = [0, 64], sizes = [8, 32], strides = [1, 1]} : vector<8x128xf32> to vector<8x32xf32>
    %369 = arith.mulf %366, %352 : vector<8x32xf32>
    %370 = arith.mulf %365, %368 : vector<8x32xf32>
    %371 = arith.addf %369, %370 : vector<8x32xf32>
    %372 = math.tanh %371 : vector<8x32xf32>
    %373 = arith.mulf %367, %372 : vector<8x32xf32>
    %374 = vector.extract_strided_slice %333 {offsets = [16, 0], sizes = [8, 128], strides = [1, 1]} : vector<64x128xf32> to vector<8x128xf32>
    %375 = arith.truncf %373 : vector<8x32xf32> to vector<8x32xbf16>
    %cst_65 = arith.constant dense<0.000000e+00> : vector<8x128xf32>
    %376 = tpu.matmul %375, %329, %cst_65 {dimension_numbers = #tpu.dot_dimension_numbers<[1], [0], [0], [1], [0, 0, 1, 1], [], []>} : vector<8x32xbf16>, vector<32x128xbf16>, vector<8x128xf32> -> vector<8x128xf32>
    %377 = arith.addf %374, %376 : vector<8x128xf32>
    %378 = arith.negf %377 : vector<8x128xf32>
    %379 = math.exp %378 : vector<8x128xf32>
    %cst_66 = arith.constant 1.000000e+00 : f32
    %380 = vector.broadcast %cst_66 : f32 to vector<8x128xf32>
    %381 = arith.addf %380, %379 : vector<8x128xf32>
    %382 = arith.divf %380, %381 : vector<8x128xf32>
    %383 = math.tanh %377 : vector<8x128xf32>
    %384 = vector.extract_strided_slice %382 {offsets = [0, 0], sizes = [8, 32], strides = [1, 1]} : vector<8x128xf32> to vector<8x32xf32>
    %385 = vector.extract_strided_slice %382 {offsets = [0, 32], sizes = [8, 32], strides = [1, 1]} : vector<8x128xf32> to vector<8x32xf32>
    %386 = vector.extract_strided_slice %382 {offsets = [0, 96], sizes = [8, 32], strides = [1, 1]} : vector<8x128xf32> to vector<8x32xf32>
    %387 = vector.extract_strided_slice %383 {offsets = [0, 64], sizes = [8, 32], strides = [1, 1]} : vector<8x128xf32> to vector<8x32xf32>
    %388 = arith.mulf %385, %371 : vector<8x32xf32>
    %389 = arith.mulf %384, %387 : vector<8x32xf32>
    %390 = arith.addf %388, %389 : vector<8x32xf32>
    %391 = math.tanh %390 : vector<8x32xf32>
    %392 = arith.mulf %386, %391 : vector<8x32xf32>
    %393 = vector.extract_strided_slice %333 {offsets = [24, 0], sizes = [8, 128], strides = [1, 1]} : vector<64x128xf32> to vector<8x128xf32>
    %394 = arith.truncf %392 : vector<8x32xf32> to vector<8x32xbf16>
    %cst_67 = arith.constant dense<0.000000e+00> : vector<8x128xf32>
    %395 = tpu.matmul %394, %329, %cst_67 {dimension_numbers = #tpu.dot_dimension_numbers<[1], [0], [0], [1], [0, 0, 1, 1], [], []>} : vector<8x32xbf16>, vector<32x128xbf16>, vector<8x128xf32> -> vector<8x128xf32>
    %396 = arith.addf %393, %395 : vector<8x128xf32>
    %397 = arith.negf %396 : vector<8x128xf32>
    %398 = math.exp %397 : vector<8x128xf32>
    %cst_68 = arith.constant 1.000000e+00 : f32
    %399 = vector.broadcast %cst_68 : f32 to vector<8x128xf32>
    %400 = arith.addf %399, %398 : vector<8x128xf32>
    %401 = arith.divf %399, %400 : vector<8x128xf32>
    %402 = math.tanh %396 : vector<8x128xf32>
    %403 = vector.extract_strided_slice %401 {offsets = [0, 0], sizes = [8, 32], strides = [1, 1]} : vector<8x128xf32> to vector<8x32xf32>
    %404 = vector.extract_strided_slice %401 {offsets = [0, 32], sizes = [8, 32], strides = [1, 1]} : vector<8x128xf32> to vector<8x32xf32>
    %405 = vector.extract_strided_slice %401 {offsets = [0, 96], sizes = [8, 32], strides = [1, 1]} : vector<8x128xf32> to vector<8x32xf32>
    %406 = vector.extract_strided_slice %402 {offsets = [0, 64], sizes = [8, 32], strides = [1, 1]} : vector<8x128xf32> to vector<8x32xf32>
    %407 = arith.mulf %404, %390 : vector<8x32xf32>
    %408 = arith.mulf %403, %406 : vector<8x32xf32>
    %409 = arith.addf %407, %408 : vector<8x32xf32>
    %410 = math.tanh %409 : vector<8x32xf32>
    %411 = arith.mulf %405, %410 : vector<8x32xf32>
    %412 = vector.extract_strided_slice %333 {offsets = [32, 0], sizes = [8, 128], strides = [1, 1]} : vector<64x128xf32> to vector<8x128xf32>
    %413 = arith.truncf %411 : vector<8x32xf32> to vector<8x32xbf16>
    %cst_69 = arith.constant dense<0.000000e+00> : vector<8x128xf32>
    %414 = tpu.matmul %413, %329, %cst_69 {dimension_numbers = #tpu.dot_dimension_numbers<[1], [0], [0], [1], [0, 0, 1, 1], [], []>} : vector<8x32xbf16>, vector<32x128xbf16>, vector<8x128xf32> -> vector<8x128xf32>
    %415 = arith.addf %412, %414 : vector<8x128xf32>
    %416 = arith.negf %415 : vector<8x128xf32>
    %417 = math.exp %416 : vector<8x128xf32>
    %cst_70 = arith.constant 1.000000e+00 : f32
    %418 = vector.broadcast %cst_70 : f32 to vector<8x128xf32>
    %419 = arith.addf %418, %417 : vector<8x128xf32>
    %420 = arith.divf %418, %419 : vector<8x128xf32>
    %421 = math.tanh %415 : vector<8x128xf32>
    %422 = vector.extract_strided_slice %420 {offsets = [0, 0], sizes = [8, 32], strides = [1, 1]} : vector<8x128xf32> to vector<8x32xf32>
    %423 = vector.extract_strided_slice %420 {offsets = [0, 32], sizes = [8, 32], strides = [1, 1]} : vector<8x128xf32> to vector<8x32xf32>
    %424 = vector.extract_strided_slice %420 {offsets = [0, 96], sizes = [8, 32], strides = [1, 1]} : vector<8x128xf32> to vector<8x32xf32>
    %425 = vector.extract_strided_slice %421 {offsets = [0, 64], sizes = [8, 32], strides = [1, 1]} : vector<8x128xf32> to vector<8x32xf32>
    %426 = arith.mulf %423, %409 : vector<8x32xf32>
    %427 = arith.mulf %422, %425 : vector<8x32xf32>
    %428 = arith.addf %426, %427 : vector<8x32xf32>
    %429 = math.tanh %428 : vector<8x32xf32>
    %430 = arith.mulf %424, %429 : vector<8x32xf32>
    %431 = vector.extract_strided_slice %333 {offsets = [40, 0], sizes = [8, 128], strides = [1, 1]} : vector<64x128xf32> to vector<8x128xf32>
    %432 = arith.truncf %430 : vector<8x32xf32> to vector<8x32xbf16>
    %cst_71 = arith.constant dense<0.000000e+00> : vector<8x128xf32>
    %433 = tpu.matmul %432, %329, %cst_71 {dimension_numbers = #tpu.dot_dimension_numbers<[1], [0], [0], [1], [0, 0, 1, 1], [], []>} : vector<8x32xbf16>, vector<32x128xbf16>, vector<8x128xf32> -> vector<8x128xf32>
    %434 = arith.addf %431, %433 : vector<8x128xf32>
    %435 = arith.negf %434 : vector<8x128xf32>
    %436 = math.exp %435 : vector<8x128xf32>
    %cst_72 = arith.constant 1.000000e+00 : f32
    %437 = vector.broadcast %cst_72 : f32 to vector<8x128xf32>
    %438 = arith.addf %437, %436 : vector<8x128xf32>
    %439 = arith.divf %437, %438 : vector<8x128xf32>
    %440 = math.tanh %434 : vector<8x128xf32>
    %441 = vector.extract_strided_slice %439 {offsets = [0, 0], sizes = [8, 32], strides = [1, 1]} : vector<8x128xf32> to vector<8x32xf32>
    %442 = vector.extract_strided_slice %439 {offsets = [0, 32], sizes = [8, 32], strides = [1, 1]} : vector<8x128xf32> to vector<8x32xf32>
    %443 = vector.extract_strided_slice %439 {offsets = [0, 96], sizes = [8, 32], strides = [1, 1]} : vector<8x128xf32> to vector<8x32xf32>
    %444 = vector.extract_strided_slice %440 {offsets = [0, 64], sizes = [8, 32], strides = [1, 1]} : vector<8x128xf32> to vector<8x32xf32>
    %445 = arith.mulf %442, %428 : vector<8x32xf32>
    %446 = arith.mulf %441, %444 : vector<8x32xf32>
    %447 = arith.addf %445, %446 : vector<8x32xf32>
    %448 = math.tanh %447 : vector<8x32xf32>
    %449 = arith.mulf %443, %448 : vector<8x32xf32>
    %450 = vector.extract_strided_slice %333 {offsets = [48, 0], sizes = [8, 128], strides = [1, 1]} : vector<64x128xf32> to vector<8x128xf32>
    %451 = arith.truncf %449 : vector<8x32xf32> to vector<8x32xbf16>
    %cst_73 = arith.constant dense<0.000000e+00> : vector<8x128xf32>
    %452 = tpu.matmul %451, %329, %cst_73 {dimension_numbers = #tpu.dot_dimension_numbers<[1], [0], [0], [1], [0, 0, 1, 1], [], []>} : vector<8x32xbf16>, vector<32x128xbf16>, vector<8x128xf32> -> vector<8x128xf32>
    %453 = arith.addf %450, %452 : vector<8x128xf32>
    %454 = arith.negf %453 : vector<8x128xf32>
    %455 = math.exp %454 : vector<8x128xf32>
    %cst_74 = arith.constant 1.000000e+00 : f32
    %456 = vector.broadcast %cst_74 : f32 to vector<8x128xf32>
    %457 = arith.addf %456, %455 : vector<8x128xf32>
    %458 = arith.divf %456, %457 : vector<8x128xf32>
    %459 = math.tanh %453 : vector<8x128xf32>
    %460 = vector.extract_strided_slice %458 {offsets = [0, 0], sizes = [8, 32], strides = [1, 1]} : vector<8x128xf32> to vector<8x32xf32>
    %461 = vector.extract_strided_slice %458 {offsets = [0, 32], sizes = [8, 32], strides = [1, 1]} : vector<8x128xf32> to vector<8x32xf32>
    %462 = vector.extract_strided_slice %458 {offsets = [0, 96], sizes = [8, 32], strides = [1, 1]} : vector<8x128xf32> to vector<8x32xf32>
    %463 = vector.extract_strided_slice %459 {offsets = [0, 64], sizes = [8, 32], strides = [1, 1]} : vector<8x128xf32> to vector<8x32xf32>
    %464 = arith.mulf %461, %447 : vector<8x32xf32>
    %465 = arith.mulf %460, %463 : vector<8x32xf32>
    %466 = arith.addf %464, %465 : vector<8x32xf32>
    %467 = math.tanh %466 : vector<8x32xf32>
    %468 = arith.mulf %462, %467 : vector<8x32xf32>
    %469 = vector.extract_strided_slice %333 {offsets = [56, 0], sizes = [8, 128], strides = [1, 1]} : vector<64x128xf32> to vector<8x128xf32>
    %470 = arith.truncf %468 : vector<8x32xf32> to vector<8x32xbf16>
    %cst_75 = arith.constant dense<0.000000e+00> : vector<8x128xf32>
    %471 = tpu.matmul %470, %329, %cst_75 {dimension_numbers = #tpu.dot_dimension_numbers<[1], [0], [0], [1], [0, 0, 1, 1], [], []>} : vector<8x32xbf16>, vector<32x128xbf16>, vector<8x128xf32> -> vector<8x128xf32>
    %472 = arith.addf %469, %471 : vector<8x128xf32>
    %473 = arith.negf %472 : vector<8x128xf32>
    %474 = math.exp %473 : vector<8x128xf32>
    %cst_76 = arith.constant 1.000000e+00 : f32
    %475 = vector.broadcast %cst_76 : f32 to vector<8x128xf32>
    %476 = arith.addf %475, %474 : vector<8x128xf32>
    %477 = arith.divf %475, %476 : vector<8x128xf32>
    %478 = math.tanh %472 : vector<8x128xf32>
    %479 = vector.extract_strided_slice %477 {offsets = [0, 0], sizes = [8, 32], strides = [1, 1]} : vector<8x128xf32> to vector<8x32xf32>
    %480 = vector.extract_strided_slice %477 {offsets = [0, 32], sizes = [8, 32], strides = [1, 1]} : vector<8x128xf32> to vector<8x32xf32>
    %481 = vector.extract_strided_slice %477 {offsets = [0, 96], sizes = [8, 32], strides = [1, 1]} : vector<8x128xf32> to vector<8x32xf32>
    %482 = vector.extract_strided_slice %478 {offsets = [0, 64], sizes = [8, 32], strides = [1, 1]} : vector<8x128xf32> to vector<8x32xf32>
    %483 = arith.mulf %480, %466 : vector<8x32xf32>
    %484 = arith.mulf %479, %482 : vector<8x32xf32>
    %485 = arith.addf %483, %484 : vector<8x32xf32>
    %486 = math.tanh %485 : vector<8x32xf32>
    %487 = arith.mulf %481, %486 : vector<8x32xf32>
    %488 = tpu.concatenate %354, %373, %392, %411, %430, %449, %468, %487 in 0 : vector<8x32xf32>, vector<8x32xf32>, vector<8x32xf32>, vector<8x32xf32>, vector<8x32xf32>, vector<8x32xf32>, vector<8x32xf32>, vector<8x32xf32> -> vector<64x32xf32>
    %489 = arith.truncf %488 : vector<64x32xf32> to vector<64x32xbf16>
    %c0_77 = arith.constant 0 : index
    %c0_78 = arith.constant 0 : index
    %490 = vector.load %arg11[%c0_77, %c0_78] : memref<32x128xbf16, #tpu.memory_space<vmem>>, vector<32x128xbf16>
    %c0_79 = arith.constant 0 : index
    %c0_80 = arith.constant 0 : index
    %491 = vector.load %arg12[%c0_79, %c0_80] : memref<32x128xbf16, #tpu.memory_space<vmem>>, vector<32x128xbf16>
    %c0_81 = arith.constant 0 : index
    %c0_82 = arith.constant 0 : index
    %492 = vector.load %arg13[%c0_81, %c0_82] : memref<1x128xf32, #tpu.memory_space<vmem>>, vector<1x128xf32>
    %cst_83 = arith.constant dense<0.000000e+00> : vector<64x128xf32>
    %493 = tpu.matmul %489, %490, %cst_83 {dimension_numbers = #tpu.dot_dimension_numbers<[1], [0], [0], [1], [0, 0, 1, 1], [], []>} : vector<64x32xbf16>, vector<32x128xbf16>, vector<64x128xf32> -> vector<64x128xf32>
    %494 = vector.broadcast %492 : vector<1x128xf32> to vector<64x128xf32>
    %495 = arith.addf %493, %494 : vector<64x128xf32>
    %cst_84 = arith.constant 0.000000e+00 : f32
    %496 = vector.broadcast %cst_84 : f32 to vector<8x32xf32>
    %cst_85 = arith.constant 0.000000e+00 : f32
    %497 = vector.broadcast %cst_85 : f32 to vector<8x32xf32>
    %498 = vector.extract_strided_slice %495 {offsets = [0, 0], sizes = [8, 128], strides = [1, 1]} : vector<64x128xf32> to vector<8x128xf32>
    %499 = arith.truncf %496 : vector<8x32xf32> to vector<8x32xbf16>
    %cst_86 = arith.constant dense<0.000000e+00> : vector<8x128xf32>
    %500 = tpu.matmul %499, %491, %cst_86 {dimension_numbers = #tpu.dot_dimension_numbers<[1], [0], [0], [1], [0, 0, 1, 1], [], []>} : vector<8x32xbf16>, vector<32x128xbf16>, vector<8x128xf32> -> vector<8x128xf32>
    %501 = arith.addf %498, %500 : vector<8x128xf32>
    %502 = arith.negf %501 : vector<8x128xf32>
    %503 = math.exp %502 : vector<8x128xf32>
    %cst_87 = arith.constant 1.000000e+00 : f32
    %504 = vector.broadcast %cst_87 : f32 to vector<8x128xf32>
    %505 = arith.addf %504, %503 : vector<8x128xf32>
    %506 = arith.divf %504, %505 : vector<8x128xf32>
    %507 = math.tanh %501 : vector<8x128xf32>
    %508 = vector.extract_strided_slice %506 {offsets = [0, 0], sizes = [8, 32], strides = [1, 1]} : vector<8x128xf32> to vector<8x32xf32>
    %509 = vector.extract_strided_slice %506 {offsets = [0, 32], sizes = [8, 32], strides = [1, 1]} : vector<8x128xf32> to vector<8x32xf32>
    %510 = vector.extract_strided_slice %506 {offsets = [0, 96], sizes = [8, 32], strides = [1, 1]} : vector<8x128xf32> to vector<8x32xf32>
    %511 = vector.extract_strided_slice %507 {offsets = [0, 64], sizes = [8, 32], strides = [1, 1]} : vector<8x128xf32> to vector<8x32xf32>
    %512 = arith.mulf %509, %497 : vector<8x32xf32>
    %513 = arith.mulf %508, %511 : vector<8x32xf32>
    %514 = arith.addf %512, %513 : vector<8x32xf32>
    %515 = math.tanh %514 : vector<8x32xf32>
    %516 = arith.mulf %510, %515 : vector<8x32xf32>
    %517 = arith.addf %3, %516 : vector<8x32xf32>
    %518 = vector.extract_strided_slice %495 {offsets = [8, 0], sizes = [8, 128], strides = [1, 1]} : vector<64x128xf32> to vector<8x128xf32>
    %519 = arith.truncf %516 : vector<8x32xf32> to vector<8x32xbf16>
    %cst_88 = arith.constant dense<0.000000e+00> : vector<8x128xf32>
    %520 = tpu.matmul %519, %491, %cst_88 {dimension_numbers = #tpu.dot_dimension_numbers<[1], [0], [0], [1], [0, 0, 1, 1], [], []>} : vector<8x32xbf16>, vector<32x128xbf16>, vector<8x128xf32> -> vector<8x128xf32>
    %521 = arith.addf %518, %520 : vector<8x128xf32>
    %522 = arith.negf %521 : vector<8x128xf32>
    %523 = math.exp %522 : vector<8x128xf32>
    %cst_89 = arith.constant 1.000000e+00 : f32
    %524 = vector.broadcast %cst_89 : f32 to vector<8x128xf32>
    %525 = arith.addf %524, %523 : vector<8x128xf32>
    %526 = arith.divf %524, %525 : vector<8x128xf32>
    %527 = math.tanh %521 : vector<8x128xf32>
    %528 = vector.extract_strided_slice %526 {offsets = [0, 0], sizes = [8, 32], strides = [1, 1]} : vector<8x128xf32> to vector<8x32xf32>
    %529 = vector.extract_strided_slice %526 {offsets = [0, 32], sizes = [8, 32], strides = [1, 1]} : vector<8x128xf32> to vector<8x32xf32>
    %530 = vector.extract_strided_slice %526 {offsets = [0, 96], sizes = [8, 32], strides = [1, 1]} : vector<8x128xf32> to vector<8x32xf32>
    %531 = vector.extract_strided_slice %527 {offsets = [0, 64], sizes = [8, 32], strides = [1, 1]} : vector<8x128xf32> to vector<8x32xf32>
    %532 = arith.mulf %529, %514 : vector<8x32xf32>
    %533 = arith.mulf %528, %531 : vector<8x32xf32>
    %534 = arith.addf %532, %533 : vector<8x32xf32>
    %535 = math.tanh %534 : vector<8x32xf32>
    %536 = arith.mulf %530, %535 : vector<8x32xf32>
    %537 = arith.addf %517, %536 : vector<8x32xf32>
    %538 = vector.extract_strided_slice %495 {offsets = [16, 0], sizes = [8, 128], strides = [1, 1]} : vector<64x128xf32> to vector<8x128xf32>
    %539 = arith.truncf %536 : vector<8x32xf32> to vector<8x32xbf16>
    %cst_90 = arith.constant dense<0.000000e+00> : vector<8x128xf32>
    %540 = tpu.matmul %539, %491, %cst_90 {dimension_numbers = #tpu.dot_dimension_numbers<[1], [0], [0], [1], [0, 0, 1, 1], [], []>} : vector<8x32xbf16>, vector<32x128xbf16>, vector<8x128xf32> -> vector<8x128xf32>
    %541 = arith.addf %538, %540 : vector<8x128xf32>
    %542 = arith.negf %541 : vector<8x128xf32>
    %543 = math.exp %542 : vector<8x128xf32>
    %cst_91 = arith.constant 1.000000e+00 : f32
    %544 = vector.broadcast %cst_91 : f32 to vector<8x128xf32>
    %545 = arith.addf %544, %543 : vector<8x128xf32>
    %546 = arith.divf %544, %545 : vector<8x128xf32>
    %547 = math.tanh %541 : vector<8x128xf32>
    %548 = vector.extract_strided_slice %546 {offsets = [0, 0], sizes = [8, 32], strides = [1, 1]} : vector<8x128xf32> to vector<8x32xf32>
    %549 = vector.extract_strided_slice %546 {offsets = [0, 32], sizes = [8, 32], strides = [1, 1]} : vector<8x128xf32> to vector<8x32xf32>
    %550 = vector.extract_strided_slice %546 {offsets = [0, 96], sizes = [8, 32], strides = [1, 1]} : vector<8x128xf32> to vector<8x32xf32>
    %551 = vector.extract_strided_slice %547 {offsets = [0, 64], sizes = [8, 32], strides = [1, 1]} : vector<8x128xf32> to vector<8x32xf32>
    %552 = arith.mulf %549, %534 : vector<8x32xf32>
    %553 = arith.mulf %548, %551 : vector<8x32xf32>
    %554 = arith.addf %552, %553 : vector<8x32xf32>
    %555 = math.tanh %554 : vector<8x32xf32>
    %556 = arith.mulf %550, %555 : vector<8x32xf32>
    %557 = arith.addf %537, %556 : vector<8x32xf32>
    %558 = vector.extract_strided_slice %495 {offsets = [24, 0], sizes = [8, 128], strides = [1, 1]} : vector<64x128xf32> to vector<8x128xf32>
    %559 = arith.truncf %556 : vector<8x32xf32> to vector<8x32xbf16>
    %cst_92 = arith.constant dense<0.000000e+00> : vector<8x128xf32>
    %560 = tpu.matmul %559, %491, %cst_92 {dimension_numbers = #tpu.dot_dimension_numbers<[1], [0], [0], [1], [0, 0, 1, 1], [], []>} : vector<8x32xbf16>, vector<32x128xbf16>, vector<8x128xf32> -> vector<8x128xf32>
    %561 = arith.addf %558, %560 : vector<8x128xf32>
    %562 = arith.negf %561 : vector<8x128xf32>
    %563 = math.exp %562 : vector<8x128xf32>
    %cst_93 = arith.constant 1.000000e+00 : f32
    %564 = vector.broadcast %cst_93 : f32 to vector<8x128xf32>
    %565 = arith.addf %564, %563 : vector<8x128xf32>
    %566 = arith.divf %564, %565 : vector<8x128xf32>
    %567 = math.tanh %561 : vector<8x128xf32>
    %568 = vector.extract_strided_slice %566 {offsets = [0, 0], sizes = [8, 32], strides = [1, 1]} : vector<8x128xf32> to vector<8x32xf32>
    %569 = vector.extract_strided_slice %566 {offsets = [0, 32], sizes = [8, 32], strides = [1, 1]} : vector<8x128xf32> to vector<8x32xf32>
    %570 = vector.extract_strided_slice %566 {offsets = [0, 96], sizes = [8, 32], strides = [1, 1]} : vector<8x128xf32> to vector<8x32xf32>
    %571 = vector.extract_strided_slice %567 {offsets = [0, 64], sizes = [8, 32], strides = [1, 1]} : vector<8x128xf32> to vector<8x32xf32>
    %572 = arith.mulf %569, %554 : vector<8x32xf32>
    %573 = arith.mulf %568, %571 : vector<8x32xf32>
    %574 = arith.addf %572, %573 : vector<8x32xf32>
    %575 = math.tanh %574 : vector<8x32xf32>
    %576 = arith.mulf %570, %575 : vector<8x32xf32>
    %577 = arith.addf %557, %576 : vector<8x32xf32>
    %578 = vector.extract_strided_slice %495 {offsets = [32, 0], sizes = [8, 128], strides = [1, 1]} : vector<64x128xf32> to vector<8x128xf32>
    %579 = arith.truncf %576 : vector<8x32xf32> to vector<8x32xbf16>
    %cst_94 = arith.constant dense<0.000000e+00> : vector<8x128xf32>
    %580 = tpu.matmul %579, %491, %cst_94 {dimension_numbers = #tpu.dot_dimension_numbers<[1], [0], [0], [1], [0, 0, 1, 1], [], []>} : vector<8x32xbf16>, vector<32x128xbf16>, vector<8x128xf32> -> vector<8x128xf32>
    %581 = arith.addf %578, %580 : vector<8x128xf32>
    %582 = arith.negf %581 : vector<8x128xf32>
    %583 = math.exp %582 : vector<8x128xf32>
    %cst_95 = arith.constant 1.000000e+00 : f32
    %584 = vector.broadcast %cst_95 : f32 to vector<8x128xf32>
    %585 = arith.addf %584, %583 : vector<8x128xf32>
    %586 = arith.divf %584, %585 : vector<8x128xf32>
    %587 = math.tanh %581 : vector<8x128xf32>
    %588 = vector.extract_strided_slice %586 {offsets = [0, 0], sizes = [8, 32], strides = [1, 1]} : vector<8x128xf32> to vector<8x32xf32>
    %589 = vector.extract_strided_slice %586 {offsets = [0, 32], sizes = [8, 32], strides = [1, 1]} : vector<8x128xf32> to vector<8x32xf32>
    %590 = vector.extract_strided_slice %586 {offsets = [0, 96], sizes = [8, 32], strides = [1, 1]} : vector<8x128xf32> to vector<8x32xf32>
    %591 = vector.extract_strided_slice %587 {offsets = [0, 64], sizes = [8, 32], strides = [1, 1]} : vector<8x128xf32> to vector<8x32xf32>
    %592 = arith.mulf %589, %574 : vector<8x32xf32>
    %593 = arith.mulf %588, %591 : vector<8x32xf32>
    %594 = arith.addf %592, %593 : vector<8x32xf32>
    %595 = math.tanh %594 : vector<8x32xf32>
    %596 = arith.mulf %590, %595 : vector<8x32xf32>
    %597 = arith.addf %577, %596 : vector<8x32xf32>
    %598 = vector.extract_strided_slice %495 {offsets = [40, 0], sizes = [8, 128], strides = [1, 1]} : vector<64x128xf32> to vector<8x128xf32>
    %599 = arith.truncf %596 : vector<8x32xf32> to vector<8x32xbf16>
    %cst_96 = arith.constant dense<0.000000e+00> : vector<8x128xf32>
    %600 = tpu.matmul %599, %491, %cst_96 {dimension_numbers = #tpu.dot_dimension_numbers<[1], [0], [0], [1], [0, 0, 1, 1], [], []>} : vector<8x32xbf16>, vector<32x128xbf16>, vector<8x128xf32> -> vector<8x128xf32>
    %601 = arith.addf %598, %600 : vector<8x128xf32>
    %602 = arith.negf %601 : vector<8x128xf32>
    %603 = math.exp %602 : vector<8x128xf32>
    %cst_97 = arith.constant 1.000000e+00 : f32
    %604 = vector.broadcast %cst_97 : f32 to vector<8x128xf32>
    %605 = arith.addf %604, %603 : vector<8x128xf32>
    %606 = arith.divf %604, %605 : vector<8x128xf32>
    %607 = math.tanh %601 : vector<8x128xf32>
    %608 = vector.extract_strided_slice %606 {offsets = [0, 0], sizes = [8, 32], strides = [1, 1]} : vector<8x128xf32> to vector<8x32xf32>
    %609 = vector.extract_strided_slice %606 {offsets = [0, 32], sizes = [8, 32], strides = [1, 1]} : vector<8x128xf32> to vector<8x32xf32>
    %610 = vector.extract_strided_slice %606 {offsets = [0, 96], sizes = [8, 32], strides = [1, 1]} : vector<8x128xf32> to vector<8x32xf32>
    %611 = vector.extract_strided_slice %607 {offsets = [0, 64], sizes = [8, 32], strides = [1, 1]} : vector<8x128xf32> to vector<8x32xf32>
    %612 = arith.mulf %609, %594 : vector<8x32xf32>
    %613 = arith.mulf %608, %611 : vector<8x32xf32>
    %614 = arith.addf %612, %613 : vector<8x32xf32>
    %615 = math.tanh %614 : vector<8x32xf32>
    %616 = arith.mulf %610, %615 : vector<8x32xf32>
    %617 = arith.addf %597, %616 : vector<8x32xf32>
    %618 = vector.extract_strided_slice %495 {offsets = [48, 0], sizes = [8, 128], strides = [1, 1]} : vector<64x128xf32> to vector<8x128xf32>
    %619 = arith.truncf %616 : vector<8x32xf32> to vector<8x32xbf16>
    %cst_98 = arith.constant dense<0.000000e+00> : vector<8x128xf32>
    %620 = tpu.matmul %619, %491, %cst_98 {dimension_numbers = #tpu.dot_dimension_numbers<[1], [0], [0], [1], [0, 0, 1, 1], [], []>} : vector<8x32xbf16>, vector<32x128xbf16>, vector<8x128xf32> -> vector<8x128xf32>
    %621 = arith.addf %618, %620 : vector<8x128xf32>
    %622 = arith.negf %621 : vector<8x128xf32>
    %623 = math.exp %622 : vector<8x128xf32>
    %cst_99 = arith.constant 1.000000e+00 : f32
    %624 = vector.broadcast %cst_99 : f32 to vector<8x128xf32>
    %625 = arith.addf %624, %623 : vector<8x128xf32>
    %626 = arith.divf %624, %625 : vector<8x128xf32>
    %627 = math.tanh %621 : vector<8x128xf32>
    %628 = vector.extract_strided_slice %626 {offsets = [0, 0], sizes = [8, 32], strides = [1, 1]} : vector<8x128xf32> to vector<8x32xf32>
    %629 = vector.extract_strided_slice %626 {offsets = [0, 32], sizes = [8, 32], strides = [1, 1]} : vector<8x128xf32> to vector<8x32xf32>
    %630 = vector.extract_strided_slice %626 {offsets = [0, 96], sizes = [8, 32], strides = [1, 1]} : vector<8x128xf32> to vector<8x32xf32>
    %631 = vector.extract_strided_slice %627 {offsets = [0, 64], sizes = [8, 32], strides = [1, 1]} : vector<8x128xf32> to vector<8x32xf32>
    %632 = arith.mulf %629, %614 : vector<8x32xf32>
    %633 = arith.mulf %628, %631 : vector<8x32xf32>
    %634 = arith.addf %632, %633 : vector<8x32xf32>
    %635 = math.tanh %634 : vector<8x32xf32>
    %636 = arith.mulf %630, %635 : vector<8x32xf32>
    %637 = arith.addf %617, %636 : vector<8x32xf32>
    %638 = vector.extract_strided_slice %495 {offsets = [56, 0], sizes = [8, 128], strides = [1, 1]} : vector<64x128xf32> to vector<8x128xf32>
    %639 = arith.truncf %636 : vector<8x32xf32> to vector<8x32xbf16>
    %cst_100 = arith.constant dense<0.000000e+00> : vector<8x128xf32>
    %640 = tpu.matmul %639, %491, %cst_100 {dimension_numbers = #tpu.dot_dimension_numbers<[1], [0], [0], [1], [0, 0, 1, 1], [], []>} : vector<8x32xbf16>, vector<32x128xbf16>, vector<8x128xf32> -> vector<8x128xf32>
    %641 = arith.addf %638, %640 : vector<8x128xf32>
    %642 = arith.negf %641 : vector<8x128xf32>
    %643 = math.exp %642 : vector<8x128xf32>
    %cst_101 = arith.constant 1.000000e+00 : f32
    %644 = vector.broadcast %cst_101 : f32 to vector<8x128xf32>
    %645 = arith.addf %644, %643 : vector<8x128xf32>
    %646 = arith.divf %644, %645 : vector<8x128xf32>
    %647 = math.tanh %641 : vector<8x128xf32>
    %648 = vector.extract_strided_slice %646 {offsets = [0, 0], sizes = [8, 32], strides = [1, 1]} : vector<8x128xf32> to vector<8x32xf32>
    %649 = vector.extract_strided_slice %646 {offsets = [0, 32], sizes = [8, 32], strides = [1, 1]} : vector<8x128xf32> to vector<8x32xf32>
    %650 = vector.extract_strided_slice %646 {offsets = [0, 96], sizes = [8, 32], strides = [1, 1]} : vector<8x128xf32> to vector<8x32xf32>
    %651 = vector.extract_strided_slice %647 {offsets = [0, 64], sizes = [8, 32], strides = [1, 1]} : vector<8x128xf32> to vector<8x32xf32>
    %652 = arith.mulf %649, %634 : vector<8x32xf32>
    %653 = arith.mulf %648, %651 : vector<8x32xf32>
    %654 = arith.addf %652, %653 : vector<8x32xf32>
    %655 = math.tanh %654 : vector<8x32xf32>
    %656 = arith.mulf %650, %655 : vector<8x32xf32>
    %657 = arith.addf %637, %656 : vector<8x32xf32>
    %cst_102 = arith.constant 1.250000e-01 : f32
    %658 = vector.broadcast %cst_102 : f32 to vector<8x32xf32>
    %659 = arith.mulf %657, %658 : vector<8x32xf32>
    %c0_103 = arith.constant 0 : index
    %c0_104 = arith.constant 0 : index
    %660 = vector.load %arg14[%c0_103, %c0_104] : memref<32x4xf32, #tpu.memory_space<vmem>>, vector<32x4xf32>
    %cst_105 = arith.constant dense<0.000000e+00> : vector<8x4xf32>
    %661 = tpu.matmul %659, %660, %cst_105 {dimension_numbers = #tpu.dot_dimension_numbers<[1], [0], [0], [1], [0, 0, 1, 1], [], []>} : vector<8x32xf32>, vector<32x4xf32>, vector<8x4xf32> -> vector<8x4xf32>
    %c0_106 = arith.constant 0 : index
    %c0_107 = arith.constant 0 : index
    %662 = vector.load %arg15[%c0_106, %c0_107] : memref<1x4xf32, #tpu.memory_space<vmem>>, vector<1x4xf32>
    %663 = vector.broadcast %662 : vector<1x4xf32> to vector<8x4xf32>
    %664 = arith.addf %661, %663 : vector<8x4xf32>
    %c0_108 = arith.constant 0 : index
    %c0_109 = arith.constant 0 : index
    %665 = vector.load %arg16[%c0_108, %c0_109] : memref<8x4xf32, #tpu.memory_space<vmem>>, vector<8x4xf32>
    tpu.vector_store %arg16[%c0_108, %c0_109], %664 {strides = array<i32>} : memref<8x4xf32, #tpu.memory_space<vmem>>, vector<8x4xf32>,
    return
  }
  func.func @transform_0(%arg0: i32) -> (i32, i32, i32) {
    %c0_i32 = arith.constant 0 : i32
    %c0_i32_0 = arith.constant 0 : i32
    %c0_i32_1 = arith.constant 0 : i32
    return %c0_i32, %arg0, %c0_i32_0 : i32, i32, i32
  }
  func.func @transform_1(%arg0: i32) -> (i32, i32) {
    %c0_i32 = arith.constant 0 : i32
    %c0_i32_0 = arith.constant 0 : i32
    %c0_i32_1 = arith.constant 0 : i32
    return %c0_i32, %c0_i32_0 : i32, i32
  }
  func.func @transform_2(%arg0: i32) -> (i32, i32) {
    %c0_i32 = arith.constant 0 : i32
    %c0_i32_0 = arith.constant 0 : i32
    %c0_i32_1 = arith.constant 0 : i32
    return %c0_i32, %c0_i32_0 : i32, i32
  }
  func.func @transform_3(%arg0: i32) -> (i32, i32) {
    %c0_i32 = arith.constant 0 : i32
    %c0_i32_0 = arith.constant 0 : i32
    %c0_i32_1 = arith.constant 0 : i32
    return %c0_i32, %c0_i32_0 : i32, i32
  }
  func.func @transform_4(%arg0: i32) -> (i32, i32) {
    %c0_i32 = arith.constant 0 : i32
    %c0_i32_0 = arith.constant 0 : i32
    %c0_i32_1 = arith.constant 0 : i32
    return %c0_i32, %c0_i32_0 : i32, i32
  }
  func.func @transform_5(%arg0: i32) -> (i32, i32) {
    %c0_i32 = arith.constant 0 : i32
    %c0_i32_0 = arith.constant 0 : i32
    %c0_i32_1 = arith.constant 0 : i32
    return %c0_i32, %c0_i32_0 : i32, i32
  }
  func.func @transform_6(%arg0: i32) -> (i32, i32) {
    %c0_i32 = arith.constant 0 : i32
    %c0_i32_0 = arith.constant 0 : i32
    %c0_i32_1 = arith.constant 0 : i32
    return %c0_i32, %c0_i32_0 : i32, i32
  }
  func.func @transform_7(%arg0: i32) -> (i32, i32) {
    %c0_i32 = arith.constant 0 : i32
    %c0_i32_0 = arith.constant 0 : i32
    %c0_i32_1 = arith.constant 0 : i32
    return %c0_i32, %c0_i32_0 : i32, i32
  }
  func.func @transform_8(%arg0: i32) -> (i32, i32) {
    %c0_i32 = arith.constant 0 : i32
    %c0_i32_0 = arith.constant 0 : i32
    %c0_i32_1 = arith.constant 0 : i32
    return %c0_i32, %c0_i32_0 : i32, i32
  }
  func.func @transform_9(%arg0: i32) -> (i32, i32) {
    %c0_i32 = arith.constant 0 : i32
    %c0_i32_0 = arith.constant 0 : i32
    %c0_i32_1 = arith.constant 0 : i32
    return %c0_i32, %c0_i32_0 : i32, i32
  }
  func.func @transform_10(%arg0: i32) -> (i32, i32) {
    %c0_i32 = arith.constant 0 : i32
    %c0_i32_0 = arith.constant 0 : i32
    %c0_i32_1 = arith.constant 0 : i32
    return %c0_i32, %c0_i32_0 : i32, i32
  }
  func.func @transform_11(%arg0: i32) -> (i32, i32) {
    %c0_i32 = arith.constant 0 : i32
    %c0_i32_0 = arith.constant 0 : i32
    %c0_i32_1 = arith.constant 0 : i32
    return %c0_i32, %c0_i32_0 : i32, i32
  }
  func.func @transform_12(%arg0: i32) -> (i32, i32) {
    %c0_i32 = arith.constant 0 : i32
    %c0_i32_0 = arith.constant 0 : i32
    %c0_i32_1 = arith.constant 0 : i32
    return %c0_i32, %c0_i32_0 : i32, i32
  }
  func.func @transform_13(%arg0: i32) -> (i32, i32) {
    %c0_i32 = arith.constant 0 : i32
    %c0_i32_0 = arith.constant 0 : i32
    %c0_i32_1 = arith.constant 0 : i32
    return %c0_i32, %c0_i32_0 : i32, i32
  }
  func.func @transform_14(%arg0: i32) -> (i32, i32) {
    %c0_i32 = arith.constant 0 : i32
    %c0_i32_0 = arith.constant 0 : i32
    %c0_i32_1 = arith.constant 0 : i32
    return %c0_i32, %c0_i32_0 : i32, i32
  }
  func.func @transform_15(%arg0: i32) -> (i32, i32) {
    %c0_i32 = arith.constant 0 : i32
    %c0_i32_0 = arith.constant 0 : i32
    return %arg0, %c0_i32 : i32, i32
  }
}

</mosaic_0001>

<llo_original>
// kernel: tpu_custom_call.1
$region0: #{tpu_custom_call.1}
  #allocation0 [shape = 'u32[]', space=smem, size = 0x4, offset = 0x4, fixed_abs, tag = 'smem constant byte address 0x4 - core index']
  #allocation1 [shape = 'u32[72,128]{1,0:T(1,128)}', space=vmem, size = 0x9000, scoped, tag = 'internal scratch']
  %s0 = inlined_call_operand.hbm [shape: f32[8,8,8], index: 0, kind: input, shape index: {}]
  %s1 = inlined_call_operand.vmem [shape: bf16[8,128], index: 1, kind: input, shape index: {}]
  %s2 = inlined_call_operand.vmem [shape: bf16[32,128], index: 2, kind: input, shape index: {}]
  %s3 = inlined_call_operand.vmem [shape: f32[1,128], index: 3, kind: input, shape index: {}]
  %s4 = inlined_call_operand.vmem [shape: bf16[32,128], index: 4, kind: input, shape index: {}]
  %s5 = inlined_call_operand.hbm [shape: bf16[32,128], index: 5, kind: input, shape index: {}]
  %s6 = inlined_call_operand.vmem [shape: f32[1,128], index: 6, kind: input, shape index: {}]
  %s7 = inlined_call_operand.hbm [shape: bf16[32,128], index: 7, kind: input, shape index: {}]
  %s8 = inlined_call_operand.hbm [shape: bf16[32,128], index: 8, kind: input, shape index: {}]
  %s9 = inlined_call_operand.vmem [shape: f32[1,128], index: 9, kind: input, shape index: {}]
  %s10 = inlined_call_operand.hbm [shape: bf16[32,128], index: 10, kind: input, shape index: {}]
  %s11 = inlined_call_operand.hbm [shape: bf16[32,128], index: 11, kind: input, shape index: {}]
  %s12 = inlined_call_operand.vmem [shape: f32[1,128], index: 12, kind: input, shape index: {}]
  %s13 = inlined_call_operand.vmem [shape: f32[32,4], index: 13, kind: input, shape index: {}]
  %s14 = inlined_call_operand.vmem [shape: f32[1,4], index: 14, kind: input, shape index: {}]
  %s15 = inlined_call_operand.vmem [shape: f32[8,4], index: 15, kind: output, shape index: {}]
  %s16 = sld [smem:[#allocation0]]
  $region94: #{tpu_custom_call.1} parent=0
    _
  %s18 = ssub.s32 1, %s16
  %s19 = scalar_select 0, %s18, %s16
  $region1: #{tpu_custom_call.1} parent=0
    #allocation2 [shape = 'u8[32768]{0}', space=vmem, size = 0x8000, scoped, tag = 'input window, operand 0, single buffered']
    #allocation3 [shape = 's32[1]{0}', space=sflag, size = 0x4, scoped, tag = 'scoped memory for tpu_custom_call.1']
    #allocation4 [shape = 'u8[8192]{0}', space=vmem, size = 0x2000, scoped, tag = 'input window, operand 5, single buffered']
    #allocation5 [shape = 's32[1]{0}', space=sflag, size = 0x4, scoped, tag = 'scoped memory for tpu_custom_call.1']
    #allocation6 [shape = 'u8[8192]{0}', space=vmem, size = 0x2000, scoped, tag = 'input window, operand 7, single buffered']
    #allocation7 [shape = 'u8[8192]{0}', space=vmem, size = 0x2000, scoped, tag = 'input window, operand 8, single buffered']
    #allocation8 [shape = 's32[1]{0}', space=sflag, size = 0x4, scoped, tag = 'scoped memory for tpu_custom_call.1']
    #allocation9 [shape = 'u8[8192]{0}', space=vmem, size = 0x2000, scoped, tag = 'input window, operand 10, single buffered']
    #allocation10 [shape = 'u8[8192]{0}', space=vmem, size = 0x2000, scoped, tag = 'input window, operand 11, single buffered']
    #allocation11 [shape = 's32[1]{0}', space=sflag, size = 0x4, scoped, tag = 'scoped memory for tpu_custom_call.1']
    %20 = vsyncpa [#allocation3], 0
    %21 = vsyncpa [#allocation5], 0
    %22 = vsyncpa [#allocation8], 0
    %23 = vsyncpa [#allocation11], 0
    // Predicated region
    $region2: #{tpu_custom_call.1} parent=1 // pred_check
      _
    $region3: #{tpu_custom_call.1} parent=1 // pred_check_branch
      %25 = sbr.rel (0) target = $region5
    $region4: #{tpu_custom_call.1} parent=1 // pred_region
      %27 = vsyncadd [#allocation3], 0
      %s28 = sshll.u32 %s0, 4
      %s29 = int_to_ptr.hbm [resolvable:$true] %s28
      %s30 = sshll.u32 [#allocation2], 4
      %s31 = int_to_ptr.vmem [resolvable:$true] %s30
      %36 = dma.hbm_to_vmem [thread:$0]  %s29, 1024, %s31, [#allocation3], 128, 128, 8
    $region5: #{tpu_custom_call.1} parent=1 // pred_fallthru
      _
    // Predicated region
    $region6: #{tpu_custom_call.1} parent=1 // pred_check
      _
    $region7: #{tpu_custom_call.1} parent=1 // pred_check_branch
      %38 = sbr.rel (0) target = $region9
    $region8: #{tpu_custom_call.1} parent=1 // pred_region
      _
    $region9: #{tpu_custom_call.1} parent=1 // pred_fallthru
      _
    // Predicated region
    $region10: #{tpu_custom_call.1} parent=1 // pred_check
      _
    $region11: #{tpu_custom_call.1} parent=1 // pred_check_branch
      %40 = sbr.rel (0) target = $region13
    $region12: #{tpu_custom_call.1} parent=1 // pred_region
      _
    $region13: #{tpu_custom_call.1} parent=1 // pred_fallthru
      _
    // Predicated region
    $region14: #{tpu_custom_call.1} parent=1 // pred_check
      _
    $region15: #{tpu_custom_call.1} parent=1 // pred_check_branch
      %42 = sbr.rel (0) target = $region17
    $region16: #{tpu_custom_call.1} parent=1 // pred_region
      _
    $region17: #{tpu_custom_call.1} parent=1 // pred_fallthru
      _
    // Predicated region
    $region18: #{tpu_custom_call.1} parent=1 // pred_check
      _
    $region19: #{tpu_custom_call.1} parent=1 // pred_check_branch
      %44 = sbr.rel (0) target = $region21
    $region20: #{tpu_custom_call.1} parent=1 // pred_region
      _
    $region21: #{tpu_custom_call.1} parent=1 // pred_fallthru
      _
    // Predicated region
    $region22: #{tpu_custom_call.1} parent=1 // pred_check
      _
    $region23: #{tpu_custom_call.1} parent=1 // pred_check_branch
      %46 = sbr.rel (0) target = $region25
    $region24: #{tpu_custom_call.1} parent=1 // pred_region
      %48 = vsyncadd [#allocation5], 0
      %s49 = sshll.u32 %s5, 4
      %s50 = int_to_ptr.hbm [resolvable:$true] %s49
      %s51 = sshll.u32 [#allocation4], 4
      %s52 = int_to_ptr.vmem [resolvable:$true] %s51
      %57 = dma.hbm_to_vmem [thread:$0]  %s50, 256, %s52, [#allocation5], 64, 64, 4
    $region25: #{tpu_custom_call.1} parent=1 // pred_fallthru
      _
    // Predicated region
    $region26: #{tpu_custom_call.1} parent=1 // pred_check
      _
    $region27: #{tpu_custom_call.1} parent=1 // pred_check_branch
      %59 = sbr.rel (0) target = $region29
    $region28: #{tpu_custom_call.1} parent=1 // pred_region
      _
    $region29: #{tpu_custom_call.1} parent=1 // pred_fallthru
      _
    // Predicated region
    $region30: #{tpu_custom_call.1} parent=1 // pred_check
      _
    $region31: #{tpu_custom_call.1} parent=1 // pred_check_branch
      %61 = sbr.rel (0) target = $region33
    $region32: #{tpu_custom_call.1} parent=1 // pred_region
      %63 = vsyncadd [#allocation5], 0
      %s64 = sshll.u32 %s7, 4
      %s65 = int_to_ptr.hbm [resolvable:$true] %s64
      %s66 = sshll.u32 [#allocation6], 4
      %s67 = int_to_ptr.vmem [resolvable:$true] %s66
      %72 = dma.hbm_to_vmem [thread:$0]  %s65, 256, %s67, [#allocation5], 64, 64, 4
    $region33: #{tpu_custom_call.1} parent=1 // pred_fallthru
      _
    // Predicated region
    $region34: #{tpu_custom_call.1} parent=1 // pred_check
      _
    $region35: #{tpu_custom_call.1} parent=1 // pred_check_branch
      %74 = sbr.rel (0) target = $region37
    $region36: #{tpu_custom_call.1} parent=1 // pred_region
      %76 = vsyncadd [#allocation8], 0
      %s77 = sshll.u32 %s8, 4
      %s78 = int_to_ptr.hbm [resolvable:$true] %s77
      %s79 = sshll.u32 [#allocation7], 4
      %s80 = int_to_ptr.vmem [resolvable:$true] %s79
      %85 = dma.hbm_to_vmem [thread:$0]  %s78, 256, %s80, [#allocation8], 64, 64, 4
    $region37: #{tpu_custom_call.1} parent=1 // pred_fallthru
      _
    // Predicated region
    $region38: #{tpu_custom_call.1} parent=1 // pred_check
      _
    $region39: #{tpu_custom_call.1} parent=1 // pred_check_branch
      %87 = sbr.rel (0) target = $region41
    $region40: #{tpu_custom_call.1} parent=1 // pred_region
      _
    $region41: #{tpu_custom_call.1} parent=1 // pred_fallthru
      _
    // Predicated region
    $region42: #{tpu_custom_call.1} parent=1 // pred_check
      _
    $region43: #{tpu_custom_call.1} parent=1 // pred_check_branch
      %89 = sbr.rel (0) target = $region45
    $region44: #{tpu_custom_call.1} parent=1 // pred_region
      %91 = vsyncadd [#allocation8], 0
      %s92 = sshll.u32 %s10, 4
      %s93 = int_to_ptr.hbm [resolvable:$true] %s92
      %s94 = sshll.u32 [#allocation9], 4
      %s95 = int_to_ptr.vmem [resolvable:$true] %s94
      %100 = dma.hbm_to_vmem [thread:$0]  %s93, 256, %s95, [#allocation8], 64, 64, 4
    $region45: #{tpu_custom_call.1} parent=1 // pred_fallthru
      _
    // Predicated region
    $region46: #{tpu_custom_call.1} parent=1 // pred_check
      _
    $region47: #{tpu_custom_call.1} parent=1 // pred_check_branch
      %102 = sbr.rel (0) target = $region49
    $region48: #{tpu_custom_call.1} parent=1 // pred_region
      %104 = vsyncadd [#allocation11], 0
      %s105 = sshll.u32 %s11, 4
      %s106 = int_to_ptr.hbm [resolvable:$true] %s105
      %s107 = sshll.u32 [#allocation10], 4
      %s108 = int_to_ptr.vmem [resolvable:$true] %s107
      %113 = dma.hbm_to_vmem [thread:$0]  %s106, 256, %s108, [#allocation11], 64, 64, 4
    $region49: #{tpu_custom_call.1} parent=1 // pred_fallthru
      _
    // Predicated region
    $region50: #{tpu_custom_call.1} parent=1 // pred_check
      _
    $region51: #{tpu_custom_call.1} parent=1 // pred_check_branch
      %115 = sbr.rel (0) target = $region53
    $region52: #{tpu_custom_call.1} parent=1 // pred_region
      _
    $region53: #{tpu_custom_call.1} parent=1 // pred_fallthru
      _
    // Predicated region
    $region54: #{tpu_custom_call.1} parent=1 // pred_check
      _
    $region55: #{tpu_custom_call.1} parent=1 // pred_check_branch
      %117 = sbr.rel (0) target = $region57
    $region56: #{tpu_custom_call.1} parent=1 // pred_region
      _
    $region57: #{tpu_custom_call.1} parent=1 // pred_fallthru
      _
    // Predicated region
    $region58: #{tpu_custom_call.1} parent=1 // pred_check
      _
    $region59: #{tpu_custom_call.1} parent=1 // pred_check_branch
      %119 = sbr.rel (0) target = $region61
    $region60: #{tpu_custom_call.1} parent=1 // pred_region
      _
    $region61: #{tpu_custom_call.1} parent=1 // pred_fallthru
      _
    // Predicated region
    $region62: #{tpu_custom_call.1} parent=1 // pred_check
      _
    $region63: #{tpu_custom_call.1} parent=1 // pred_check_branch
      %121 = sbr.rel (0) target = $region65
    $region64: #{tpu_custom_call.1} parent=1 // pred_region
      %123 = dma.done [#allocation3], 1024
    $region65: #{tpu_custom_call.1} parent=1 // pred_fallthru
      _
    // Predicated region
    $region66: #{tpu_custom_call.1} parent=1 // pred_check
      _
    $region67: #{tpu_custom_call.1} parent=1 // pred_check_branch
      %125 = sbr.rel (0) target = $region69
    $region68: #{tpu_custom_call.1} parent=1 // pred_region
      %127 = dma.done [#allocation5], 256
    $region69: #{tpu_custom_call.1} parent=1 // pred_fallthru
      _
    // Predicated region
    $region70: #{tpu_custom_call.1} parent=1 // pred_check
      _
    $region71: #{tpu_custom_call.1} parent=1 // pred_check_branch
      %129 = sbr.rel (0) target = $region73
    $region72: #{tpu_custom_call.1} parent=1 // pred_region
      %131 = dma.done [#allocation5], 256
    $region73: #{tpu_custom_call.1} parent=1 // pred_fallthru
      _
    // Predicated region
    $region74: #{tpu_custom_call.1} parent=1 // pred_check
      _
    $region75: #{tpu_custom_call.1} parent=1 // pred_check_branch
      %133 = sbr.rel (0) target = $region77
    $region76: #{tpu_custom_call.1} parent=1 // pred_region
      %135 = dma.done [#allocation8], 256
    $region77: #{tpu_custom_call.1} parent=1 // pred_fallthru
      _
    // Predicated region
    $region78: #{tpu_custom_call.1} parent=1 // pred_check
      _
    $region79: #{tpu_custom_call.1} parent=1 // pred_check_branch
      %137 = sbr.rel (0) target = $region81
    $region80: #{tpu_custom_call.1} parent=1 // pred_region
      %139 = dma.done [#allocation8], 256
    $region81: #{tpu_custom_call.1} parent=1 // pred_fallthru
      _
    // Predicated region
    $region82: #{tpu_custom_call.1} parent=1 // pred_check
      _
    $region83: #{tpu_custom_call.1} parent=1 // pred_check_branch
      %141 = sbr.rel (0) target = $region85
    $region84: #{tpu_custom_call.1} parent=1 // pred_region
      %143 = dma.done [#allocation11], 256
    $region85: #{tpu_custom_call.1} parent=1 // pred_fallthru
      _
    %v145 = vld [vmem:[#allocation2] sm:$0xff]
    %v146 = vld [vmem:[#allocation2 + $0x8] sm:$0xff]
    %v147 = vld [vmem:[#allocation2 + $0x10] sm:$0xff]
    %v148 = vld [vmem:[#allocation2 + $0x18] sm:$0xff]
    %v149 = vld [vmem:[#allocation2 + $0x20] sm:$0xff]
    %v150 = vld [vmem:[#allocation2 + $0x28] sm:$0xff]
    %v151 = vld [vmem:[#allocation2 + $0x30] sm:$0xff]
    %v152 = vld [vmem:[#allocation2 + $0x38] sm:$0xff]
    %v153 = vpack.c.bf16 %v146, %v145
    %v154 = vpack.c.bf16 %v148, %v147
    %v155 = vpack.c.bf16 %v150, %v149
    %v156 = vpack.c.bf16 %v152, %v151
    %v157 = vld [vmem:[%s1] sm:$0xf]
    %v158 = vld [vmem:[%s2] sm:$0xf]
    %v159 = vld [vmem:[%s2 + $0x4] sm:$0xf]
    %v160 = vld [vmem:[%s2 + $0x8] sm:$0xf]
    %v161 = vld [vmem:[%s2 + $0xc] sm:$0xf]
    %v162 = vld [vmem:[%s3] sm:$0x1]
    %v164 = vperm.slane %v162, 0
    %vm166 = vcmask 64512
    %v168 = vsel %vm166, %v153, 0
    %v171 = vsel %vm166, %v154, 0
    %v174 = vsel %vm166, %v155, 0
    %v177 = vsel %vm166, %v156, 0
    %vm179 = vcmask 1043456
    %v181 = vsel %vm179, %v157, 0
    %183 = vmatpush.bf16.msra.mxu0 0
    %184 = vmatpush.bf16.msra.mxu0 0
    %185 = vmatpush.bf16.msra.mxu0 0
    %186 = vmatpush.bf16.msra.mxu0 0
    %187 = vmatpush.bf16.msra.mxu0 0
    %188 = vmatpush.bf16.msra.mxu0 0
    %189 = vmatpush.bf16.msra.mxu0 0
    %190 = vmatpush.bf16.msra.mxu0 %v181
    %191 = vmatmul.bf16.gmra.mxu0 %v168
    %v192 = vpop.f32.mrf.mxu0
    %v193 = vadd.f32 %v164, %v192
    %v194 = vpop.f32.mrf.mxu0
    %v195 = vadd.f32 %v164, %v194
    %196 = vmatmul.bf16.gmra.mxu0 %v171
    %v197 = vpop.f32.mrf.mxu0
    %v198 = vadd.f32 %v164, %v197
    %v199 = vpop.f32.mrf.mxu0
    %v200 = vadd.f32 %v164, %v199
    %201 = vmatmul.bf16.gmra.mxu0 %v174
    %v202 = vpop.f32.mrf.mxu0
    %v203 = vadd.f32 %v164, %v202
    %v204 = vpop.f32.mrf.mxu0
    %v205 = vadd.f32 %v164, %v204
    %206 = vmatmul.bf16.gmra.mxu0 %v177
    %v207 = vpop.f32.mrf.mxu0
    %v208 = vadd.f32 %v164, %v207
    %v209 = vpop.f32.mrf.mxu0
    %v210 = vadd.f32 %v164, %v209
    %211 = vdwg.mxu0
    %v216 = vunpack.c.l.b16 %v158
    %v217 = vunpack.c.l.b16 %v159
    %v218 = vunpack.c.l.b16 %v160
    %v219 = vunpack.c.l.b16 %v161
    %v220 = vpack.c.b16 %v217, %v216
    %v221 = vpack.c.b16 %v219, %v218
    %vm224 = vcmask 261120
    %v226 = vsel %vm224, 0, 0
    %228 = vmatpush.bf16.msra.mxu0 0
    %229 = vmatpush.bf16.msra.mxu0 0
    %230 = vmatpush.bf16.msra.mxu0 0
    %231 = vmatpush.bf16.msra.mxu0 0
    %232 = vmatpush.bf16.msra.mxu0 0
    %233 = vmatpush.bf16.msra.mxu0 0
    %234 = vmatpush.bf16.msra.mxu0 %v221
    %235 = vmatpush.bf16.msra.mxu0 %v220
    %236 = vmatmul.bf16.gmra.mxu0 %v226
    %v237 = vpop.f32.mrf.mxu0
    %v238 = vadd.f32 0.0, %v237
    %v239 = vpop.f32.mrf.mxu0
    %240 = vdwg.mxu0
    %v241 = vadd.f32 %v193, %v238
    %v242 = vxor.u32 %v241, 2147483648
    %v243 = vmul.f32 %v242, 1.442695
    %v244 = vpow.pop %v243
    %v245 = vadd.f32 %v244, 1.0
    %v246 = vrcp.pop %v245
    %v247 = vmul.f32 %v245, %v246
    %v248 = vsub.f32 1.0, %v247
    %v249 = vmul.f32 %v246, %v248
    %v250 = vadd.f32 %v246, %v249
    %vm251 = vweird.f32 %v245
    %vm252 = vweird.f32 %v246
    %vm253 = vmor %vm251, %vm252
    %v254 = vsel %vm253, %v246, %v250
    %v255 = vand.u32 2147483647, %v245
    %vm256 = vcmp.eq.f32.partialorder %v255, 8.507059e+37
    %v257 = vand.u32 %v245, 2147483648
    %v258 = vor.u32 1.1754944e-38, %v257
    %v259 = vsel %vm256, %v258, %v254
    %v260 = vmul.f32 1.0, %v259
    %v261 = vtanh.pop %v241
    %v262 = vmul.f32 %v260, 0.0
    %264 = vrot.lane.b32.xlu0 %v261, 64
    %v265 = vpop.permute.xlu0 %264
    %v267 = vmul.f32 %v260, %v265
    %269 = vrot.lane.b32.xlu0 %v267, 32
    %v270 = vpop.permute.xlu0 %269
    %v272 = vadd.f32 %v262, %v270
    %v273 = vtanh.pop %v272
    %275 = vrot.lane.b32.xlu0 %v273, 64
    %v276 = vpop.permute.xlu0 %275
    %v278 = vmul.f32 %v260, %v276
    %v279 = vpack.c.bf16 %v278, %v278
    %281 = vrot.lane.b32.xlu0 %v279, 32
    %v282 = vpop.permute.xlu0 %281
    %v284 = vsel %vm224, %v282, 0
    %286 = vmatpush.bf16.msra.mxu0 0
    %287 = vmatpush.bf16.msra.mxu0 0
    %288 = vmatpush.bf16.msra.mxu0 0
    %289 = vmatpush.bf16.msra.mxu0 0
    %290 = vmatpush.bf16.msra.mxu0 0
    %291 = vmatpush.bf16.msra.mxu0 0
    %292 = vmatpush.bf16.msra.mxu0 %v221
    %293 = vmatpush.bf16.msra.mxu0 %v220
    %294 = vmatmul.bf16.gmra.mxu0 %v284
    %v295 = vpop.f32.mrf.mxu0
    %v296 = vadd.f32 0.0, %v295
    %v297 = vpop.f32.mrf.mxu0
    %298 = vdwg.mxu0
    %v299 = vadd.f32 %v195, %v296
    %v300 = vxor.u32 %v299, 2147483648
    %v301 = vmul.f32 %v300, 1.442695
    %v302 = vpow.pop %v301
    %v303 = vadd.f32 %v302, 1.0
    %v304 = vrcp.pop %v303
    %v305 = vmul.f32 %v303, %v304
    %v306 = vsub.f32 1.0, %v305
    %v307 = vmul.f32 %v304, %v306
    %v308 = vadd.f32 %v304, %v307
    %vm309 = vweird.f32 %v303
    %vm310 = vweird.f32 %v304
    %vm311 = vmor %vm309, %vm310
    %v312 = vsel %vm311, %v304, %v308
    %v313 = vand.u32 2147483647, %v303
    %vm314 = vcmp.eq.f32.partialorder %v313, 8.507059e+37
    %v315 = vand.u32 %v303, 2147483648
    %v316 = vor.u32 1.1754944e-38, %v315
    %v317 = vsel %vm314, %v316, %v312
    %v318 = vmul.f32 1.0, %v317
    %v319 = vtanh.pop %v299
    %v320 = vmul.f32 %v318, %v272
    %322 = vrot.lane.b32.xlu0 %v319, 64
    %v323 = vpop.permute.xlu0 %322
    %v325 = vmul.f32 %v318, %v323
    %327 = vrot.lane.b32.xlu0 %v325, 32
    %v328 = vpop.permute.xlu0 %327
    %v330 = vadd.f32 %v320, %v328
    %v331 = vtanh.pop %v330
    %333 = vrot.lane.b32.xlu0 %v331, 64
    %v334 = vpop.permute.xlu0 %333
    %v336 = vmul.f32 %v318, %v334
    %v337 = vpack.c.bf16 %v336, %v336
    %339 = vrot.lane.b32.xlu0 %v337, 32
    %v340 = vpop.permute.xlu0 %339
    %v342 = vsel %vm224, %v340, 0
    %344 = vmatpush.bf16.msra.mxu0 0
    %345 = vmatpush.bf16.msra.mxu0 0
    %346 = vmatpush.bf16.msra.mxu0 0
    %347 = vmatpush.bf16.msra.mxu0 0
    %348 = vmatpush.bf16.msra.mxu0 0
    %349 = vmatpush.bf16.msra.mxu0 0
    %350 = vmatpush.bf16.msra.mxu0 %v221
    %351 = vmatpush.bf16.msra.mxu0 %v220
    %352 = vmatmul.bf16.gmra.mxu0 %v342
    %v353 = vpop.f32.mrf.mxu0
    %v354 = vadd.f32 0.0, %v353
    %v355 = vpop.f32.mrf.mxu0
    %356 = vdwg.mxu0
    %v357 = vadd.f32 %v198, %v354
    %v358 = vxor.u32 %v357, 2147483648
    %v359 = vmul.f32 %v358, 1.442695
    %v360 = vpow.pop %v359
    %v361 = vadd.f32 %v360, 1.0
    %v362 = vrcp.pop %v361
    %v363 = vmul.f32 %v361, %v362
    %v364 = vsub.f32 1.0, %v363
    %v365 = vmul.f32 %v362, %v364
    %v366 = vadd.f32 %v362, %v365
    %vm367 = vweird.f32 %v361
    %vm368 = vweird.f32 %v362
    %vm369 = vmor %vm367, %vm368
    %v370 = vsel %vm369, %v362, %v366
    %v371 = vand.u32 2147483647, %v361
    %vm372 = vcmp.eq.f32.partialorder %v371, 8.507059e+37
    %v373 = vand.u32 %v361, 2147483648
    %v374 = vor.u32 1.1754944e-38, %v373
    %v375 = vsel %vm372, %v374, %v370
    %v376 = vmul.f32 1.0, %v375
    %v377 = vtanh.pop %v357
    %v378 = vmul.f32 %v376, %v330
    %380 = vrot.lane.b32.xlu0 %v377, 64
    %v381 = vpop.permute.xlu0 %380
    %v383 = vmul.f32 %v376, %v381
    %385 = vrot.lane.b32.xlu0 %v383, 32
    %v386 = vpop.permute.xlu0 %385
    %v388 = vadd.f32 %v378, %v386
    %v389 = vtanh.pop %v388
    %391 = vrot.lane.b32.xlu0 %v389, 64
    %v392 = vpop.permute.xlu0 %391
    %v394 = vmul.f32 %v376, %v392
    %v395 = vpack.c.bf16 %v394, %v394
    %397 = vrot.lane.b32.xlu0 %v395, 32
    %v398 = vpop.permute.xlu0 %397
    %v400 = vsel %vm224, %v398, 0
    %402 = vmatpush.bf16.msra.mxu0 0
    %403 = vmatpush.bf16.msra.mxu0 0
    %404 = vmatpush.bf16.msra.mxu0 0
    %405 = vmatpush.bf16.msra.mxu0 0
    %406 = vmatpush.bf16.msra.mxu0 0
    %407 = vmatpush.bf16.msra.mxu0 0
    %408 = vmatpush.bf16.msra.mxu0 %v221
    %409 = vmatpush.bf16.msra.mxu0 %v220
    %410 = vmatmul.bf16.gmra.mxu0 %v400
    %v411 = vpop.f32.mrf.mxu0
    %v412 = vadd.f32 0.0, %v411
    %v413 = vpop.f32.mrf.mxu0
    %414 = vdwg.mxu0
    %v415 = vadd.f32 %v200, %v412
    %v416 = vxor.u32 %v415, 2147483648
    %v417 = vmul.f32 %v416, 1.442695
    %v418 = vpow.pop %v417
    %v419 = vadd.f32 %v418, 1.0
    %v420 = vrcp.pop %v419
    %v421 = vmul.f32 %v419, %v420
    %v422 = vsub.f32 1.0, %v421
    %v423 = vmul.f32 %v420, %v422
    %v424 = vadd.f32 %v420, %v423
    %vm425 = vweird.f32 %v419
    %vm426 = vweird.f32 %v420
    %vm427 = vmor %vm425, %vm426
    %v428 = vsel %vm427, %v420, %v424
    %v429 = vand.u32 2147483647, %v419
    %vm430 = vcmp.eq.f32.partialorder %v429, 8.507059e+37
    %v431 = vand.u32 %v419, 2147483648
    %v432 = vor.u32 1.1754944e-38, %v431
    %v433 = vsel %vm430, %v432, %v428
    %v434 = vmul.f32 1.0, %v433
    %v435 = vtanh.pop %v415
    %v436 = vmul.f32 %v434, %v388
    %438 = vrot.lane.b32.xlu0 %v435, 64
    %v439 = vpop.permute.xlu0 %438
    %v441 = vmul.f32 %v434, %v439
    %443 = vrot.lane.b32.xlu0 %v441, 32
    %v444 = vpop.permute.xlu0 %443
    %v446 = vadd.f32 %v436, %v444
    %v447 = vtanh.pop %v446
    %449 = vrot.lane.b32.xlu0 %v447, 64
    %v450 = vpop.permute.xlu0 %449
    %v452 = vmul.f32 %v434, %v450
    %v453 = vpack.c.bf16 %v452, %v452
    %455 = vrot.lane.b32.xlu0 %v453, 32
    %v456 = vpop.permute.xlu0 %455
    %v458 = vsel %vm224, %v456, 0
    %460 = vmatpush.bf16.msra.mxu0 0
    %461 = vmatpush.bf16.msra.mxu0 0
    %462 = vmatpush.bf16.msra.mxu0 0
    %463 = vmatpush.bf16.msra.mxu0 0
    %464 = vmatpush.bf16.msra.mxu0 0
    %465 = vmatpush.bf16.msra.mxu0 0
    %466 = vmatpush.bf16.msra.mxu0 %v221
    %467 = vmatpush.bf16.msra.mxu0 %v220
    %468 = vmatmul.bf16.gmra.mxu0 %v458
    %v469 = vpop.f32.mrf.mxu0
    %v470 = vadd.f32 0.0, %v469
    %v471 = vpop.f32.mrf.mxu0
    %472 = vdwg.mxu0
    %v473 = vadd.f32 %v203, %v470
    %v474 = vxor.u32 %v473, 2147483648
    %v475 = vmul.f32 %v474, 1.442695
    %v476 = vpow.pop %v475
    %v477 = vadd.f32 %v476, 1.0
    %v478 = vrcp.pop %v477
    %v479 = vmul.f32 %v477, %v478
    %v480 = vsub.f32 1.0, %v479
    %v481 = vmul.f32 %v478, %v480
    %v482 = vadd.f32 %v478, %v481
    %vm483 = vweird.f32 %v477
    %vm484 = vweird.f32 %v478
    %vm485 = vmor %vm483, %vm484
    %v486 = vsel %vm485, %v478, %v482
    %v487 = vand.u32 2147483647, %v477
    %vm488 = vcmp.eq.f32.partialorder %v487, 8.507059e+37
    %v489 = vand.u32 %v477, 2147483648
    %v490 = vor.u32 1.1754944e-38, %v489
    %v491 = vsel %vm488, %v490, %v486
    %v492 = vmul.f32 1.0, %v491
    %v493 = vtanh.pop %v473
    %v494 = vmul.f32 %v492, %v446
    %496 = vrot.lane.b32.xlu0 %v493, 64
    %v497 = vpop.permute.xlu0 %496
    %v499 = vmul.f32 %v492, %v497
    %501 = vrot.lane.b32.xlu0 %v499, 32
    %v502 = vpop.permute.xlu0 %501
    %v504 = vadd.f32 %v494, %v502
    %v505 = vtanh.pop %v504
    %507 = vrot.lane.b32.xlu0 %v505, 64
    %v508 = vpop.permute.xlu0 %507
    %v510 = vmul.f32 %v492, %v508
    %v511 = vpack.c.bf16 %v510, %v510
    %513 = vrot.lane.b32.xlu0 %v511, 32
    %v514 = vpop.permute.xlu0 %513
    %v516 = vsel %vm224, %v514, 0
    %518 = vmatpush.bf16.msra.mxu0 0
    %519 = vmatpush.bf16.msra.mxu0 0
    %520 = vmatpush.bf16.msra.mxu0 0
    %521 = vmatpush.bf16.msra.mxu0 0
    %522 = vmatpush.bf16.msra.mxu0 0
    %523 = vmatpush.bf16.msra.mxu0 0
    %524 = vmatpush.bf16.msra.mxu0 %v221
    %525 = vmatpush.bf16.msra.mxu0 %v220
    %526 = vmatmul.bf16.gmra.mxu0 %v516
    %v527 = vpop.f32.mrf.mxu0
    %v528 = vadd.f32 0.0, %v527
    %v529 = vpop.f32.mrf.mxu0
    %530 = vdwg.mxu0
    %v531 = vadd.f32 %v205, %v528
    %v532 = vxor.u32 %v531, 2147483648
    %v533 = vmul.f32 %v532, 1.442695
    %v534 = vpow.pop %v533
    %v535 = vadd.f32 %v534, 1.0
    %v536 = vrcp.pop %v535
    %v537 = vmul.f32 %v535, %v536
    %v538 = vsub.f32 1.0, %v537
    %v539 = vmul.f32 %v536, %v538
    %v540 = vadd.f32 %v536, %v539
    %vm541 = vweird.f32 %v535
    %vm542 = vweird.f32 %v536
    %vm543 = vmor %vm541, %vm542
    %v544 = vsel %vm543, %v536, %v540
    %v545 = vand.u32 2147483647, %v535
    %vm546 = vcmp.eq.f32.partialorder %v545, 8.507059e+37
    %v547 = vand.u32 %v535, 2147483648
    %v548 = vor.u32 1.1754944e-38, %v547
    %v549 = vsel %vm546, %v548, %v544
    %v550 = vmul.f32 1.0, %v549
    %v551 = vtanh.pop %v531
    %v552 = vmul.f32 %v550, %v504
    %554 = vrot.lane.b32.xlu0 %v551, 64
    %v555 = vpop.permute.xlu0 %554
    %v557 = vmul.f32 %v550, %v555
    %559 = vrot.lane.b32.xlu0 %v557, 32
    %v560 = vpop.permute.xlu0 %559
    %v562 = vadd.f32 %v552, %v560
    %v563 = vtanh.pop %v562
    %565 = vrot.lane.b32.xlu0 %v563, 64
    %v566 = vpop.permute.xlu0 %565
    %v568 = vmul.f32 %v550, %v566
    %v569 = vpack.c.bf16 %v568, %v568
    %571 = vrot.lane.b32.xlu0 %v569, 32
    %v572 = vpop.permute.xlu0 %571
    %v574 = vsel %vm224, %v572, 0
    %576 = vmatpush.bf16.msra.mxu0 0
    %577 = vmatpush.bf16.msra.mxu0 0
    %578 = vmatpush.bf16.msra.mxu0 0
    %579 = vmatpush.bf16.msra.mxu0 0
    %580 = vmatpush.bf16.msra.mxu0 0
    %581 = vmatpush.bf16.msra.mxu0 0
    %582 = vmatpush.bf16.msra.mxu0 %v221
    %583 = vmatpush.bf16.msra.mxu0 %v220
    %584 = vmatmul.bf16.gmra.mxu0 %v574
    %v585 = vpop.f32.mrf.mxu0
    %v586 = vadd.f32 0.0, %v585
    %v587 = vpop.f32.mrf.mxu0
    %588 = vdwg.mxu0
    %v589 = vadd.f32 %v208, %v586
    %v590 = vxor.u32 %v589, 2147483648
    %v591 = vmul.f32 %v590, 1.442695
    %v592 = vpow.pop %v591
    %v593 = vadd.f32 %v592, 1.0
    %v594 = vrcp.pop %v593
    %v595 = vmul.f32 %v593, %v594
    %v596 = vsub.f32 1.0, %v595
    %v597 = vmul.f32 %v594, %v596
    %v598 = vadd.f32 %v594, %v597
    %vm599 = vweird.f32 %v593
    %vm600 = vweird.f32 %v594
    %vm601 = vmor %vm599, %vm600
    %v602 = vsel %vm601, %v594, %v598
    %v603 = vand.u32 2147483647, %v593
    %vm604 = vcmp.eq.f32.partialorder %v603, 8.507059e+37
    %v605 = vand.u32 %v593, 2147483648
    %v606 = vor.u32 1.1754944e-38, %v605
    %v607 = vsel %vm604, %v606, %v602
    %v608 = vmul.f32 1.0, %v607
    %v609 = vtanh.pop %v589
    %v610 = vmul.f32 %v608, %v562
    %612 = vrot.lane.b32.xlu0 %v609, 64
    %v613 = vpop.permute.xlu0 %612
    %v615 = vmul.f32 %v608, %v613
    %617 = vrot.lane.b32.xlu0 %v615, 32
    %v618 = vpop.permute.xlu0 %617
    %v620 = vadd.f32 %v610, %v618
    %v621 = vtanh.pop %v620
    %623 = vrot.lane.b32.xlu0 %v621, 64
    %v624 = vpop.permute.xlu0 %623
    %v626 = vmul.f32 %v608, %v624
    %v627 = vpack.c.bf16 %v626, %v626
    %629 = vrot.lane.b32.xlu0 %v627, 32
    %v630 = vpop.permute.xlu0 %629
    %v632 = vsel %vm224, %v630, 0
    %634 = vmatpush.bf16.msra.mxu0 0
    %635 = vmatpush.bf16.msra.mxu0 0
    %636 = vmatpush.bf16.msra.mxu0 0
    %637 = vmatpush.bf16.msra.mxu0 0
    %638 = vmatpush.bf16.msra.mxu0 0
    %639 = vmatpush.bf16.msra.mxu0 0
    %640 = vmatpush.bf16.msra.mxu0 %v221
    %641 = vmatpush.bf16.msra.mxu0 %v220
    %642 = vmatmul.bf16.gmra.mxu0 %v632
    %v643 = vpop.f32.mrf.mxu0
    %v644 = vadd.f32 0.0, %v643
    %v645 = vpop.f32.mrf.mxu0
    %646 = vdwg.mxu0
    %v647 = vadd.f32 %v210, %v644
    %v648 = vxor.u32 %v647, 2147483648
    %v649 = vmul.f32 %v648, 1.442695
    %v650 = vpow.pop %v649
    %v651 = vadd.f32 %v650, 1.0
    %v652 = vrcp.pop %v651
    %v653 = vmul.f32 %v651, %v652
    %v654 = vsub.f32 1.0, %v653
    %v655 = vmul.f32 %v652, %v654
    %v656 = vadd.f32 %v652, %v655
    %vm657 = vweird.f32 %v651
    %vm658 = vweird.f32 %v652
    %vm659 = vmor %vm657, %vm658
    %v660 = vsel %vm659, %v652, %v656
    %v661 = vand.u32 2147483647, %v651
    %vm662 = vcmp.eq.f32.partialorder %v661, 8.507059e+37
    %v663 = vand.u32 %v651, 2147483648
    %v664 = vor.u32 1.1754944e-38, %v663
    %v665 = vsel %vm662, %v664, %v660
    %v666 = vmul.f32 1.0, %v665
    %v667 = vtanh.pop %v647
    %v668 = vmul.f32 %v666, %v620
    %670 = vrot.lane.b32.xlu0 %v667, 64
    %v671 = vpop.permute.xlu0 %670
    %v673 = vmul.f32 %v666, %v671
    %675 = vrot.lane.b32.xlu0 %v673, 32
    %v676 = vpop.permute.xlu0 %675
    %v678 = vadd.f32 %v668, %v676
    %v679 = vtanh.pop %v678
    %681 = vrot.lane.b32.xlu0 %v679, 64
    %v682 = vpop.permute.xlu0 %681
    %v684 = vmul.f32 %v666, %v682
    %v685 = vpack.c.bf16 %v336, %v278
    %v686 = vpack.c.bf16 %v452, %v394
    %v687 = vpack.c.bf16 %v568, %v510
    %v688 = vpack.c.bf16 %v684, %v626
    %v689 = vld [vmem:[%s4] sm:$0xf]
    %v690 = vld [vmem:[%s4 + $0x4] sm:$0xf]
    %v691 = vld [vmem:[%s4 + $0x8] sm:$0xf]
    %v692 = vld [vmem:[%s4 + $0xc] sm:$0xf]
    %v693 = vld [vmem:[#allocation4] sm:$0xf]
    %v694 = vld [vmem:[#allocation4 + $0x4] sm:$0xf]
    %v695 = vld [vmem:[#allocation4 + $0x8] sm:$0xf]
    %v696 = vld [vmem:[#allocation4 + $0xc] sm:$0xf]
    %v697 = vld [vmem:[%s6] sm:$0x1]
    %v699 = vperm.slane %v697, 0
    %705 = vrot.lane.b32.xlu0 %v685, 32
    %v706 = vpop.permute.xlu0 %705
    %707 = vrot.lane.b32.xlu0 %v686, 32
    %v708 = vpop.permute.xlu0 %707
    %709 = vrot.lane.b32.xlu0 %v687, 32
    %v710 = vpop.permute.xlu0 %709
    %711 = vrot.lane.b32.xlu0 %v688, 32
    %v712 = vpop.permute.xlu0 %711
    %v717 = vunpack.c.l.b16 %v689
    %v718 = vunpack.c.l.b16 %v690
    %v719 = vunpack.c.l.b16 %v691
    %v720 = vunpack.c.l.b16 %v692
    %v721 = vpack.c.b16 %v718, %v717
    %v722 = vpack.c.b16 %v720, %v719
    %v726 = vsel %vm224, %v706, 0
    %v729 = vsel %vm224, %v708, 0
    %v732 = vsel %vm224, %v710, 0
    %v735 = vsel %vm224, %v712, 0
    %737 = vmatpush.bf16.msra.mxu0 0
    %738 = vmatpush.bf16.msra.mxu0 0
    %739 = vmatpush.bf16.msra.mxu0 0
    %740 = vmatpush.bf16.msra.mxu0 0
    %741 = vmatpush.bf16.msra.mxu0 0
    %742 = vmatpush.bf16.msra.mxu0 0
    %743 = vmatpush.bf16.msra.mxu0 %v722
    %744 = vmatpush.bf16.msra.mxu0 %v721
    %745 = vmatmul.bf16.gmra.mxu0 %v726
    %v746 = vpop.f32.mrf.mxu0
    %v747 = vadd.f32 %v699, %v746
    %v748 = vpop.f32.mrf.mxu0
    %v749 = vadd.f32 %v699, %v748
    %750 = vmatmul.bf16.gmra.mxu0 %v729
    %v751 = vpop.f32.mrf.mxu0
    %v752 = vadd.f32 %v699, %v751
    %v753 = vpop.f32.mrf.mxu0
    %v754 = vadd.f32 %v699, %v753
    %755 = vmatmul.bf16.gmra.mxu0 %v732
    %v756 = vpop.f32.mrf.mxu0
    %v757 = vadd.f32 %v699, %v756
    %v758 = vpop.f32.mrf.mxu0
    %v759 = vadd.f32 %v699, %v758
    %760 = vmatmul.bf16.gmra.mxu0 %v735
    %v761 = vpop.f32.mrf.mxu0
    %v762 = vadd.f32 %v699, %v761
    %v763 = vpop.f32.mrf.mxu0
    %v764 = vadd.f32 %v699, %v763
    %765 = vdwg.mxu0
    %v770 = vunpack.c.l.b16 %v693
    %v771 = vunpack.c.l.b16 %v694
    %v772 = vunpack.c.l.b16 %v695
    %v773 = vunpack.c.l.b16 %v696
    %v774 = vpack.c.b16 %v771, %v770
    %v775 = vpack.c.b16 %v773, %v772
    %778 = vmatpush.bf16.msra.mxu0 0
    %779 = vmatpush.bf16.msra.mxu0 0
    %780 = vmatpush.bf16.msra.mxu0 0
    %781 = vmatpush.bf16.msra.mxu0 0
    %782 = vmatpush.bf16.msra.mxu0 0
    %783 = vmatpush.bf16.msra.mxu0 0
    %784 = vmatpush.bf16.msra.mxu0 %v775
    %785 = vmatpush.bf16.msra.mxu0 %v774
    %786 = vmatmul.bf16.gmra.mxu0 %v226
    %v787 = vpop.f32.mrf.mxu0
    %v788 = vadd.f32 0.0, %v787
    %v789 = vpop.f32.mrf.mxu0
    %790 = vdwg.mxu0
    %v791 = vadd.f32 %v747, %v788
    %v792 = vxor.u32 %v791, 2147483648
    %v793 = vmul.f32 %v792, 1.442695
    %v794 = vpow.pop %v793
    %v795 = vadd.f32 %v794, 1.0
    %v796 = vrcp.pop %v795
    %v797 = vmul.f32 %v795, %v796
    %v798 = vsub.f32 1.0, %v797
    %v799 = vmul.f32 %v796, %v798
    %v800 = vadd.f32 %v796, %v799
    %vm801 = vweird.f32 %v795
    %vm802 = vweird.f32 %v796
    %vm803 = vmor %vm801, %vm802
    %v804 = vsel %vm803, %v796, %v800
    %v805 = vand.u32 2147483647, %v795
    %vm806 = vcmp.eq.f32.partialorder %v805, 8.507059e+37
    %v807 = vand.u32 %v795, 2147483648
    %v808 = vor.u32 1.1754944e-38, %v807
    %v809 = vsel %vm806, %v808, %v804
    %v810 = vmul.f32 1.0, %v809
    %v811 = vtanh.pop %v791
    %v812 = vmul.f32 %v810, 0.0
    %814 = vrot.lane.b32.xlu0 %v811, 64
    %v815 = vpop.permute.xlu0 %814
    %v817 = vmul.f32 %v810, %v815
    %819 = vrot.lane.b32.xlu0 %v817, 32
    %v820 = vpop.permute.xlu0 %819
    %v822 = vadd.f32 %v812, %v820
    %v823 = vtanh.pop %v822
    %825 = vrot.lane.b32.xlu0 %v823, 64
    %v826 = vpop.permute.xlu0 %825
    %v828 = vmul.f32 %v810, %v826
    %v829 = vpack.c.bf16 %v828, %v828
    %831 = vrot.lane.b32.xlu0 %v829, 32
    %v832 = vpop.permute.xlu0 %831
    %v834 = vsel %vm224, %v832, 0
    %836 = vmatpush.bf16.msra.mxu0 0
    %837 = vmatpush.bf16.msra.mxu0 0
    %838 = vmatpush.bf16.msra.mxu0 0
    %839 = vmatpush.bf16.msra.mxu0 0
    %840 = vmatpush.bf16.msra.mxu0 0
    %841 = vmatpush.bf16.msra.mxu0 0
    %842 = vmatpush.bf16.msra.mxu0 %v775
    %843 = vmatpush.bf16.msra.mxu0 %v774
    %844 = vmatmul.bf16.gmra.mxu0 %v834
    %v845 = vpop.f32.mrf.mxu0
    %v846 = vadd.f32 0.0, %v845
    %v847 = vpop.f32.mrf.mxu0
    %848 = vdwg.mxu0
    %v849 = vadd.f32 %v749, %v846
    %v850 = vxor.u32 %v849, 2147483648
    %v851 = vmul.f32 %v850, 1.442695
    %v852 = vpow.pop %v851
    %v853 = vadd.f32 %v852, 1.0
    %v854 = vrcp.pop %v853
    %v855 = vmul.f32 %v853, %v854
    %v856 = vsub.f32 1.0, %v855
    %v857 = vmul.f32 %v854, %v856
    %v858 = vadd.f32 %v854, %v857
    %vm859 = vweird.f32 %v853
    %vm860 = vweird.f32 %v854
    %vm861 = vmor %vm859, %vm860
    %v862 = vsel %vm861, %v854, %v858
    %v863 = vand.u32 2147483647, %v853
    %vm864 = vcmp.eq.f32.partialorder %v863, 8.507059e+37
    %v865 = vand.u32 %v853, 2147483648
    %v866 = vor.u32 1.1754944e-38, %v865
    %v867 = vsel %vm864, %v866, %v862
    %v868 = vmul.f32 1.0, %v867
    %v869 = vtanh.pop %v849
    %v870 = vmul.f32 %v868, %v822
    %872 = vrot.lane.b32.xlu0 %v869, 64
    %v873 = vpop.permute.xlu0 %872
    %v875 = vmul.f32 %v868, %v873
    %877 = vrot.lane.b32.xlu0 %v875, 32
    %v878 = vpop.permute.xlu0 %877
    %v880 = vadd.f32 %v870, %v878
    %v881 = vtanh.pop %v880
    %883 = vrot.lane.b32.xlu0 %v881, 64
    %v884 = vpop.permute.xlu0 %883
    %v886 = vmul.f32 %v868, %v884
    %v887 = vpack.c.bf16 %v886, %v886
    %889 = vrot.lane.b32.xlu0 %v887, 32
    %v890 = vpop.permute.xlu0 %889
    %v892 = vsel %vm224, %v890, 0
    %894 = vmatpush.bf16.msra.mxu0 0
    %895 = vmatpush.bf16.msra.mxu0 0
    %896 = vmatpush.bf16.msra.mxu0 0
    %897 = vmatpush.bf16.msra.mxu0 0
    %898 = vmatpush.bf16.msra.mxu0 0
    %899 = vmatpush.bf16.msra.mxu0 0
    %900 = vmatpush.bf16.msra.mxu0 %v775
    %901 = vmatpush.bf16.msra.mxu0 %v774
    %902 = vmatmul.bf16.gmra.mxu0 %v892
    %v903 = vpop.f32.mrf.mxu0
    %v904 = vadd.f32 0.0, %v903
    %v905 = vpop.f32.mrf.mxu0
    %906 = vdwg.mxu0
    %v907 = vadd.f32 %v752, %v904
    %v908 = vxor.u32 %v907, 2147483648
    %v909 = vmul.f32 %v908, 1.442695
    %v910 = vpow.pop %v909
    %v911 = vadd.f32 %v910, 1.0
    %v912 = vrcp.pop %v911
    %v913 = vmul.f32 %v911, %v912
    %v914 = vsub.f32 1.0, %v913
    %v915 = vmul.f32 %v912, %v914
    %v916 = vadd.f32 %v912, %v915
    %vm917 = vweird.f32 %v911
    %vm918 = vweird.f32 %v912
    %vm919 = vmor %vm917, %vm918
    %v920 = vsel %vm919, %v912, %v916
    %v921 = vand.u32 2147483647, %v911
    %vm922 = vcmp.eq.f32.partialorder %v921, 8.507059e+37
    %v923 = vand.u32 %v911, 2147483648
    %v924 = vor.u32 1.1754944e-38, %v923
    %v925 = vsel %vm922, %v924, %v920
    %v926 = vmul.f32 1.0, %v925
    %v927 = vtanh.pop %v907
    %v928 = vmul.f32 %v926, %v880
    %930 = vrot.lane.b32.xlu0 %v927, 64
    %v931 = vpop.permute.xlu0 %930
    %v933 = vmul.f32 %v926, %v931
    %935 = vrot.lane.b32.xlu0 %v933, 32
    %v936 = vpop.permute.xlu0 %935
    %v938 = vadd.f32 %v928, %v936
    %v939 = vtanh.pop %v938
    %941 = vrot.lane.b32.xlu0 %v939, 64
    %v942 = vpop.permute.xlu0 %941
    %v944 = vmul.f32 %v926, %v942
    %v945 = vpack.c.bf16 %v944, %v944
    %947 = vrot.lane.b32.xlu0 %v945, 32
    %v948 = vpop.permute.xlu0 %947
    %v950 = vsel %vm224, %v948, 0
    %952 = vmatpush.bf16.msra.mxu0 0
    %953 = vmatpush.bf16.msra.mxu0 0
    %954 = vmatpush.bf16.msra.mxu0 0
    %955 = vmatpush.bf16.msra.mxu0 0
    %956 = vmatpush.bf16.msra.mxu0 0
    %957 = vmatpush.bf16.msra.mxu0 0
    %958 = vmatpush.bf16.msra.mxu0 %v775
    %959 = vmatpush.bf16.msra.mxu0 %v774
    %960 = vmatmul.bf16.gmra.mxu0 %v950
    %v961 = vpop.f32.mrf.mxu0
    %v962 = vadd.f32 0.0, %v961
    %v963 = vpop.f32.mrf.mxu0
    %964 = vdwg.mxu0
    %v965 = vadd.f32 %v754, %v962
    %v966 = vxor.u32 %v965, 2147483648
    %v967 = vmul.f32 %v966, 1.442695
    %v968 = vpow.pop %v967
    %v969 = vadd.f32 %v968, 1.0
    %v970 = vrcp.pop %v969
    %v971 = vmul.f32 %v969, %v970
    %v972 = vsub.f32 1.0, %v971
    %v973 = vmul.f32 %v970, %v972
    %v974 = vadd.f32 %v970, %v973
    %vm975 = vweird.f32 %v969
    %vm976 = vweird.f32 %v970
    %vm977 = vmor %vm975, %vm976
    %v978 = vsel %vm977, %v970, %v974
    %v979 = vand.u32 2147483647, %v969
    %vm980 = vcmp.eq.f32.partialorder %v979, 8.507059e+37
    %v981 = vand.u32 %v969, 2147483648
    %v982 = vor.u32 1.1754944e-38, %v981
    %v983 = vsel %vm980, %v982, %v978
    %v984 = vmul.f32 1.0, %v983
    %v985 = vtanh.pop %v965
    %v986 = vmul.f32 %v984, %v938
    %988 = vrot.lane.b32.xlu0 %v985, 64
    %v989 = vpop.permute.xlu0 %988
    %v991 = vmul.f32 %v984, %v989
    %993 = vrot.lane.b32.xlu0 %v991, 32
    %v994 = vpop.permute.xlu0 %993
    %v996 = vadd.f32 %v986, %v994
    %v997 = vtanh.pop %v996
    %999 = vrot.lane.b32.xlu0 %v997, 64
    %v1000 = vpop.permute.xlu0 %999
    %v1002 = vmul.f32 %v984, %v1000
    %v1003 = vpack.c.bf16 %v1002, %v1002
    %1005 = vrot.lane.b32.xlu0 %v1003, 32
    %v1006 = vpop.permute.xlu0 %1005
    %v1008 = vsel %vm224, %v1006, 0
    %1010 = vmatpush.bf16.msra.mxu0 0
    %1011 = vmatpush.bf16.msra.mxu0 0
    %1012 = vmatpush.bf16.msra.mxu0 0
    %1013 = vmatpush.bf16.msra.mxu0 0
    %1014 = vmatpush.bf16.msra.mxu0 0
    %1015 = vmatpush.bf16.msra.mxu0 0
    %1016 = vmatpush.bf16.msra.mxu0 %v775
    %1017 = vmatpush.bf16.msra.mxu0 %v774
    %1018 = vmatmul.bf16.gmra.mxu0 %v1008
    %v1019 = vpop.f32.mrf.mxu0
    %v1020 = vadd.f32 0.0, %v1019
    %v1021 = vpop.f32.mrf.mxu0
    %1022 = vdwg.mxu0
    %v1023 = vadd.f32 %v757, %v1020
    %v1024 = vxor.u32 %v1023, 2147483648
    %v1025 = vmul.f32 %v1024, 1.442695
    %v1026 = vpow.pop %v1025
    %v1027 = vadd.f32 %v1026, 1.0
    %v1028 = vrcp.pop %v1027
    %v1029 = vmul.f32 %v1027, %v1028
    %v1030 = vsub.f32 1.0, %v1029
    %v1031 = vmul.f32 %v1028, %v1030
    %v1032 = vadd.f32 %v1028, %v1031
    %vm1033 = vweird.f32 %v1027
    %vm1034 = vweird.f32 %v1028
    %vm1035 = vmor %vm1033, %vm1034
    %v1036 = vsel %vm1035, %v1028, %v1032
    %v1037 = vand.u32 2147483647, %v1027
    %vm1038 = vcmp.eq.f32.partialorder %v1037, 8.507059e+37
    %v1039 = vand.u32 %v1027, 2147483648
    %v1040 = vor.u32 1.1754944e-38, %v1039
    %v1041 = vsel %vm1038, %v1040, %v1036
    %v1042 = vmul.f32 1.0, %v1041
    %v1043 = vtanh.pop %v1023
    %v1044 = vmul.f32 %v1042, %v996
    %1046 = vrot.lane.b32.xlu0 %v1043, 64
    %v1047 = vpop.permute.xlu0 %1046
    %v1049 = vmul.f32 %v1042, %v1047
    %1051 = vrot.lane.b32.xlu0 %v1049, 32
    %v1052 = vpop.permute.xlu0 %1051
    %v1054 = vadd.f32 %v1044, %v1052
    %v1055 = vtanh.pop %v1054
    %1057 = vrot.lane.b32.xlu0 %v1055, 64
    %v1058 = vpop.permute.xlu0 %1057
    %v1060 = vmul.f32 %v1042, %v1058
    %v1061 = vpack.c.bf16 %v1060, %v1060
    %1063 = vrot.lane.b32.xlu0 %v1061, 32
    %v1064 = vpop.permute.xlu0 %1063
    %v1066 = vsel %vm224, %v1064, 0
    %1068 = vmatpush.bf16.msra.mxu0 0
    %1069 = vmatpush.bf16.msra.mxu0 0
    %1070 = vmatpush.bf16.msra.mxu0 0
    %1071 = vmatpush.bf16.msra.mxu0 0
    %1072 = vmatpush.bf16.msra.mxu0 0
    %1073 = vmatpush.bf16.msra.mxu0 0
    %1074 = vmatpush.bf16.msra.mxu0 %v775
    %1075 = vmatpush.bf16.msra.mxu0 %v774
    %1076 = vmatmul.bf16.gmra.mxu0 %v1066
    %v1077 = vpop.f32.mrf.mxu0
    %v1078 = vadd.f32 0.0, %v1077
    %v1079 = vpop.f32.mrf.mxu0
    %1080 = vdwg.mxu0
    %v1081 = vadd.f32 %v759, %v1078
    %v1082 = vxor.u32 %v1081, 2147483648
    %v1083 = vmul.f32 %v1082, 1.442695
    %v1084 = vpow.pop %v1083
    %v1085 = vadd.f32 %v1084, 1.0
    %v1086 = vrcp.pop %v1085
    %v1087 = vmul.f32 %v1085, %v1086
    %v1088 = vsub.f32 1.0, %v1087
    %v1089 = vmul.f32 %v1086, %v1088
    %v1090 = vadd.f32 %v1086, %v1089
    %vm1091 = vweird.f32 %v1085
    %vm1092 = vweird.f32 %v1086
    %vm1093 = vmor %vm1091, %vm1092
    %v1094 = vsel %vm1093, %v1086, %v1090
    %v1095 = vand.u32 2147483647, %v1085
    %vm1096 = vcmp.eq.f32.partialorder %v1095, 8.507059e+37
    %v1097 = vand.u32 %v1085, 2147483648
    %v1098 = vor.u32 1.1754944e-38, %v1097
    %v1099 = vsel %vm1096, %v1098, %v1094
    %v1100 = vmul.f32 1.0, %v1099
    %v1101 = vtanh.pop %v1081
    %v1102 = vmul.f32 %v1100, %v1054
    %1104 = vrot.lane.b32.xlu0 %v1101, 64
    %v1105 = vpop.permute.xlu0 %1104
    %v1107 = vmul.f32 %v1100, %v1105
    %1109 = vrot.lane.b32.xlu0 %v1107, 32
    %v1110 = vpop.permute.xlu0 %1109
    %v1112 = vadd.f32 %v1102, %v1110
    %v1113 = vtanh.pop %v1112
    %1115 = vrot.lane.b32.xlu0 %v1113, 64
    %v1116 = vpop.permute.xlu0 %1115
    %v1118 = vmul.f32 %v1100, %v1116
    %v1119 = vpack.c.bf16 %v1118, %v1118
    %1121 = vrot.lane.b32.xlu0 %v1119, 32
    %v1122 = vpop.permute.xlu0 %1121
    %v1124 = vsel %vm224, %v1122, 0
    %1126 = vmatpush.bf16.msra.mxu0 0
    %1127 = vmatpush.bf16.msra.mxu0 0
    %1128 = vmatpush.bf16.msra.mxu0 0
    %1129 = vmatpush.bf16.msra.mxu0 0
    %1130 = vmatpush.bf16.msra.mxu0 0
    %1131 = vmatpush.bf16.msra.mxu0 0
    %1132 = vmatpush.bf16.msra.mxu0 %v775
    %1133 = vmatpush.bf16.msra.mxu0 %v774
    %1134 = vmatmul.bf16.gmra.mxu0 %v1124
    %v1135 = vpop.f32.mrf.mxu0
    %v1136 = vadd.f32 0.0, %v1135
    %v1137 = vpop.f32.mrf.mxu0
    %1138 = vdwg.mxu0
    %v1139 = vadd.f32 %v762, %v1136
    %v1140 = vxor.u32 %v1139, 2147483648
    %v1141 = vmul.f32 %v1140, 1.442695
    %v1142 = vpow.pop %v1141
    %v1143 = vadd.f32 %v1142, 1.0
    %v1144 = vrcp.pop %v1143
    %v1145 = vmul.f32 %v1143, %v1144
    %v1146 = vsub.f32 1.0, %v1145
    %v1147 = vmul.f32 %v1144, %v1146
    %v1148 = vadd.f32 %v1144, %v1147
    %vm1149 = vweird.f32 %v1143
    %vm1150 = vweird.f32 %v1144
    %vm1151 = vmor %vm1149, %vm1150
    %v1152 = vsel %vm1151, %v1144, %v1148
    %v1153 = vand.u32 2147483647, %v1143
    %vm1154 = vcmp.eq.f32.partialorder %v1153, 8.507059e+37
    %v1155 = vand.u32 %v1143, 2147483648
    %v1156 = vor.u32 1.1754944e-38, %v1155
    %v1157 = vsel %vm1154, %v1156, %v1152
    %v1158 = vmul.f32 1.0, %v1157
    %v1159 = vtanh.pop %v1139
    %v1160 = vmul.f32 %v1158, %v1112
    %1162 = vrot.lane.b32.xlu0 %v1159, 64
    %v1163 = vpop.permute.xlu0 %1162
    %v1165 = vmul.f32 %v1158, %v1163
    %1167 = vrot.lane.b32.xlu0 %v1165, 32
    %v1168 = vpop.permute.xlu0 %1167
    %v1170 = vadd.f32 %v1160, %v1168
    %v1171 = vtanh.pop %v1170
    %1173 = vrot.lane.b32.xlu0 %v1171, 64
    %v1174 = vpop.permute.xlu0 %1173
    %v1176 = vmul.f32 %v1158, %v1174
    %v1177 = vpack.c.bf16 %v1176, %v1176
    %1179 = vrot.lane.b32.xlu0 %v1177, 32
    %v1180 = vpop.permute.xlu0 %1179
    %v1182 = vsel %vm224, %v1180, 0
    %1184 = vmatpush.bf16.msra.mxu0 0
    %1185 = vmatpush.bf16.msra.mxu0 0
    %1186 = vmatpush.bf16.msra.mxu0 0
    %1187 = vmatpush.bf16.msra.mxu0 0
    %1188 = vmatpush.bf16.msra.mxu0 0
    %1189 = vmatpush.bf16.msra.mxu0 0
    %1190 = vmatpush.bf16.msra.mxu0 %v775
    %1191 = vmatpush.bf16.msra.mxu0 %v774
    %1192 = vmatmul.bf16.gmra.mxu0 %v1182
    %v1193 = vpop.f32.mrf.mxu0
    %v1194 = vadd.f32 0.0, %v1193
    %v1195 = vpop.f32.mrf.mxu0
    %1196 = vdwg.mxu0
    %v1197 = vadd.f32 %v764, %v1194
    %v1198 = vxor.u32 %v1197, 2147483648
    %v1199 = vmul.f32 %v1198, 1.442695
    %v1200 = vpow.pop %v1199
    %v1201 = vadd.f32 %v1200, 1.0
    %v1202 = vrcp.pop %v1201
    %v1203 = vmul.f32 %v1201, %v1202
    %v1204 = vsub.f32 1.0, %v1203
    %v1205 = vmul.f32 %v1202, %v1204
    %v1206 = vadd.f32 %v1202, %v1205
    %vm1207 = vweird.f32 %v1201
    %vm1208 = vweird.f32 %v1202
    %vm1209 = vmor %vm1207, %vm1208
    %v1210 = vsel %vm1209, %v1202, %v1206
    %v1211 = vand.u32 2147483647, %v1201
    %vm1212 = vcmp.eq.f32.partialorder %v1211, 8.507059e+37
    %v1213 = vand.u32 %v1201, 2147483648
    %v1214 = vor.u32 1.1754944e-38, %v1213
    %v1215 = vsel %vm1212, %v1214, %v1210
    %v1216 = vmul.f32 1.0, %v1215
    %v1217 = vtanh.pop %v1197
    %v1218 = vmul.f32 %v1216, %v1170
    %1220 = vrot.lane.b32.xlu0 %v1217, 64
    %v1221 = vpop.permute.xlu0 %1220
    %v1223 = vmul.f32 %v1216, %v1221
    %1225 = vrot.lane.b32.xlu0 %v1223, 32
    %v1226 = vpop.permute.xlu0 %1225
    %v1228 = vadd.f32 %v1218, %v1226
    %v1229 = vtanh.pop %v1228
    %1231 = vrot.lane.b32.xlu0 %v1229, 64
    %v1232 = vpop.permute.xlu0 %1231
    %v1234 = vmul.f32 %v1216, %v1232
    %v1235 = vpack.c.bf16 %v886, %v828
    %v1236 = vpack.c.bf16 %v1002, %v944
    %v1237 = vpack.c.bf16 %v1118, %v1060
    %v1238 = vpack.c.bf16 %v1234, %v1176
    %v1239 = vld [vmem:[#allocation6] sm:$0xf]
    %v1240 = vld [vmem:[#allocation6 + $0x4] sm:$0xf]
    %v1241 = vld [vmem:[#allocation6 + $0x8] sm:$0xf]
    %v1242 = vld [vmem:[#allocation6 + $0xc] sm:$0xf]
    %v1243 = vld [vmem:[#allocation7] sm:$0xf]
    %v1244 = vld [vmem:[#allocation7 + $0x4] sm:$0xf]
    %v1245 = vld [vmem:[#allocation7 + $0x8] sm:$0xf]
    %v1246 = vld [vmem:[#allocation7 + $0xc] sm:$0xf]
    %v1247 = vld [vmem:[%s9] sm:$0x1]
    %v1249 = vperm.slane %v1247, 0
    %1255 = vrot.lane.b32.xlu0 %v1235, 32
    %v1256 = vpop.permute.xlu0 %1255
    %1257 = vrot.lane.b32.xlu0 %v1236, 32
    %v1258 = vpop.permute.xlu0 %1257
    %1259 = vrot.lane.b32.xlu0 %v1237, 32
    %v1260 = vpop.permute.xlu0 %1259
    %1261 = vrot.lane.b32.xlu0 %v1238, 32
    %v1262 = vpop.permute.xlu0 %1261
    %v1267 = vunpack.c.l.b16 %v1239
    %v1268 = vunpack.c.l.b16 %v1240
    %v1269 = vunpack.c.l.b16 %v1241
    %v1270 = vunpack.c.l.b16 %v1242
    %v1271 = vpack.c.b16 %v1268, %v1267
    %v1272 = vpack.c.b16 %v1270, %v1269
    %v1276 = vsel %vm224, %v1256, 0
    %v1279 = vsel %vm224, %v1258, 0
    %v1282 = vsel %vm224, %v1260, 0
    %v1285 = vsel %vm224, %v1262, 0
    %1287 = vmatpush.bf16.msra.mxu0 0
    %1288 = vmatpush.bf16.msra.mxu0 0
    %1289 = vmatpush.bf16.msra.mxu0 0
    %1290 = vmatpush.bf16.msra.mxu0 0
    %1291 = vmatpush.bf16.msra.mxu0 0
    %1292 = vmatpush.bf16.msra.mxu0 0
    %1293 = vmatpush.bf16.msra.mxu0 %v1272
    %1294 = vmatpush.bf16.msra.mxu0 %v1271
    %1295 = vmatmul.bf16.gmra.mxu0 %v1276
    %v1296 = vpop.f32.mrf.mxu0
    %v1297 = vadd.f32 %v1249, %v1296
    %v1298 = vpop.f32.mrf.mxu0
    %v1299 = vadd.f32 %v1249, %v1298
    %1300 = vmatmul.bf16.gmra.mxu0 %v1279
    %v1301 = vpop.f32.mrf.mxu0
    %v1302 = vadd.f32 %v1249, %v1301
    %v1303 = vpop.f32.mrf.mxu0
    %v1304 = vadd.f32 %v1249, %v1303
    %1305 = vmatmul.bf16.gmra.mxu0 %v1282
    %v1306 = vpop.f32.mrf.mxu0
    %v1307 = vadd.f32 %v1249, %v1306
    %v1308 = vpop.f32.mrf.mxu0
    %v1309 = vadd.f32 %v1249, %v1308
    %1310 = vmatmul.bf16.gmra.mxu0 %v1285
    %v1311 = vpop.f32.mrf.mxu0
    %v1312 = vadd.f32 %v1249, %v1311
    %v1313 = vpop.f32.mrf.mxu0
    %v1314 = vadd.f32 %v1249, %v1313
    %1315 = vdwg.mxu0
    %v1320 = vunpack.c.l.b16 %v1243
    %v1321 = vunpack.c.l.b16 %v1244
    %v1322 = vunpack.c.l.b16 %v1245
    %v1323 = vunpack.c.l.b16 %v1246
    %v1324 = vpack.c.b16 %v1321, %v1320
    %v1325 = vpack.c.b16 %v1323, %v1322
    %1328 = vmatpush.bf16.msra.mxu0 0
    %1329 = vmatpush.bf16.msra.mxu0 0
    %1330 = vmatpush.bf16.msra.mxu0 0
    %1331 = vmatpush.bf16.msra.mxu0 0
    %1332 = vmatpush.bf16.msra.mxu0 0
    %1333 = vmatpush.bf16.msra.mxu0 0
    %1334 = vmatpush.bf16.msra.mxu0 %v1325
    %1335 = vmatpush.bf16.msra.mxu0 %v1324
    %1336 = vmatmul.bf16.gmra.mxu0 %v226
    %v1337 = vpop.f32.mrf.mxu0
    %v1338 = vadd.f32 0.0, %v1337
    %v1339 = vpop.f32.mrf.mxu0
    %1340 = vdwg.mxu0
    %v1341 = vadd.f32 %v1297, %v1338
    %v1342 = vxor.u32 %v1341, 2147483648
    %v1343 = vmul.f32 %v1342, 1.442695
    %v1344 = vpow.pop %v1343
    %v1345 = vadd.f32 %v1344, 1.0
    %v1346 = vrcp.pop %v1345
    %v1347 = vmul.f32 %v1345, %v1346
    %v1348 = vsub.f32 1.0, %v1347
    %v1349 = vmul.f32 %v1346, %v1348
    %v1350 = vadd.f32 %v1346, %v1349
    %vm1351 = vweird.f32 %v1345
    %vm1352 = vweird.f32 %v1346
    %vm1353 = vmor %vm1351, %vm1352
    %v1354 = vsel %vm1353, %v1346, %v1350
    %v1355 = vand.u32 2147483647, %v1345
    %vm1356 = vcmp.eq.f32.partialorder %v1355, 8.507059e+37
    %v1357 = vand.u32 %v1345, 2147483648
    %v1358 = vor.u32 1.1754944e-38, %v1357
    %v1359 = vsel %vm1356, %v1358, %v1354
    %v1360 = vmul.f32 1.0, %v1359
    %v1361 = vtanh.pop %v1341
    %v1362 = vmul.f32 %v1360, 0.0
    %1364 = vrot.lane.b32.xlu0 %v1361, 64
    %v1365 = vpop.permute.xlu0 %1364
    %v1367 = vmul.f32 %v1360, %v1365
    %1369 = vrot.lane.b32.xlu0 %v1367, 32
    %v1370 = vpop.permute.xlu0 %1369
    %v1372 = vadd.f32 %v1362, %v1370
    %v1373 = vtanh.pop %v1372
    %1375 = vrot.lane.b32.xlu0 %v1373, 64
    %v1376 = vpop.permute.xlu0 %1375
    %v1378 = vmul.f32 %v1360, %v1376
    %v1379 = vpack.c.bf16 %v1378, %v1378
    %1381 = vrot.lane.b32.xlu0 %v1379, 32
    %v1382 = vpop.permute.xlu0 %1381
    %v1384 = vsel %vm224, %v1382, 0
    %1386 = vmatpush.bf16.msra.mxu0 0
    %1387 = vmatpush.bf16.msra.mxu0 0
    %1388 = vmatpush.bf16.msra.mxu0 0
    %1389 = vmatpush.bf16.msra.mxu0 0
    %1390 = vmatpush.bf16.msra.mxu0 0
    %1391 = vmatpush.bf16.msra.mxu0 0
    %1392 = vmatpush.bf16.msra.mxu0 %v1325
    %1393 = vmatpush.bf16.msra.mxu0 %v1324
    %1394 = vmatmul.bf16.gmra.mxu0 %v1384
    %v1395 = vpop.f32.mrf.mxu0
    %v1396 = vadd.f32 0.0, %v1395
    %v1397 = vpop.f32.mrf.mxu0
    %1398 = vdwg.mxu0
    %v1399 = vadd.f32 %v1299, %v1396
    %v1400 = vxor.u32 %v1399, 2147483648
    %v1401 = vmul.f32 %v1400, 1.442695
    %v1402 = vpow.pop %v1401
    %v1403 = vadd.f32 %v1402, 1.0
    %v1404 = vrcp.pop %v1403
    %v1405 = vmul.f32 %v1403, %v1404
    %v1406 = vsub.f32 1.0, %v1405
    %v1407 = vmul.f32 %v1404, %v1406
    %v1408 = vadd.f32 %v1404, %v1407
    %vm1409 = vweird.f32 %v1403
    %vm1410 = vweird.f32 %v1404
    %vm1411 = vmor %vm1409, %vm1410
    %v1412 = vsel %vm1411, %v1404, %v1408
    %v1413 = vand.u32 2147483647, %v1403
    %vm1414 = vcmp.eq.f32.partialorder %v1413, 8.507059e+37
    %v1415 = vand.u32 %v1403, 2147483648
    %v1416 = vor.u32 1.1754944e-38, %v1415
    %v1417 = vsel %vm1414, %v1416, %v1412
    %v1418 = vmul.f32 1.0, %v1417
    %v1419 = vtanh.pop %v1399
    %v1420 = vmul.f32 %v1418, %v1372
    %1422 = vrot.lane.b32.xlu0 %v1419, 64
    %v1423 = vpop.permute.xlu0 %1422
    %v1425 = vmul.f32 %v1418, %v1423
    %1427 = vrot.lane.b32.xlu0 %v1425, 32
    %v1428 = vpop.permute.xlu0 %1427
    %v1430 = vadd.f32 %v1420, %v1428
    %v1431 = vtanh.pop %v1430
    %1433 = vrot.lane.b32.xlu0 %v1431, 64
    %v1434 = vpop.permute.xlu0 %1433
    %v1436 = vmul.f32 %v1418, %v1434
    %v1437 = vpack.c.bf16 %v1436, %v1436
    %1439 = vrot.lane.b32.xlu0 %v1437, 32
    %v1440 = vpop.permute.xlu0 %1439
    %v1442 = vsel %vm224, %v1440, 0
    %1444 = vmatpush.bf16.msra.mxu0 0
    %1445 = vmatpush.bf16.msra.mxu0 0
    %1446 = vmatpush.bf16.msra.mxu0 0
    %1447 = vmatpush.bf16.msra.mxu0 0
    %1448 = vmatpush.bf16.msra.mxu0 0
    %1449 = vmatpush.bf16.msra.mxu0 0
    %1450 = vmatpush.bf16.msra.mxu0 %v1325
    %1451 = vmatpush.bf16.msra.mxu0 %v1324
    %1452 = vmatmul.bf16.gmra.mxu0 %v1442
    %v1453 = vpop.f32.mrf.mxu0
    %v1454 = vadd.f32 0.0, %v1453
    %v1455 = vpop.f32.mrf.mxu0
    %1456 = vdwg.mxu0
    %v1457 = vadd.f32 %v1302, %v1454
    %v1458 = vxor.u32 %v1457, 2147483648
    %v1459 = vmul.f32 %v1458, 1.442695
    %v1460 = vpow.pop %v1459
    %v1461 = vadd.f32 %v1460, 1.0
    %v1462 = vrcp.pop %v1461
    %v1463 = vmul.f32 %v1461, %v1462
    %v1464 = vsub.f32 1.0, %v1463
    %v1465 = vmul.f32 %v1462, %v1464
    %v1466 = vadd.f32 %v1462, %v1465
    %vm1467 = vweird.f32 %v1461
    %vm1468 = vweird.f32 %v1462
    %vm1469 = vmor %vm1467, %vm1468
    %v1470 = vsel %vm1469, %v1462, %v1466
    %v1471 = vand.u32 2147483647, %v1461
    %vm1472 = vcmp.eq.f32.partialorder %v1471, 8.507059e+37
    %v1473 = vand.u32 %v1461, 2147483648
    %v1474 = vor.u32 1.1754944e-38, %v1473
    %v1475 = vsel %vm1472, %v1474, %v1470
    %v1476 = vmul.f32 1.0, %v1475
    %v1477 = vtanh.pop %v1457
    %v1478 = vmul.f32 %v1476, %v1430
    %1480 = vrot.lane.b32.xlu0 %v1477, 64
    %v1481 = vpop.permute.xlu0 %1480
    %v1483 = vmul.f32 %v1476, %v1481
    %1485 = vrot.lane.b32.xlu0 %v1483, 32
    %v1486 = vpop.permute.xlu0 %1485
    %v1488 = vadd.f32 %v1478, %v1486
    %v1489 = vtanh.pop %v1488
    %1491 = vrot.lane.b32.xlu0 %v1489, 64
    %v1492 = vpop.permute.xlu0 %1491
    %v1494 = vmul.f32 %v1476, %v1492
    %v1495 = vpack.c.bf16 %v1494, %v1494
    %1497 = vrot.lane.b32.xlu0 %v1495, 32
    %v1498 = vpop.permute.xlu0 %1497
    %v1500 = vsel %vm224, %v1498, 0
    %1502 = vmatpush.bf16.msra.mxu0 0
    %1503 = vmatpush.bf16.msra.mxu0 0
    %1504 = vmatpush.bf16.msra.mxu0 0
    %1505 = vmatpush.bf16.msra.mxu0 0
    %1506 = vmatpush.bf16.msra.mxu0 0
    %1507 = vmatpush.bf16.msra.mxu0 0
    %1508 = vmatpush.bf16.msra.mxu0 %v1325
    %1509 = vmatpush.bf16.msra.mxu0 %v1324
    %1510 = vmatmul.bf16.gmra.mxu0 %v1500
    %v1511 = vpop.f32.mrf.mxu0
    %v1512 = vadd.f32 0.0, %v1511
    %v1513 = vpop.f32.mrf.mxu0
    %1514 = vdwg.mxu0
    %v1515 = vadd.f32 %v1304, %v1512
    %v1516 = vxor.u32 %v1515, 2147483648
    %v1517 = vmul.f32 %v1516, 1.442695
    %v1518 = vpow.pop %v1517
    %v1519 = vadd.f32 %v1518, 1.0
    %v1520 = vrcp.pop %v1519
    %v1521 = vmul.f32 %v1519, %v1520
    %v1522 = vsub.f32 1.0, %v1521
    %v1523 = vmul.f32 %v1520, %v1522
    %v1524 = vadd.f32 %v1520, %v1523
    %vm1525 = vweird.f32 %v1519
    %vm1526 = vweird.f32 %v1520
    %vm1527 = vmor %vm1525, %vm1526
    %v1528 = vsel %vm1527, %v1520, %v1524
    %v1529 = vand.u32 2147483647, %v1519
    %vm1530 = vcmp.eq.f32.partialorder %v1529, 8.507059e+37
    %v1531 = vand.u32 %v1519, 2147483648
    %v1532 = vor.u32 1.1754944e-38, %v1531
    %v1533 = vsel %vm1530, %v1532, %v1528
    %v1534 = vmul.f32 1.0, %v1533
    %v1535 = vtanh.pop %v1515
    %v1536 = vmul.f32 %v1534, %v1488
    %1538 = vrot.lane.b32.xlu0 %v1535, 64
    %v1539 = vpop.permute.xlu0 %1538
    %v1541 = vmul.f32 %v1534, %v1539
    %1543 = vrot.lane.b32.xlu0 %v1541, 32
    %v1544 = vpop.permute.xlu0 %1543
    %v1546 = vadd.f32 %v1536, %v1544
    %v1547 = vtanh.pop %v1546
    %1549 = vrot.lane.b32.xlu0 %v1547, 64
    %v1550 = vpop.permute.xlu0 %1549
    %v1552 = vmul.f32 %v1534, %v1550
    %v1553 = vpack.c.bf16 %v1552, %v1552
    %1555 = vrot.lane.b32.xlu0 %v1553, 32
    %v1556 = vpop.permute.xlu0 %1555
    %v1558 = vsel %vm224, %v1556, 0
    %1560 = vmatpush.bf16.msra.mxu0 0
    %1561 = vmatpush.bf16.msra.mxu0 0
    %1562 = vmatpush.bf16.msra.mxu0 0
    %1563 = vmatpush.bf16.msra.mxu0 0
    %1564 = vmatpush.bf16.msra.mxu0 0
    %1565 = vmatpush.bf16.msra.mxu0 0
    %1566 = vmatpush.bf16.msra.mxu0 %v1325
    %1567 = vmatpush.bf16.msra.mxu0 %v1324
    %1568 = vmatmul.bf16.gmra.mxu0 %v1558
    %v1569 = vpop.f32.mrf.mxu0
    %v1570 = vadd.f32 0.0, %v1569
    %v1571 = vpop.f32.mrf.mxu0
    %1572 = vdwg.mxu0
    %v1573 = vadd.f32 %v1307, %v1570
    %v1574 = vxor.u32 %v1573, 2147483648
    %v1575 = vmul.f32 %v1574, 1.442695
    %v1576 = vpow.pop %v1575
    %v1577 = vadd.f32 %v1576, 1.0
    %v1578 = vrcp.pop %v1577
    %v1579 = vmul.f32 %v1577, %v1578
    %v1580 = vsub.f32 1.0, %v1579
    %v1581 = vmul.f32 %v1578, %v1580
    %v1582 = vadd.f32 %v1578, %v1581
    %vm1583 = vweird.f32 %v1577
    %vm1584 = vweird.f32 %v1578
    %vm1585 = vmor %vm1583, %vm1584
    %v1586 = vsel %vm1585, %v1578, %v1582
    %v1587 = vand.u32 2147483647, %v1577
    %vm1588 = vcmp.eq.f32.partialorder %v1587, 8.507059e+37
    %v1589 = vand.u32 %v1577, 2147483648
    %v1590 = vor.u32 1.1754944e-38, %v1589
    %v1591 = vsel %vm1588, %v1590, %v1586
    %v1592 = vmul.f32 1.0, %v1591
    %v1593 = vtanh.pop %v1573
    %v1594 = vmul.f32 %v1592, %v1546
    %1596 = vrot.lane.b32.xlu0 %v1593, 64
    %v1597 = vpop.permute.xlu0 %1596
    %v1599 = vmul.f32 %v1592, %v1597
    %1601 = vrot.lane.b32.xlu0 %v1599, 32
    %v1602 = vpop.permute.xlu0 %1601
    %v1604 = vadd.f32 %v1594, %v1602
    %v1605 = vtanh.pop %v1604
    %1607 = vrot.lane.b32.xlu0 %v1605, 64
    %v1608 = vpop.permute.xlu0 %1607
    %v1610 = vmul.f32 %v1592, %v1608
    %v1611 = vpack.c.bf16 %v1610, %v1610
    %1613 = vrot.lane.b32.xlu0 %v1611, 32
    %v1614 = vpop.permute.xlu0 %1613
    %v1616 = vsel %vm224, %v1614, 0
    %1618 = vmatpush.bf16.msra.mxu0 0
    %1619 = vmatpush.bf16.msra.mxu0 0
    %1620 = vmatpush.bf16.msra.mxu0 0
    %1621 = vmatpush.bf16.msra.mxu0 0
    %1622 = vmatpush.bf16.msra.mxu0 0
    %1623 = vmatpush.bf16.msra.mxu0 0
    %1624 = vmatpush.bf16.msra.mxu0 %v1325
    %1625 = vmatpush.bf16.msra.mxu0 %v1324
    %1626 = vmatmul.bf16.gmra.mxu0 %v1616
    %v1627 = vpop.f32.mrf.mxu0
    %v1628 = vadd.f32 0.0, %v1627
    %v1629 = vpop.f32.mrf.mxu0
    %1630 = vdwg.mxu0
    %v1631 = vadd.f32 %v1309, %v1628
    %v1632 = vxor.u32 %v1631, 2147483648
    %v1633 = vmul.f32 %v1632, 1.442695
    %v1634 = vpow.pop %v1633
    %v1635 = vadd.f32 %v1634, 1.0
    %v1636 = vrcp.pop %v1635
    %v1637 = vmul.f32 %v1635, %v1636
    %v1638 = vsub.f32 1.0, %v1637
    %v1639 = vmul.f32 %v1636, %v1638
    %v1640 = vadd.f32 %v1636, %v1639
    %vm1641 = vweird.f32 %v1635
    %vm1642 = vweird.f32 %v1636
    %vm1643 = vmor %vm1641, %vm1642
    %v1644 = vsel %vm1643, %v1636, %v1640
    %v1645 = vand.u32 2147483647, %v1635
    %vm1646 = vcmp.eq.f32.partialorder %v1645, 8.507059e+37
    %v1647 = vand.u32 %v1635, 2147483648
    %v1648 = vor.u32 1.1754944e-38, %v1647
    %v1649 = vsel %vm1646, %v1648, %v1644
    %v1650 = vmul.f32 1.0, %v1649
    %v1651 = vtanh.pop %v1631
    %v1652 = vmul.f32 %v1650, %v1604
    %1654 = vrot.lane.b32.xlu0 %v1651, 64
    %v1655 = vpop.permute.xlu0 %1654
    %v1657 = vmul.f32 %v1650, %v1655
    %1659 = vrot.lane.b32.xlu0 %v1657, 32
    %v1660 = vpop.permute.xlu0 %1659
    %v1662 = vadd.f32 %v1652, %v1660
    %v1663 = vtanh.pop %v1662
    %1665 = vrot.lane.b32.xlu0 %v1663, 64
    %v1666 = vpop.permute.xlu0 %1665
    %v1668 = vmul.f32 %v1650, %v1666
    %v1669 = vpack.c.bf16 %v1668, %v1668
    %1671 = vrot.lane.b32.xlu0 %v1669, 32
    %v1672 = vpop.permute.xlu0 %1671
    %v1674 = vsel %vm224, %v1672, 0
    %1676 = vmatpush.bf16.msra.mxu0 0
    %1677 = vmatpush.bf16.msra.mxu0 0
    %1678 = vmatpush.bf16.msra.mxu0 0
    %1679 = vmatpush.bf16.msra.mxu0 0
    %1680 = vmatpush.bf16.msra.mxu0 0
    %1681 = vmatpush.bf16.msra.mxu0 0
    %1682 = vmatpush.bf16.msra.mxu0 %v1325
    %1683 = vmatpush.bf16.msra.mxu0 %v1324
    %1684 = vmatmul.bf16.gmra.mxu0 %v1674
    %v1685 = vpop.f32.mrf.mxu0
    %v1686 = vadd.f32 0.0, %v1685
    %v1687 = vpop.f32.mrf.mxu0
    %1688 = vdwg.mxu0
    %v1689 = vadd.f32 %v1312, %v1686
    %v1690 = vxor.u32 %v1689, 2147483648
    %v1691 = vmul.f32 %v1690, 1.442695
    %v1692 = vpow.pop %v1691
    %v1693 = vadd.f32 %v1692, 1.0
    %v1694 = vrcp.pop %v1693
    %v1695 = vmul.f32 %v1693, %v1694
    %v1696 = vsub.f32 1.0, %v1695
    %v1697 = vmul.f32 %v1694, %v1696
    %v1698 = vadd.f32 %v1694, %v1697
    %vm1699 = vweird.f32 %v1693
    %vm1700 = vweird.f32 %v1694
    %vm1701 = vmor %vm1699, %vm1700
    %v1702 = vsel %vm1701, %v1694, %v1698
    %v1703 = vand.u32 2147483647, %v1693
    %vm1704 = vcmp.eq.f32.partialorder %v1703, 8.507059e+37
    %v1705 = vand.u32 %v1693, 2147483648
    %v1706 = vor.u32 1.1754944e-38, %v1705
    %v1707 = vsel %vm1704, %v1706, %v1702
    %v1708 = vmul.f32 1.0, %v1707
    %v1709 = vtanh.pop %v1689
    %v1710 = vmul.f32 %v1708, %v1662
    %1712 = vrot.lane.b32.xlu0 %v1709, 64
    %v1713 = vpop.permute.xlu0 %1712
    %v1715 = vmul.f32 %v1708, %v1713
    %1717 = vrot.lane.b32.xlu0 %v1715, 32
    %v1718 = vpop.permute.xlu0 %1717
    %v1720 = vadd.f32 %v1710, %v1718
    %v1721 = vtanh.pop %v1720
    %1723 = vrot.lane.b32.xlu0 %v1721, 64
    %v1724 = vpop.permute.xlu0 %1723
    %v1726 = vmul.f32 %v1708, %v1724
    %v1727 = vpack.c.bf16 %v1726, %v1726
    %1729 = vrot.lane.b32.xlu0 %v1727, 32
    %v1730 = vpop.permute.xlu0 %1729
    %v1732 = vsel %vm224, %v1730, 0
    %1734 = vmatpush.bf16.msra.mxu0 0
    %1735 = vmatpush.bf16.msra.mxu0 0
    %1736 = vmatpush.bf16.msra.mxu0 0
    %1737 = vmatpush.bf16.msra.mxu0 0
    %1738 = vmatpush.bf16.msra.mxu0 0
    %1739 = vmatpush.bf16.msra.mxu0 0
    %1740 = vmatpush.bf16.msra.mxu0 %v1325
    %1741 = vmatpush.bf16.msra.mxu0 %v1324
    %1742 = vmatmul.bf16.gmra.mxu0 %v1732
    %v1743 = vpop.f32.mrf.mxu0
    %v1744 = vadd.f32 0.0, %v1743
    %v1745 = vpop.f32.mrf.mxu0
    %1746 = vdwg.mxu0
    %v1747 = vadd.f32 %v1314, %v1744
    %v1748 = vxor.u32 %v1747, 2147483648
    %v1749 = vmul.f32 %v1748, 1.442695
    %v1750 = vpow.pop %v1749
    %v1751 = vadd.f32 %v1750, 1.0
    %v1752 = vrcp.pop %v1751
    %v1753 = vmul.f32 %v1751, %v1752
    %v1754 = vsub.f32 1.0, %v1753
    %v1755 = vmul.f32 %v1752, %v1754
    %v1756 = vadd.f32 %v1752, %v1755
    %vm1757 = vweird.f32 %v1751
    %vm1758 = vweird.f32 %v1752
    %vm1759 = vmor %vm1757, %vm1758
    %v1760 = vsel %vm1759, %v1752, %v1756
    %v1761 = vand.u32 2147483647, %v1751
    %vm1762 = vcmp.eq.f32.partialorder %v1761, 8.507059e+37
    %v1763 = vand.u32 %v1751, 2147483648
    %v1764 = vor.u32 1.1754944e-38, %v1763
    %v1765 = vsel %vm1762, %v1764, %v1760
    %v1766 = vmul.f32 1.0, %v1765
    %v1767 = vtanh.pop %v1747
    %v1768 = vmul.f32 %v1766, %v1720
    %1770 = vrot.lane.b32.xlu0 %v1767, 64
    %v1771 = vpop.permute.xlu0 %1770
    %v1773 = vmul.f32 %v1766, %v1771
    %1775 = vrot.lane.b32.xlu0 %v1773, 32
    %v1776 = vpop.permute.xlu0 %1775
    %v1778 = vadd.f32 %v1768, %v1776
    %v1779 = vtanh.pop %v1778
    %1781 = vrot.lane.b32.xlu0 %v1779, 64
    %v1782 = vpop.permute.xlu0 %1781
    %v1784 = vmul.f32 %v1766, %v1782
    %v1785 = vpack.c.bf16 %v1436, %v1378
    %v1786 = vpack.c.bf16 %v1552, %v1494
    %v1787 = vpack.c.bf16 %v1668, %v1610
    %v1788 = vpack.c.bf16 %v1784, %v1726
    %v1789 = vld [vmem:[#allocation9] sm:$0xf]
    %v1790 = vld [vmem:[#allocation9 + $0x4] sm:$0xf]
    %v1791 = vld [vmem:[#allocation9 + $0x8] sm:$0xf]
    %v1792 = vld [vmem:[#allocation9 + $0xc] sm:$0xf]
    %v1793 = vld [vmem:[#allocation10] sm:$0xf]
    %v1794 = vld [vmem:[#allocation10 + $0x4] sm:$0xf]
    %v1795 = vld [vmem:[#allocation10 + $0x8] sm:$0xf]
    %v1796 = vld [vmem:[#allocation10 + $0xc] sm:$0xf]
    %v1797 = vld [vmem:[%s12] sm:$0x1]
    %v1799 = vperm.slane %v1797, 0
    %1805 = vrot.lane.b32.xlu0 %v1785, 32
    %v1806 = vpop.permute.xlu0 %1805
    %1807 = vrot.lane.b32.xlu0 %v1786, 32
    %v1808 = vpop.permute.xlu0 %1807
    %1809 = vrot.lane.b32.xlu0 %v1787, 32
    %v1810 = vpop.permute.xlu0 %1809
    %1811 = vrot.lane.b32.xlu0 %v1788, 32
    %v1812 = vpop.permute.xlu0 %1811
    %v1817 = vunpack.c.l.b16 %v1789
    %v1818 = vunpack.c.l.b16 %v1790
    %v1819 = vunpack.c.l.b16 %v1791
    %v1820 = vunpack.c.l.b16 %v1792
    %v1821 = vpack.c.b16 %v1818, %v1817
    %v1822 = vpack.c.b16 %v1820, %v1819
    %v1826 = vsel %vm224, %v1806, 0
    %v1829 = vsel %vm224, %v1808, 0
    %v1832 = vsel %vm224, %v1810, 0
    %v1835 = vsel %vm224, %v1812, 0
    %1837 = vmatpush.bf16.msra.mxu0 0
    %1838 = vmatpush.bf16.msra.mxu0 0
    %1839 = vmatpush.bf16.msra.mxu0 0
    %1840 = vmatpush.bf16.msra.mxu0 0
    %1841 = vmatpush.bf16.msra.mxu0 0
    %1842 = vmatpush.bf16.msra.mxu0 0
    %1843 = vmatpush.bf16.msra.mxu0 %v1822
    %1844 = vmatpush.bf16.msra.mxu0 %v1821
    %1845 = vmatmul.bf16.gmra.mxu0 %v1826
    %v1846 = vpop.f32.mrf.mxu0
    %v1847 = vadd.f32 %v1799, %v1846
    %v1848 = vpop.f32.mrf.mxu0
    %v1849 = vadd.f32 %v1799, %v1848
    %1850 = vmatmul.bf16.gmra.mxu0 %v1829
    %v1851 = vpop.f32.mrf.mxu0
    %v1852 = vadd.f32 %v1799, %v1851
    %v1853 = vpop.f32.mrf.mxu0
    %v1854 = vadd.f32 %v1799, %v1853
    %1855 = vmatmul.bf16.gmra.mxu0 %v1832
    %v1856 = vpop.f32.mrf.mxu0
    %v1857 = vadd.f32 %v1799, %v1856
    %v1858 = vpop.f32.mrf.mxu0
    %v1859 = vadd.f32 %v1799, %v1858
    %1860 = vmatmul.bf16.gmra.mxu0 %v1835
    %v1861 = vpop.f32.mrf.mxu0
    %v1862 = vadd.f32 %v1799, %v1861
    %v1863 = vpop.f32.mrf.mxu0
    %v1864 = vadd.f32 %v1799, %v1863
    %1865 = vdwg.mxu0
    %v1870 = vunpack.c.l.b16 %v1793
    %v1871 = vunpack.c.l.b16 %v1794
    %v1872 = vunpack.c.l.b16 %v1795
    %v1873 = vunpack.c.l.b16 %v1796
    %v1874 = vpack.c.b16 %v1871, %v1870
    %v1875 = vpack.c.b16 %v1873, %v1872
    %1878 = vmatpush.bf16.msra.mxu0 0
    %1879 = vmatpush.bf16.msra.mxu0 0
    %1880 = vmatpush.bf16.msra.mxu0 0
    %1881 = vmatpush.bf16.msra.mxu0 0
    %1882 = vmatpush.bf16.msra.mxu0 0
    %1883 = vmatpush.bf16.msra.mxu0 0
    %1884 = vmatpush.bf16.msra.mxu0 %v1875
    %1885 = vmatpush.bf16.msra.mxu0 %v1874
    %1886 = vmatmul.bf16.gmra.mxu0 %v226
    %v1887 = vpop.f32.mrf.mxu0
    %v1888 = vadd.f32 0.0, %v1887
    %v1889 = vpop.f32.mrf.mxu0
    %1890 = vdwg.mxu0
    %v1891 = vadd.f32 %v1847, %v1888
    %v1892 = vxor.u32 %v1891, 2147483648
    %v1893 = vmul.f32 %v1892, 1.442695
    %v1894 = vpow.pop %v1893
    %v1895 = vadd.f32 %v1894, 1.0
    %v1896 = vrcp.pop %v1895
    %v1897 = vmul.f32 %v1895, %v1896
    %v1898 = vsub.f32 1.0, %v1897
    %v1899 = vmul.f32 %v1896, %v1898
    %v1900 = vadd.f32 %v1896, %v1899
    %vm1901 = vweird.f32 %v1895
    %vm1902 = vweird.f32 %v1896
    %vm1903 = vmor %vm1901, %vm1902
    %v1904 = vsel %vm1903, %v1896, %v1900
    %v1905 = vand.u32 2147483647, %v1895
    %vm1906 = vcmp.eq.f32.partialorder %v1905, 8.507059e+37
    %v1907 = vand.u32 %v1895, 2147483648
    %v1908 = vor.u32 1.1754944e-38, %v1907
    %v1909 = vsel %vm1906, %v1908, %v1904
    %v1910 = vmul.f32 1.0, %v1909
    %v1911 = vtanh.pop %v1891
    %v1912 = vmul.f32 %v1910, 0.0
    %1914 = vrot.lane.b32.xlu0 %v1911, 64
    %v1915 = vpop.permute.xlu0 %1914
    %v1917 = vmul.f32 %v1910, %v1915
    %1919 = vrot.lane.b32.xlu0 %v1917, 32
    %v1920 = vpop.permute.xlu0 %1919
    %v1922 = vadd.f32 %v1912, %v1920
    %v1923 = vtanh.pop %v1922
    %1925 = vrot.lane.b32.xlu0 %v1923, 64
    %v1926 = vpop.permute.xlu0 %1925
    %v1928 = vmul.f32 %v1910, %v1926
    %v1929 = vadd.f32 %v1928, 0.0
    %v1930 = vpack.c.bf16 %v1928, %v1928
    %1932 = vrot.lane.b32.xlu0 %v1930, 32
    %v1933 = vpop.permute.xlu0 %1932
    %v1935 = vsel %vm224, %v1933, 0
    %1937 = vmatpush.bf16.msra.mxu0 0
    %1938 = vmatpush.bf16.msra.mxu0 0
    %1939 = vmatpush.bf16.msra.mxu0 0
    %1940 = vmatpush.bf16.msra.mxu0 0
    %1941 = vmatpush.bf16.msra.mxu0 0
    %1942 = vmatpush.bf16.msra.mxu0 0
    %1943 = vmatpush.bf16.msra.mxu0 %v1875
    %1944 = vmatpush.bf16.msra.mxu0 %v1874
    %1945 = vmatmul.bf16.gmra.mxu0 %v1935
    %v1946 = vpop.f32.mrf.mxu0
    %v1947 = vadd.f32 0.0, %v1946
    %v1948 = vpop.f32.mrf.mxu0
    %1949 = vdwg.mxu0
    %v1950 = vadd.f32 %v1849, %v1947
    %v1951 = vxor.u32 %v1950, 2147483648
    %v1952 = vmul.f32 %v1951, 1.442695
    %v1953 = vpow.pop %v1952
    %v1954 = vadd.f32 %v1953, 1.0
    %v1955 = vrcp.pop %v1954
    %v1956 = vmul.f32 %v1954, %v1955
    %v1957 = vsub.f32 1.0, %v1956
    %v1958 = vmul.f32 %v1955, %v1957
    %v1959 = vadd.f32 %v1955, %v1958
    %vm1960 = vweird.f32 %v1954
    %vm1961 = vweird.f32 %v1955
    %vm1962 = vmor %vm1960, %vm1961
    %v1963 = vsel %vm1962, %v1955, %v1959
    %v1964 = vand.u32 2147483647, %v1954
    %vm1965 = vcmp.eq.f32.partialorder %v1964, 8.507059e+37
    %v1966 = vand.u32 %v1954, 2147483648
    %v1967 = vor.u32 1.1754944e-38, %v1966
    %v1968 = vsel %vm1965, %v1967, %v1963
    %v1969 = vmul.f32 1.0, %v1968
    %v1970 = vtanh.pop %v1950
    %v1971 = vmul.f32 %v1969, %v1922
    %1973 = vrot.lane.b32.xlu0 %v1970, 64
    %v1974 = vpop.permute.xlu0 %1973
    %v1976 = vmul.f32 %v1969, %v1974
    %1978 = vrot.lane.b32.xlu0 %v1976, 32
    %v1979 = vpop.permute.xlu0 %1978
    %v1981 = vadd.f32 %v1971, %v1979
    %v1982 = vtanh.pop %v1981
    %1984 = vrot.lane.b32.xlu0 %v1982, 64
    %v1985 = vpop.permute.xlu0 %1984
    %v1987 = vmul.f32 %v1969, %v1985
    %v1988 = vadd.f32 %v1929, %v1987
    %v1989 = vpack.c.bf16 %v1987, %v1987
    %1991 = vrot.lane.b32.xlu0 %v1989, 32
    %v1992 = vpop.permute.xlu0 %1991
    %v1994 = vsel %vm224, %v1992, 0
    %1996 = vmatpush.bf16.msra.mxu0 0
    %1997 = vmatpush.bf16.msra.mxu0 0
    %1998 = vmatpush.bf16.msra.mxu0 0
    %1999 = vmatpush.bf16.msra.mxu0 0
    %2000 = vmatpush.bf16.msra.mxu0 0
    %2001 = vmatpush.bf16.msra.mxu0 0
    %2002 = vmatpush.bf16.msra.mxu0 %v1875
    %2003 = vmatpush.bf16.msra.mxu0 %v1874
    %2004 = vmatmul.bf16.gmra.mxu0 %v1994
    %v2005 = vpop.f32.mrf.mxu0
    %v2006 = vadd.f32 0.0, %v2005
    %v2007 = vpop.f32.mrf.mxu0
    %2008 = vdwg.mxu0
    %v2009 = vadd.f32 %v1852, %v2006
    %v2010 = vxor.u32 %v2009, 2147483648
    %v2011 = vmul.f32 %v2010, 1.442695
    %v2012 = vpow.pop %v2011
    %v2013 = vadd.f32 %v2012, 1.0
    %v2014 = vrcp.pop %v2013
    %v2015 = vmul.f32 %v2013, %v2014
    %v2016 = vsub.f32 1.0, %v2015
    %v2017 = vmul.f32 %v2014, %v2016
    %v2018 = vadd.f32 %v2014, %v2017
    %vm2019 = vweird.f32 %v2013
    %vm2020 = vweird.f32 %v2014
    %vm2021 = vmor %vm2019, %vm2020
    %v2022 = vsel %vm2021, %v2014, %v2018
    %v2023 = vand.u32 2147483647, %v2013
    %vm2024 = vcmp.eq.f32.partialorder %v2023, 8.507059e+37
    %v2025 = vand.u32 %v2013, 2147483648
    %v2026 = vor.u32 1.1754944e-38, %v2025
    %v2027 = vsel %vm2024, %v2026, %v2022
    %v2028 = vmul.f32 1.0, %v2027
    %v2029 = vtanh.pop %v2009
    %v2030 = vmul.f32 %v2028, %v1981
    %2032 = vrot.lane.b32.xlu0 %v2029, 64
    %v2033 = vpop.permute.xlu0 %2032
    %v2035 = vmul.f32 %v2028, %v2033
    %2037 = vrot.lane.b32.xlu0 %v2035, 32
    %v2038 = vpop.permute.xlu0 %2037
    %v2040 = vadd.f32 %v2030, %v2038
    %v2041 = vtanh.pop %v2040
    %2043 = vrot.lane.b32.xlu0 %v2041, 64
    %v2044 = vpop.permute.xlu0 %2043
    %v2046 = vmul.f32 %v2028, %v2044
    %v2047 = vadd.f32 %v1988, %v2046
    %v2048 = vpack.c.bf16 %v2046, %v2046
    %2050 = vrot.lane.b32.xlu0 %v2048, 32
    %v2051 = vpop.permute.xlu0 %2050
    %v2053 = vsel %vm224, %v2051, 0
    %2055 = vmatpush.bf16.msra.mxu0 0
    %2056 = vmatpush.bf16.msra.mxu0 0
    %2057 = vmatpush.bf16.msra.mxu0 0
    %2058 = vmatpush.bf16.msra.mxu0 0
    %2059 = vmatpush.bf16.msra.mxu0 0
    %2060 = vmatpush.bf16.msra.mxu0 0
    %2061 = vmatpush.bf16.msra.mxu0 %v1875
    %2062 = vmatpush.bf16.msra.mxu0 %v1874
    %2063 = vmatmul.bf16.gmra.mxu0 %v2053
    %v2064 = vpop.f32.mrf.mxu0
    %v2065 = vadd.f32 0.0, %v2064
    %v2066 = vpop.f32.mrf.mxu0
    %2067 = vdwg.mxu0
    %v2068 = vadd.f32 %v1854, %v2065
    %v2069 = vxor.u32 %v2068, 2147483648
    %v2070 = vmul.f32 %v2069, 1.442695
    %v2071 = vpow.pop %v2070
    %v2072 = vadd.f32 %v2071, 1.0
    %v2073 = vrcp.pop %v2072
    %v2074 = vmul.f32 %v2072, %v2073
    %v2075 = vsub.f32 1.0, %v2074
    %v2076 = vmul.f32 %v2073, %v2075
    %v2077 = vadd.f32 %v2073, %v2076
    %vm2078 = vweird.f32 %v2072
    %vm2079 = vweird.f32 %v2073
    %vm2080 = vmor %vm2078, %vm2079
    %v2081 = vsel %vm2080, %v2073, %v2077
    %v2082 = vand.u32 2147483647, %v2072
    %vm2083 = vcmp.eq.f32.partialorder %v2082, 8.507059e+37
    %v2084 = vand.u32 %v2072, 2147483648
    %v2085 = vor.u32 1.1754944e-38, %v2084
    %v2086 = vsel %vm2083, %v2085, %v2081
    %v2087 = vmul.f32 1.0, %v2086
    %v2088 = vtanh.pop %v2068
    %v2089 = vmul.f32 %v2087, %v2040
    %2091 = vrot.lane.b32.xlu0 %v2088, 64
    %v2092 = vpop.permute.xlu0 %2091
    %v2094 = vmul.f32 %v2087, %v2092
    %2096 = vrot.lane.b32.xlu0 %v2094, 32
    %v2097 = vpop.permute.xlu0 %2096
    %v2099 = vadd.f32 %v2089, %v2097
    %v2100 = vtanh.pop %v2099
    %2102 = vrot.lane.b32.xlu0 %v2100, 64
    %v2103 = vpop.permute.xlu0 %2102
    %v2105 = vmul.f32 %v2087, %v2103
    %v2106 = vadd.f32 %v2047, %v2105
    %v2107 = vpack.c.bf16 %v2105, %v2105
    %2109 = vrot.lane.b32.xlu0 %v2107, 32
    %v2110 = vpop.permute.xlu0 %2109
    %v2112 = vsel %vm224, %v2110, 0
    %2114 = vmatpush.bf16.msra.mxu0 0
    %2115 = vmatpush.bf16.msra.mxu0 0
    %2116 = vmatpush.bf16.msra.mxu0 0
    %2117 = vmatpush.bf16.msra.mxu0 0
    %2118 = vmatpush.bf16.msra.mxu0 0
    %2119 = vmatpush.bf16.msra.mxu0 0
    %2120 = vmatpush.bf16.msra.mxu0 %v1875
    %2121 = vmatpush.bf16.msra.mxu0 %v1874
    %2122 = vmatmul.bf16.gmra.mxu0 %v2112
    %v2123 = vpop.f32.mrf.mxu0
    %v2124 = vadd.f32 0.0, %v2123
    %v2125 = vpop.f32.mrf.mxu0
    %2126 = vdwg.mxu0
    %v2127 = vadd.f32 %v1857, %v2124
    %v2128 = vxor.u32 %v2127, 2147483648
    %v2129 = vmul.f32 %v2128, 1.442695
    %v2130 = vpow.pop %v2129
    %v2131 = vadd.f32 %v2130, 1.0
    %v2132 = vrcp.pop %v2131
    %v2133 = vmul.f32 %v2131, %v2132
    %v2134 = vsub.f32 1.0, %v2133
    %v2135 = vmul.f32 %v2132, %v2134
    %v2136 = vadd.f32 %v2132, %v2135
    %vm2137 = vweird.f32 %v2131
    %vm2138 = vweird.f32 %v2132
    %vm2139 = vmor %vm2137, %vm2138
    %v2140 = vsel %vm2139, %v2132, %v2136
    %v2141 = vand.u32 2147483647, %v2131
    %vm2142 = vcmp.eq.f32.partialorder %v2141, 8.507059e+37
    %v2143 = vand.u32 %v2131, 2147483648
    %v2144 = vor.u32 1.1754944e-38, %v2143
    %v2145 = vsel %vm2142, %v2144, %v2140
    %v2146 = vmul.f32 1.0, %v2145
    %v2147 = vtanh.pop %v2127
    %v2148 = vmul.f32 %v2146, %v2099
    %2150 = vrot.lane.b32.xlu0 %v2147, 64
    %v2151 = vpop.permute.xlu0 %2150
    %v2153 = vmul.f32 %v2146, %v2151
    %2155 = vrot.lane.b32.xlu0 %v2153, 32
    %v2156 = vpop.permute.xlu0 %2155
    %v2158 = vadd.f32 %v2148, %v2156
    %v2159 = vtanh.pop %v2158
    %2161 = vrot.lane.b32.xlu0 %v2159, 64
    %v2162 = vpop.permute.xlu0 %2161
    %v2164 = vmul.f32 %v2146, %v2162
    %v2165 = vadd.f32 %v2106, %v2164
    %v2166 = vpack.c.bf16 %v2164, %v2164
    %2168 = vrot.lane.b32.xlu0 %v2166, 32
    %v2169 = vpop.permute.xlu0 %2168
    %v2171 = vsel %vm224, %v2169, 0
    %2173 = vmatpush.bf16.msra.mxu0 0
    %2174 = vmatpush.bf16.msra.mxu0 0
    %2175 = vmatpush.bf16.msra.mxu0 0
    %2176 = vmatpush.bf16.msra.mxu0 0
    %2177 = vmatpush.bf16.msra.mxu0 0
    %2178 = vmatpush.bf16.msra.mxu0 0
    %2179 = vmatpush.bf16.msra.mxu0 %v1875
    %2180 = vmatpush.bf16.msra.mxu0 %v1874
    %2181 = vmatmul.bf16.gmra.mxu0 %v2171
    %v2182 = vpop.f32.mrf.mxu0
    %v2183 = vadd.f32 0.0, %v2182
    %v2184 = vpop.f32.mrf.mxu0
    %2185 = vdwg.mxu0
    %v2186 = vadd.f32 %v1859, %v2183
    %v2187 = vxor.u32 %v2186, 2147483648
    %v2188 = vmul.f32 %v2187, 1.442695
    %v2189 = vpow.pop %v2188
    %v2190 = vadd.f32 %v2189, 1.0
    %v2191 = vrcp.pop %v2190
    %v2192 = vmul.f32 %v2190, %v2191
    %v2193 = vsub.f32 1.0, %v2192
    %v2194 = vmul.f32 %v2191, %v2193
    %v2195 = vadd.f32 %v2191, %v2194
    %vm2196 = vweird.f32 %v2190
    %vm2197 = vweird.f32 %v2191
    %vm2198 = vmor %vm2196, %vm2197
    %v2199 = vsel %vm2198, %v2191, %v2195
    %v2200 = vand.u32 2147483647, %v2190
    %vm2201 = vcmp.eq.f32.partialorder %v2200, 8.507059e+37
    %v2202 = vand.u32 %v2190, 2147483648
    %v2203 = vor.u32 1.1754944e-38, %v2202
    %v2204 = vsel %vm2201, %v2203, %v2199
    %v2205 = vmul.f32 1.0, %v2204
    %v2206 = vtanh.pop %v2186
    %v2207 = vmul.f32 %v2205, %v2158
    %2209 = vrot.lane.b32.xlu0 %v2206, 64
    %v2210 = vpop.permute.xlu0 %2209
    %v2212 = vmul.f32 %v2205, %v2210
    %2214 = vrot.lane.b32.xlu0 %v2212, 32
    %v2215 = vpop.permute.xlu0 %2214
    %v2217 = vadd.f32 %v2207, %v2215
    %v2218 = vtanh.pop %v2217
    %2220 = vrot.lane.b32.xlu0 %v2218, 64
    %v2221 = vpop.permute.xlu0 %2220
    %v2223 = vmul.f32 %v2205, %v2221
    %v2224 = vadd.f32 %v2165, %v2223
    %v2225 = vpack.c.bf16 %v2223, %v2223
    %2227 = vrot.lane.b32.xlu0 %v2225, 32
    %v2228 = vpop.permute.xlu0 %2227
    %v2230 = vsel %vm224, %v2228, 0
    %2232 = vmatpush.bf16.msra.mxu0 0
    %2233 = vmatpush.bf16.msra.mxu0 0
    %2234 = vmatpush.bf16.msra.mxu0 0
    %2235 = vmatpush.bf16.msra.mxu0 0
    %2236 = vmatpush.bf16.msra.mxu0 0
    %2237 = vmatpush.bf16.msra.mxu0 0
    %2238 = vmatpush.bf16.msra.mxu0 %v1875
    %2239 = vmatpush.bf16.msra.mxu0 %v1874
    %2240 = vmatmul.bf16.gmra.mxu0 %v2230
    %v2241 = vpop.f32.mrf.mxu0
    %v2242 = vadd.f32 0.0, %v2241
    %v2243 = vpop.f32.mrf.mxu0
    %2244 = vdwg.mxu0
    %v2245 = vadd.f32 %v1862, %v2242
    %v2246 = vxor.u32 %v2245, 2147483648
    %v2247 = vmul.f32 %v2246, 1.442695
    %v2248 = vpow.pop %v2247
    %v2249 = vadd.f32 %v2248, 1.0
    %v2250 = vrcp.pop %v2249
    %v2251 = vmul.f32 %v2249, %v2250
    %v2252 = vsub.f32 1.0, %v2251
    %v2253 = vmul.f32 %v2250, %v2252
    %v2254 = vadd.f32 %v2250, %v2253
    %vm2255 = vweird.f32 %v2249
    %vm2256 = vweird.f32 %v2250
    %vm2257 = vmor %vm2255, %vm2256
    %v2258 = vsel %vm2257, %v2250, %v2254
    %v2259 = vand.u32 2147483647, %v2249
    %vm2260 = vcmp.eq.f32.partialorder %v2259, 8.507059e+37
    %v2261 = vand.u32 %v2249, 2147483648
    %v2262 = vor.u32 1.1754944e-38, %v2261
    %v2263 = vsel %vm2260, %v2262, %v2258
    %v2264 = vmul.f32 1.0, %v2263
    %v2265 = vtanh.pop %v2245
    %v2266 = vmul.f32 %v2264, %v2217
    %2268 = vrot.lane.b32.xlu0 %v2265, 64
    %v2269 = vpop.permute.xlu0 %2268
    %v2271 = vmul.f32 %v2264, %v2269
    %2273 = vrot.lane.b32.xlu0 %v2271, 32
    %v2274 = vpop.permute.xlu0 %2273
    %v2276 = vadd.f32 %v2266, %v2274
    %v2277 = vtanh.pop %v2276
    %2279 = vrot.lane.b32.xlu0 %v2277, 64
    %v2280 = vpop.permute.xlu0 %2279
    %v2282 = vmul.f32 %v2264, %v2280
    %v2283 = vadd.f32 %v2224, %v2282
    %v2284 = vpack.c.bf16 %v2282, %v2282
    %2286 = vrot.lane.b32.xlu0 %v2284, 32
    %v2287 = vpop.permute.xlu0 %2286
    %v2289 = vsel %vm224, %v2287, 0
    %2291 = vmatpush.bf16.msra.mxu0 0
    %2292 = vmatpush.bf16.msra.mxu0 0
    %2293 = vmatpush.bf16.msra.mxu0 0
    %2294 = vmatpush.bf16.msra.mxu0 0
    %2295 = vmatpush.bf16.msra.mxu0 0
    %2296 = vmatpush.bf16.msra.mxu0 0
    %2297 = vmatpush.bf16.msra.mxu0 %v1875
    %2298 = vmatpush.bf16.msra.mxu0 %v1874
    %2299 = vmatmul.bf16.gmra.mxu0 %v2289
    %v2300 = vpop.f32.mrf.mxu0
    %v2301 = vadd.f32 0.0, %v2300
    %v2302 = vpop.f32.mrf.mxu0
    %2303 = vdwg.mxu0
    %v2304 = vadd.f32 %v1864, %v2301
    %v2305 = vxor.u32 %v2304, 2147483648
    %v2306 = vmul.f32 %v2305, 1.442695
    %v2307 = vpow.pop %v2306
    %v2308 = vadd.f32 %v2307, 1.0
    %v2309 = vrcp.pop %v2308
    %v2310 = vmul.f32 %v2308, %v2309
    %v2311 = vsub.f32 1.0, %v2310
    %v2312 = vmul.f32 %v2309, %v2311
    %v2313 = vadd.f32 %v2309, %v2312
    %vm2314 = vweird.f32 %v2308
    %vm2315 = vweird.f32 %v2309
    %vm2316 = vmor %vm2314, %vm2315
    %v2317 = vsel %vm2316, %v2309, %v2313
    %v2318 = vand.u32 2147483647, %v2308
    %vm2319 = vcmp.eq.f32.partialorder %v2318, 8.507059e+37
    %v2320 = vand.u32 %v2308, 2147483648
    %v2321 = vor.u32 1.1754944e-38, %v2320
    %v2322 = vsel %vm2319, %v2321, %v2317
    %v2323 = vmul.f32 1.0, %v2322
    %v2324 = vtanh.pop %v2304
    %v2325 = vmul.f32 %v2323, %v2276
    %2327 = vrot.lane.b32.xlu0 %v2324, 64
    %v2328 = vpop.permute.xlu0 %2327
    %v2330 = vmul.f32 %v2323, %v2328
    %2332 = vrot.lane.b32.xlu0 %v2330, 32
    %v2333 = vpop.permute.xlu0 %2332
    %v2335 = vadd.f32 %v2325, %v2333
    %v2336 = vtanh.pop %v2335
    %2338 = vrot.lane.b32.xlu0 %v2336, 64
    %v2339 = vpop.permute.xlu0 %2338
    %v2341 = vmul.f32 %v2323, %v2339
    %v2342 = vadd.f32 %v2283, %v2341
    %v2343 = vmul.f32 %v2342, 0.125
    %v2344 = vld [vmem:[%s13] sm:$0xff]
    %v2345 = vld [vmem:[%s13 + $0x8] sm:$0xff]
    %v2346 = vld [vmem:[%s13 + $0x10] sm:$0xff]
    %v2347 = vld [vmem:[%s13 + $0x18] sm:$0xff]
    %v2348 = vld [vmem:[%s14] sm:$0x1]
    %v2350 = vperm.slane %v2348, 0
    %2353 = vrot.lane.b32.xlu0 %v2343, 32
    %v2354 = vpop.permute.xlu0 %2353
    %v2355 = vsel %vm224, %v2354, 0
    %2357 = vmatpush.msra.mxu0 0.0
    %2358 = vmatpush.msra.mxu0 0.0
    %2359 = vmatpush.msra.mxu0 0.0
    %2360 = vmatpush.msra.mxu0 0.0
    %2361 = vmatpush.msra.mxu0 0.0
    %2362 = vmatpush.msra.mxu0 0.0
    %2363 = vmatpush.msra.mxu0 0.0
    %2364 = vmatpush.msra.mxu0 0.0
    %2365 = vmatpush.msra.mxu0 0.0
    %2366 = vmatpush.msra.mxu0 0.0
    %2367 = vmatpush.msra.mxu0 0.0
    %2368 = vmatpush.msra.mxu0 0.0
    %2369 = vmatpush.msra.mxu0 %v2347
    %2370 = vmatpush.msra.mxu0 %v2346
    %2371 = vmatpush.msra.mxu0 %v2345
    %2372 = vmatpush.msra.mxu0 %v2344
    %2373 = vmatmul.f32.gmra.mxu0 %v2355
    %v2374 = vpop.f32.mrf.mxu0
    %v2375 = vadd.f32 %v2350, %v2374
    %2376 = vdwg.mxu0
    %vm2377 = vcmask 31744
    %2378 = vst.msk [vmem:[%s15] sm:$0xff] %vm2377, %v2375
    // Predicated region
    $region86: #{tpu_custom_call.1} parent=1 // pred_check
      _
    $region87: #{tpu_custom_call.1} parent=1 // pred_check_branch
      %2380 = sbr.rel (0) target = $region89
    $region88: #{tpu_custom_call.1} parent=1 // pred_region
      _
    $region89: #{tpu_custom_call.1} parent=1 // pred_fallthru
      _
    // Predicated region
    $region90: #{tpu_custom_call.1} parent=1 // pred_check
      _
    $region91: #{tpu_custom_call.1} parent=1 // pred_check_branch
      %2382 = sbr.rel (0) target = $region93
    $region92: #{tpu_custom_call.1} parent=1 // pred_region
      _
    $region93: #{tpu_custom_call.1} parent=1 // pred_fallthru
      _
    %2383 = vsyncpa [#allocation3], 1
    %2384 = vsyncpa [#allocation5], 1
    %2385 = vsyncpa [#allocation8], 1
    %2386 = vsyncpa [#allocation11], 1

</llo_original>
